<compile_context>
chip_gen: v5e
topology: v5e:2x2
jax: 0.10.0
libtpu: 0.0.40
codegen_flags: <defaults>
</compile_context>

<pallas_src>
import functools

import numpy as np
import jax
import jax.numpy as jnp
from jax.experimental import pallas as pl
from jax.experimental.pallas import tpu as pltpu


def _round_up(v, m):
    return (v + m - 1) // m * m


# ----------------------------------------------------------------------------
# Pallas kernels
# ----------------------------------------------------------------------------
def _matmul_bias_act_kernel(x_ref, w_ref, b_ref, o_ref, *, act):
    """o = act(x @ w + b), one row-tile per grid step.  acc/epilogue in f32."""
    acc = jnp.dot(x_ref[...], w_ref[...], preferred_element_type=jnp.float32)
    acc = acc + b_ref[...]
    if act == "relu":
        acc = jnp.maximum(acc, 0.0)
    elif act == "tanh":
        acc = jnp.tanh(acc)
    o_ref[...] = acc.astype(o_ref.dtype)


def fused_matmul(x, w, bias=None, act="none", use_bf16=True):
    """act(x @ w + bias) with lane-dense (128-padded) output columns.

    x: (M, K), w: (K, N), bias: (N,) or None.  MXU inputs cast to bf16,
    accumulation and the bias/activation epilogue stay in f32.
    Returns f32 (M, N).
    """
    M, K = x.shape
    K2, N = w.shape
    assert K == K2
    Np = _round_up(N, 128)           # lane-dense output -> unmasked stores
    Kp = _round_up(K, 16)            # keep bf16 sublane packing aligned
    in_dt = jnp.bfloat16 if use_bf16 else jnp.float32

    if bias is None:
        bias = jnp.zeros((N,), jnp.float32)
    b = jnp.pad(bias.astype(jnp.float32).reshape(1, N), ((0, 0), (0, Np - N)))
    wp = jnp.pad(w.astype(jnp.float32), ((0, Kp - K), (0, Np - N))).astype(in_dt)

    xp = x.astype(jnp.float32)
    if Kp != K:
        xp = jnp.pad(xp, ((0, 0), (0, Kp - K)))

    # Row tiling: single tile when it fits, otherwise 512-row tiles.
    if M <= 512:
        TM = _round_up(M, 8)
        Mp = TM
    else:
        TM = 512
        Mp = _round_up(M, TM)
    if Mp != M:
        xp = jnp.pad(xp, ((0, Mp - M), (0, 0)))
    xp = xp.astype(in_dt)

    out = pl.pallas_call(
        functools.partial(_matmul_bias_act_kernel, act=act),
        out_shape=jax.ShapeDtypeStruct((Mp, Np), jnp.float32),
        grid=(Mp // TM,),
        in_specs=[
            pl.BlockSpec((TM, Kp), lambda i: (i, 0)),
            pl.BlockSpec((Kp, Np), lambda i: (0, 0)),
            pl.BlockSpec((1, Np), lambda i: (0, 0)),
        ],
        out_specs=pl.BlockSpec((TM, Np), lambda i: (i, 0)),
        compiler_params=pltpu.CompilerParams(
            dimension_semantics=("parallel",)),
    )(xp, wp, b)
    return out[:M, :N]


def _vae_head_kernel(h_ref, wmu_ref, bmu_ref, wlv_ref, blv_ref, eps_ref,
                     wdec_ref, bdec_ref, mu_ref, lv_ref, z_ref, hdec_ref):
    """Fused fc_mu + fc_logvar + reparameterize + decoder_fc_to_conv."""
    h = h_ref[...]
    mu = jnp.dot(h, wmu_ref[...], preferred_element_type=jnp.float32) + bmu_ref[...]
    lv = jnp.dot(h, wlv_ref[...], preferred_element_type=jnp.float32) + blv_ref[...]
    z = mu + eps_ref[...] * jnp.exp(0.5 * lv)
    hdec = jnp.dot(z, wdec_ref[...],
                   preferred_element_type=jnp.float32) + bdec_ref[...]
    mu_ref[...] = mu
    lv_ref[...] = lv
    z_ref[...] = z
    hdec_ref[...] = hdec


def vae_head(h_flat, w_mu, b_mu, w_lv, b_lv, eps, w_dec, b_dec):
    B, F = h_flat.shape
    L = w_mu.shape[1]
    Fd = w_dec.shape[1]
    full = lambda r, c: pl.BlockSpec((r, c), lambda i: (0, 0))
    return pl.pallas_call(
        _vae_head_kernel,
        out_shape=(jax.ShapeDtypeStruct((B, L), jnp.float32),
                   jax.ShapeDtypeStruct((B, L), jnp.float32),
                   jax.ShapeDtypeStruct((B, L), jnp.float32),
                   jax.ShapeDtypeStruct((B, Fd), jnp.float32)),
        grid=(1,),
        in_specs=[full(B, F), full(F, L), full(1, L), full(F, L), full(1, L),
                  full(B, L), full(L, Fd), full(1, Fd)],
        out_specs=(full(B, L), full(B, L), full(B, L), full(B, Fd)),
    )(h_flat.astype(jnp.float32),
      w_mu.astype(jnp.float32), b_mu.reshape(1, L).astype(jnp.float32),
      w_lv.astype(jnp.float32), b_lv.reshape(1, L).astype(jnp.float32),
      eps.astype(jnp.float32),
      w_dec.astype(jnp.float32), b_dec.reshape(1, Fd).astype(jnp.float32))


# ----------------------------------------------------------------------------
# Conv / upsample glue (im2col + interpolation matrices feed the Pallas matmul)
# ----------------------------------------------------------------------------
# TODO(synk): im2col patch extraction still happens in XLA (one HBM round trip
# per conv); an in-kernel tap-accumulation version would remove it but needs
# strided in-VMEM slicing that is riskier to lower.
def conv2d_fused(x, w, b, stride, pad, act):
    """PyTorch-semantics Conv2d (NCHW) fused with bias + activation.
    Eval-mode BN (when present) is already folded into w/b."""
    N_, C, H, W = x.shape
    C_out, C_in, kh, kw = w.shape
    assert C == C_in
    xp = jnp.pad(x, ((0, 0), (0, 0), (pad, pad), (pad, pad)))
    H_out = (H + 2 * pad - kh) // stride + 1
    W_out = (W + 2 * pad - kw) // stride + 1
    cols = []
    for i in range(kh):
        for j in range(kw):
            cols.append(xp[:, :, i:i + stride * H_out:stride,
                           j:j + stride * W_out:stride])
    patches = jnp.stack(cols, axis=-1)                    # (N, C, Ho, Wo, kh*kw)
    patches = patches.transpose(0, 2, 3, 1, 4).reshape(
        N_ * H_out * W_out, C * kh * kw)                  # rows=(n,ho,wo) cols=(c,tap)
    w_mat = w.reshape(C_out, C_in * kh * kw).T            # (C*kh*kw, C_out)
    out = fused_matmul(patches, w_mat, bias=b, act=act)
    return out.reshape(N_, H_out, W_out, C_out).transpose(0, 3, 1, 2)


def _bilinear_matrix_np(in_size, out_size):
    """Interpolation matrix matching torch bilinear, align_corners=False."""
    scale = in_size / out_size
    dst = np.arange(out_size, dtype=np.float64)
    src = np.maximum((dst + 0.5) * scale - 0.5, 0.0)
    i0 = np.minimum(np.floor(src).astype(np.int64), in_size - 1)
    i1 = np.minimum(i0 + 1, in_size - 1)
    lam = src - i0
    A = np.zeros((out_size, in_size), dtype=np.float64)
    A[np.arange(out_size), i0] += (1.0 - lam)
    A[np.arange(out_size), i1] += lam
    return A


@functools.lru_cache(maxsize=None)
def _upsample_matrix(in_h, in_w, out_h, out_w):
    """kron(A_h, A_w)^T : one matmul does the full separable bilinear resize."""
    A_h = _bilinear_matrix_np(in_h, out_h)                # (out_h, in_h)
    A_w = _bilinear_matrix_np(in_w, out_w)                # (out_w, in_w)
    M = np.kron(A_h, A_w)                                 # (out_h*out_w, in_h*in_w)
    return jnp.asarray(M.T, dtype=jnp.float32)            # (in_h*in_w, out_h*out_w)


def bilinear_upsample(x, out_h, out_w):
    """nn.Upsample(size=..., mode='bilinear', align_corners=False), NCHW."""
    N_, C, H, W = x.shape
    up_mat = _upsample_matrix(H, W, out_h, out_w)         # constant under jit
    y = fused_matmul(x.reshape(N_ * C, H * W), up_mat)    # (N*C, out_h*out_w)
    return y.reshape(N_, C, out_h, out_w)


# ----------------------------------------------------------------------------
# Model definition / parameter init (BN folded, eval-mode semantics)
# ----------------------------------------------------------------------------
def build_config(input_channels=4, latent_dim=32, image_size=32,
                 num_conv_layers_encoder=3):
    base = [max(16, input_channels * 2), max(32, input_channels * 4),
            max(64, input_channels * 8), max(128, input_channels * 16)]
    conv_channels_all = [min(c, 256) for c in base]
    cfg = dict(
        input_channels=input_channels,
        latent_dim=latent_dim,
        image_size=image_size,
        num_conv=num_conv_layers_encoder,
        conv_channels=conv_channels_all[:num_conv_layers_encoder],
        kernels=[7, 5, 5, 3][:num_conv_layers_encoder],
        paddings=[1, 1, 1, 1][:num_conv_layers_encoder],
        strides=[2, 2, 2, 2][:num_conv_layers_encoder],
    )
    dims = [image_size]
    d = image_size
    for i in range(num_conv_layers_encoder):
        d = (d + 2 * cfg["paddings"][i] - cfg["kernels"][i]) // cfg["strides"][i] + 1
        dims.append(d)
    cfg["spatial_dims"] = dims
    cfg["final_ch"] = cfg["conv_channels"][-1]
    cfg["final_sp"] = dims[-1]
    cfg["flat"] = cfg["final_ch"] * cfg["final_sp"] * cfg["final_sp"]
    return cfg


def init_params(key, cfg):
    params = {}
    keys = iter(jax.random.split(key, 64))

    def rnd(shape, s=0.05):
        return (s * jax.random.normal(next(keys), shape)).astype(jnp.float32)

    bn_eps = 1e-5
    # eval-mode BN with default init (mean=0, var=1, gamma=1, beta=0):
    # y = x / sqrt(1+eps)  ->  fold the per-channel scale into conv w and b.
    bn_scale = np.float32(1.0 / np.sqrt(1.0 + bn_eps))

    # Encoder convs (Conv -> ReLU -> BN -> Dropout; BN folded, Dropout=eval id)
    enc = []
    c_in = cfg["input_channels"]
    for i in range(cfg["num_conv"]):
        c_out, k = cfg["conv_channels"][i], cfg["kernels"][i]
        enc.append(dict(w=rnd((c_out, c_in, k, k)) * bn_scale,
                        b=rnd((c_out,)) * bn_scale))
        c_in = c_out
    params["enc"] = enc

    # fc_mu / fc_logvar (intermediate FC config '0' -> none)
    params["fc_mu_w"] = rnd((cfg["flat"], cfg["latent_dim"]))
    params["fc_mu_b"] = rnd((cfg["latent_dim"],))
    params["fc_lv_w"] = rnd((cfg["flat"], cfg["latent_dim"]))
    params["fc_lv_b"] = rnd((cfg["latent_dim"],))

    # decoder_fc_to_conv
    params["dec_fc_w"] = rnd((cfg["latent_dim"], cfg["flat"]))
    params["dec_fc_b"] = rnd((cfg["flat"],))

    # Decoder convs ('upsample_conv'): Upsample -> Conv -> ReLU -> BN (not last)
    dec = []
    target_ch = cfg["conv_channels"][-2::-1] + [cfg["input_channels"]]
    c_in = cfg["final_ch"]
    for i in range(cfg["num_conv"]):
        c_out = target_ch[i]
        last = (i == cfg["num_conv"] - 1)
        s = np.float32(1.0) if last else bn_scale
        dec.append(dict(w=rnd((c_out, c_in, 3, 3)) * s,
                        b=rnd((c_out,)) * s))
        c_in = c_out
    params["dec"] = dec
    return params


def vae_forward(params, x, eps_noise, *, cfg):
    """Returns (recon_x, mu, logvar, z) -- same tuple as the PyTorch forward."""
    B = x.shape[0]

    # ---- encode ----
    h = x
    for i in range(cfg["num_conv"]):
        lay = params["enc"][i]
        h = conv2d_fused(h, lay["w"], lay["b"],
                         stride=cfg["strides"][i], pad=cfg["paddings"][i],
                         act="relu")            # Dropout2d: identity in eval
    h_flat = h.reshape(B, -1)                   # NCHW flatten == torch .view

    # ---- fc_mu / fc_logvar / reparameterize / decoder_fc (one Pallas call) ----
    mu, logvar, z, h_dec = vae_head(
        h_flat, params["fc_mu_w"], params["fc_mu_b"],
        params["fc_lv_w"], params["fc_lv_b"], eps_noise,
        params["dec_fc_w"], params["dec_fc_b"])

    # ---- decode ----
    h = h_dec.reshape(B, cfg["final_ch"], cfg["final_sp"], cfg["final_sp"])
    for i in range(cfg["num_conv"]):
        tsp = cfg["spatial_dims"][-(i + 2)]
        h = bilinear_upsample(h, tsp, tsp)
        lay = params["dec"][i]
        last = (i == cfg["num_conv"] - 1)
        h = conv2d_fused(h, lay["w"], lay["b"], stride=1, pad=1,
                         act="tanh" if last else "relu")
    recon_x = h
    # upsample_conv decoder reproduces the input spatial size exactly, so the
    # PyTorch shape-mismatch interpolation branch is never taken.
    return recon_x, mu, logvar, z


# ----------------------------------------------------------------------------
# Main
# ----------------------------------------------------------------------------
if __name__ == "__main__":
    cfg = build_config(input_channels=4, latent_dim=32, image_size=32,
                       num_conv_layers_encoder=3)

    root = jax.random.PRNGKey(0)
    k_params, k_x, k_eps = jax.random.split(root, 3)
    params = init_params(k_params, cfg)

    B = 2
    x = jax.random.normal(
        k_x, (B, cfg["input_channels"], cfg["image_size"], cfg["image_size"]),
        dtype=jnp.float32)
    eps_noise = jax.random.normal(k_eps, (B, cfg["latent_dim"]),
                                  dtype=jnp.float32)

    forward = jax.jit(functools.partial(vae_forward, cfg=cfg))
    recon_x, mu, logvar, z = forward(params, x, eps_noise)
    jax.block_until_ready((recon_x, mu, logvar, z))

    assert recon_x.shape == x.shape, (recon_x.shape, x.shape)
    assert mu.shape == (B, cfg["latent_dim"])
    assert logvar.shape == (B, cfg["latent_dim"])
    assert z.shape == (B, cfg["latent_dim"])
    assert bool(jnp.all(jnp.isfinite(recon_x)))
    assert bool(jnp.all(jnp.abs(recon_x) <= 1.0))   # tanh range

    print("KERNEL_OK")
</pallas_src>

<mosaic_0001>
module attributes {stable_mosaic.version = 11 : i64} {
  func.func @_matmul_bias_act_kernel(%arg0: i32, %arg1: memref<392x208xbf16, #tpu.memory_space<vmem>>, %arg2: memref<208x128xbf16, #tpu.memory_space<vmem>>, %arg3: memref<1x128xf32, #tpu.memory_space<vmem>>, %arg4: memref<392x128xf32, #tpu.memory_space<vmem>>) attributes {dimension_semantics = [#tpu.dimension_semantics<parallel>], iteration_bounds = array<i64: 1>, scalar_prefetch = 0 : i64, scratch_operands = 0 : i64, tpu.core_type = #tpu.core_type<tc>, window_params = [{transform_indices = @transform_0, window_bounds = array<i64: 392, 208>}, {pipeline_mode = #tpu.pipeline_mode<synchronous>, transform_indices = @transform_1, window_bounds = array<i64: 208, 128>}, {pipeline_mode = #tpu.pipeline_mode<synchronous>, transform_indices = @transform_2, window_bounds = array<i64: 1, 128>}, {transform_indices = @transform_3, window_bounds = array<i64: 392, 128>}]} {
    %c0 = arith.constant 0 : index
    %c0_0 = arith.constant 0 : index
    %0 = vector.load %arg1[%c0, %c0_0] : memref<392x208xbf16, #tpu.memory_space<vmem>>, vector<392x208xbf16>
    %c0_1 = arith.constant 0 : index
    %c0_2 = arith.constant 0 : index
    %1 = vector.load %arg2[%c0_1, %c0_2] : memref<208x128xbf16, #tpu.memory_space<vmem>>, vector<208x128xbf16>
    %cst = arith.constant dense<0.000000e+00> : vector<392x128xf32>
    %2 = tpu.matmul %0, %1, %cst {dimension_numbers = #tpu.dot_dimension_numbers<[1], [0], [0], [1], [0, 0, 1, 1], [], []>} : vector<392x208xbf16>, vector<208x128xbf16>, vector<392x128xf32> -> vector<392x128xf32>
    %c0_3 = arith.constant 0 : index
    %c0_4 = arith.constant 0 : index
    %3 = vector.load %arg3[%c0_3, %c0_4] : memref<1x128xf32, #tpu.memory_space<vmem>>, vector<1x128xf32>
    %4 = vector.broadcast %3 : vector<1x128xf32> to vector<392x128xf32>
    %5 = arith.addf %2, %4 : vector<392x128xf32>
    %cst_5 = arith.constant 0.000000e+00 : f32
    %6 = vector.broadcast %cst_5 : f32 to vector<392x128xf32>
    %7 = arith.maximumf %5, %6 : vector<392x128xf32>
    %c0_6 = arith.constant 0 : index
    %c0_7 = arith.constant 0 : index
    %8 = vector.load %arg4[%c0_6, %c0_7] : memref<392x128xf32, #tpu.memory_space<vmem>>, vector<392x128xf32>
    tpu.vector_store %arg4[%c0_6, %c0_7], %7 {strides = array<i32>} : memref<392x128xf32, #tpu.memory_space<vmem>>, vector<392x128xf32>,
    return
  }
  func.func @transform_0(%arg0: i32) -> (i32, i32) {
    %c0_i32 = arith.constant 0 : i32
    %c0_i32_0 = arith.constant 0 : i32
    return %arg0, %c0_i32 : i32, i32
  }
  func.func @transform_1(%arg0: i32) -> (i32, i32) {
    %c0_i32 = arith.constant 0 : i32
    %c0_i32_0 = arith.constant 0 : i32
    %c0_i32_1 = arith.constant 0 : i32
    return %c0_i32, %c0_i32_0 : i32, i32
  }
  func.func @transform_2(%arg0: i32) -> (i32, i32) {
    %c0_i32 = arith.constant 0 : i32
    %c0_i32_0 = arith.constant 0 : i32
    %c0_i32_1 = arith.constant 0 : i32
    return %c0_i32, %c0_i32_0 : i32, i32
  }
  func.func @transform_3(%arg0: i32) -> (i32, i32) {
    %c0_i32 = arith.constant 0 : i32
    %c0_i32_0 = arith.constant 0 : i32
    return %arg0, %c0_i32 : i32, i32
  }
}

module attributes {stable_mosaic.version = 11 : i64} {
  func.func @_matmul_bias_act_kernel(%arg0: i32, %arg1: memref<72x400xbf16, #tpu.memory_space<vmem>>, %arg2: memref<400x128xbf16, #tpu.memory_space<vmem>>, %arg3: memref<1x128xf32, #tpu.memory_space<vmem>>, %arg4: memref<72x128xf32, #tpu.memory_space<vmem>>) attributes {dimension_semantics = [#tpu.dimension_semantics<parallel>], iteration_bounds = array<i64: 1>, scalar_prefetch = 0 : i64, scratch_operands = 0 : i64, tpu.core_type = #tpu.core_type<tc>, window_params = [{transform_indices = @transform_0, window_bounds = array<i64: 72, 400>}, {pipeline_mode = #tpu.pipeline_mode<synchronous>, transform_indices = @transform_1, window_bounds = array<i64: 400, 128>}, {pipeline_mode = #tpu.pipeline_mode<synchronous>, transform_indices = @transform_2, window_bounds = array<i64: 1, 128>}, {transform_indices = @transform_3, window_bounds = array<i64: 72, 128>}]} {
    %c0 = arith.constant 0 : index
    %c0_0 = arith.constant 0 : index
    %0 = vector.load %arg1[%c0, %c0_0] : memref<72x400xbf16, #tpu.memory_space<vmem>>, vector<72x400xbf16>
    %c0_1 = arith.constant 0 : index
    %c0_2 = arith.constant 0 : index
    %1 = vector.load %arg2[%c0_1, %c0_2] : memref<400x128xbf16, #tpu.memory_space<vmem>>, vector<400x128xbf16>
    %cst = arith.constant dense<0.000000e+00> : vector<72x128xf32>
    %2 = tpu.matmul %0, %1, %cst {dimension_numbers = #tpu.dot_dimension_numbers<[1], [0], [0], [1], [0, 0, 1, 1], [], []>} : vector<72x400xbf16>, vector<400x128xbf16>, vector<72x128xf32> -> vector<72x128xf32>
    %c0_3 = arith.constant 0 : index
    %c0_4 = arith.constant 0 : index
    %3 = vector.load %arg3[%c0_3, %c0_4] : memref<1x128xf32, #tpu.memory_space<vmem>>, vector<1x128xf32>
    %4 = vector.broadcast %3 : vector<1x128xf32> to vector<72x128xf32>
    %5 = arith.addf %2, %4 : vector<72x128xf32>
    %cst_5 = arith.constant 0.000000e+00 : f32
    %6 = vector.broadcast %cst_5 : f32 to vector<72x128xf32>
    %7 = arith.maximumf %5, %6 : vector<72x128xf32>
    %c0_6 = arith.constant 0 : index
    %c0_7 = arith.constant 0 : index
    %8 = vector.load %arg4[%c0_6, %c0_7] : memref<72x128xf32, #tpu.memory_space<vmem>>, vector<72x128xf32>
    tpu.vector_store %arg4[%c0_6, %c0_7], %7 {strides = array<i32>} : memref<72x128xf32, #tpu.memory_space<vmem>>, vector<72x128xf32>,
    return
  }
  func.func @transform_0(%arg0: i32) -> (i32, i32) {
    %c0_i32 = arith.constant 0 : i32
    %c0_i32_0 = arith.constant 0 : i32
    return %arg0, %c0_i32 : i32, i32
  }
  func.func @transform_1(%arg0: i32) -> (i32, i32) {
    %c0_i32 = arith.constant 0 : i32
    %c0_i32_0 = arith.constant 0 : i32
    %c0_i32_1 = arith.constant 0 : i32
    return %c0_i32, %c0_i32_0 : i32, i32
  }
  func.func @transform_2(%arg0: i32) -> (i32, i32) {
    %c0_i32 = arith.constant 0 : i32
    %c0_i32_0 = arith.constant 0 : i32
    %c0_i32_1 = arith.constant 0 : i32
    return %c0_i32, %c0_i32_0 : i32, i32
  }
  func.func @transform_3(%arg0: i32) -> (i32, i32) {
    %c0_i32 = arith.constant 0 : i32
    %c0_i32_0 = arith.constant 0 : i32
    return %arg0, %c0_i32 : i32, i32
  }
}

module attributes {stable_mosaic.version = 11 : i64} {
  func.func @_matmul_bias_act_kernel(%arg0: i32, %arg1: memref<8x800xbf16, #tpu.memory_space<vmem>>, %arg2: memref<800x128xbf16, #tpu.memory_space<vmem>>, %arg3: memref<1x128xf32, #tpu.memory_space<vmem>>, %arg4: memref<8x128xf32, #tpu.memory_space<vmem>>) attributes {dimension_semantics = [#tpu.dimension_semantics<parallel>], iteration_bounds = array<i64: 1>, scalar_prefetch = 0 : i64, scratch_operands = 0 : i64, tpu.core_type = #tpu.core_type<tc>, window_params = [{transform_indices = @transform_0, window_bounds = array<i64: 8, 800>}, {pipeline_mode = #tpu.pipeline_mode<synchronous>, transform_indices = @transform_1, window_bounds = array<i64: 800, 128>}, {pipeline_mode = #tpu.pipeline_mode<synchronous>, transform_indices = @transform_2, window_bounds = array<i64: 1, 128>}, {transform_indices = @transform_3, window_bounds = array<i64: 8, 128>}]} {
    %c0 = arith.constant 0 : index
    %c0_0 = arith.constant 0 : index
    %0 = vector.load %arg1[%c0, %c0_0] : memref<8x800xbf16, #tpu.memory_space<vmem>>, vector<8x800xbf16>
    %c0_1 = arith.constant 0 : index
    %c0_2 = arith.constant 0 : index
    %1 = vector.load %arg2[%c0_1, %c0_2] : memref<800x128xbf16, #tpu.memory_space<vmem>>, vector<800x128xbf16>
    %cst = arith.constant dense<0.000000e+00> : vector<8x128xf32>
    %2 = tpu.matmul %0, %1, %cst {dimension_numbers = #tpu.dot_dimension_numbers<[1], [0], [0], [1], [0, 0, 1, 1], [], []>} : vector<8x800xbf16>, vector<800x128xbf16>, vector<8x128xf32> -> vector<8x128xf32>
    %c0_3 = arith.constant 0 : index
    %c0_4 = arith.constant 0 : index
    %3 = vector.load %arg3[%c0_3, %c0_4] : memref<1x128xf32, #tpu.memory_space<vmem>>, vector<1x128xf32>
    %4 = vector.broadcast %3 : vector<1x128xf32> to vector<8x128xf32>
    %5 = arith.addf %2, %4 : vector<8x128xf32>
    %cst_5 = arith.constant 0.000000e+00 : f32
    %6 = vector.broadcast %cst_5 : f32 to vector<8x128xf32>
    %7 = arith.maximumf %5, %6 : vector<8x128xf32>
    %c0_6 = arith.constant 0 : index
    %c0_7 = arith.constant 0 : index
    %8 = vector.load %arg4[%c0_6, %c0_7] : memref<8x128xf32, #tpu.memory_space<vmem>>, vector<8x128xf32>
    tpu.vector_store %arg4[%c0_6, %c0_7], %7 {strides = array<i32>} : memref<8x128xf32, #tpu.memory_space<vmem>>, vector<8x128xf32>,
    return
  }
  func.func @transform_0(%arg0: i32) -> (i32, i32) {
    %c0_i32 = arith.constant 0 : i32
    %c0_i32_0 = arith.constant 0 : i32
    return %arg0, %c0_i32 : i32, i32
  }
  func.func @transform_1(%arg0: i32) -> (i32, i32) {
    %c0_i32 = arith.constant 0 : i32
    %c0_i32_0 = arith.constant 0 : i32
    %c0_i32_1 = arith.constant 0 : i32
    return %c0_i32, %c0_i32_0 : i32, i32
  }
  func.func @transform_2(%arg0: i32) -> (i32, i32) {
    %c0_i32 = arith.constant 0 : i32
    %c0_i32_0 = arith.constant 0 : i32
    %c0_i32_1 = arith.constant 0 : i32
    return %c0_i32, %c0_i32_0 : i32, i32
  }
  func.func @transform_3(%arg0: i32) -> (i32, i32) {
    %c0_i32 = arith.constant 0 : i32
    %c0_i32_0 = arith.constant 0 : i32
    return %arg0, %c0_i32 : i32, i32
  }
}

module attributes {stable_mosaic.version = 11 : i64} {
  func.func @_vae_head_kernel(%arg0: i32, %arg1: memref<2x256xf32, #tpu.memory_space<vmem>>, %arg2: memref<256x32xf32, #tpu.memory_space<vmem>>, %arg3: memref<1x32xf32, #tpu.memory_space<vmem>>, %arg4: memref<256x32xf32, #tpu.memory_space<vmem>>, %arg5: memref<1x32xf32, #tpu.memory_space<vmem>>, %arg6: memref<2x32xf32, #tpu.memory_space<vmem>>, %arg7: memref<32x256xf32, #tpu.memory_space<vmem>>, %arg8: memref<1x256xf32, #tpu.memory_space<vmem>>, %arg9: memref<2x32xf32, #tpu.memory_space<vmem>>, %arg10: memref<2x32xf32, #tpu.memory_space<vmem>>, %arg11: memref<2x32xf32, #tpu.memory_space<vmem>>, %arg12: memref<2x256xf32, #tpu.memory_space<vmem>>) attributes {dimension_semantics = [#tpu.dimension_semantics<arbitrary>], iteration_bounds = array<i64: 1>, scalar_prefetch = 0 : i64, scratch_operands = 0 : i64, tpu.core_type = #tpu.core_type<tc>, window_params = [{pipeline_mode = #tpu.pipeline_mode<synchronous>, transform_indices = @transform_0, window_bounds = array<i64: 2, 256>}, {pipeline_mode = #tpu.pipeline_mode<synchronous>, transform_indices = @transform_1, window_bounds = array<i64: 256, 32>}, {pipeline_mode = #tpu.pipeline_mode<synchronous>, transform_indices = @transform_2, window_bounds = array<i64: 1, 32>}, {pipeline_mode = #tpu.pipeline_mode<synchronous>, transform_indices = @transform_3, window_bounds = array<i64: 256, 32>}, {pipeline_mode = #tpu.pipeline_mode<synchronous>, transform_indices = @transform_4, window_bounds = array<i64: 1, 32>}, {pipeline_mode = #tpu.pipeline_mode<synchronous>, transform_indices = @transform_5, window_bounds = array<i64: 2, 32>}, {pipeline_mode = #tpu.pipeline_mode<synchronous>, transform_indices = @transform_6, window_bounds = array<i64: 32, 256>}, {pipeline_mode = #tpu.pipeline_mode<synchronous>, transform_indices = @transform_7, window_bounds = array<i64: 1, 256>}, {pipeline_mode = #tpu.pipeline_mode<synchronous>, transform_indices = @transform_8, window_bounds = array<i64: 2, 32>}, {pipeline_mode = #tpu.pipeline_mode<synchronous>, transform_indices = @transform_9, window_bounds = array<i64: 2, 32>}, {pipeline_mode = #tpu.pipeline_mode<synchronous>, transform_indices = @transform_10, window_bounds = array<i64: 2, 32>}, {pipeline_mode = #tpu.pipeline_mode<synchronous>, transform_indices = @transform_11, window_bounds = array<i64: 2, 256>}]} {
    %c0 = arith.constant 0 : index
    %c0_0 = arith.constant 0 : index
    %0 = vector.load %arg1[%c0, %c0_0] : memref<2x256xf32, #tpu.memory_space<vmem>>, vector<2x256xf32>
    %c0_1 = arith.constant 0 : index
    %c0_2 = arith.constant 0 : index
    %1 = vector.load %arg2[%c0_1, %c0_2] : memref<256x32xf32, #tpu.memory_space<vmem>>, vector<256x32xf32>
    %cst = arith.constant dense<0.000000e+00> : vector<2x32xf32>
    %2 = tpu.matmul %0, %1, %cst {dimension_numbers = #tpu.dot_dimension_numbers<[1], [0], [0], [1], [0, 0, 1, 1], [], []>} : vector<2x256xf32>, vector<256x32xf32>, vector<2x32xf32> -> vector<2x32xf32>
    %c0_3 = arith.constant 0 : index
    %c0_4 = arith.constant 0 : index
    %3 = vector.load %arg3[%c0_3, %c0_4] : memref<1x32xf32, #tpu.memory_space<vmem>>, vector<1x32xf32>
    %4 = vector.broadcast %3 : vector<1x32xf32> to vector<2x32xf32>
    %5 = arith.addf %2, %4 : vector<2x32xf32>
    %c0_5 = arith.constant 0 : index
    %c0_6 = arith.constant 0 : index
    %6 = vector.load %arg4[%c0_5, %c0_6] : memref<256x32xf32, #tpu.memory_space<vmem>>, vector<256x32xf32>
    %cst_7 = arith.constant dense<0.000000e+00> : vector<2x32xf32>
    %7 = tpu.matmul %0, %6, %cst_7 {dimension_numbers = #tpu.dot_dimension_numbers<[1], [0], [0], [1], [0, 0, 1, 1], [], []>} : vector<2x256xf32>, vector<256x32xf32>, vector<2x32xf32> -> vector<2x32xf32>
    %c0_8 = arith.constant 0 : index
    %c0_9 = arith.constant 0 : index
    %8 = vector.load %arg5[%c0_8, %c0_9] : memref<1x32xf32, #tpu.memory_space<vmem>>, vector<1x32xf32>
    %9 = vector.broadcast %8 : vector<1x32xf32> to vector<2x32xf32>
    %10 = arith.addf %7, %9 : vector<2x32xf32>
    %c0_10 = arith.constant 0 : index
    %c0_11 = arith.constant 0 : index
    %11 = vector.load %arg6[%c0_10, %c0_11] : memref<2x32xf32, #tpu.memory_space<vmem>>, vector<2x32xf32>
    %cst_12 = arith.constant 5.000000e-01 : f32
    %12 = vector.broadcast %cst_12 : f32 to vector<2x32xf32>
    %13 = arith.mulf %12, %10 : vector<2x32xf32>
    %14 = math.exp %13 : vector<2x32xf32>
    %15 = arith.mulf %11, %14 : vector<2x32xf32>
    %16 = arith.addf %5, %15 : vector<2x32xf32>
    %c0_13 = arith.constant 0 : index
    %c0_14 = arith.constant 0 : index
    %17 = vector.load %arg7[%c0_13, %c0_14] : memref<32x256xf32, #tpu.memory_space<vmem>>, vector<32x256xf32>
    %cst_15 = arith.constant dense<0.000000e+00> : vector<2x256xf32>
    %18 = tpu.matmul %16, %17, %cst_15 {dimension_numbers = #tpu.dot_dimension_numbers<[1], [0], [0], [1], [0, 0, 1, 1], [], []>} : vector<2x32xf32>, vector<32x256xf32>, vector<2x256xf32> -> vector<2x256xf32>
    %c0_16 = arith.constant 0 : index
    %c0_17 = arith.constant 0 : index
    %19 = vector.load %arg8[%c0_16, %c0_17] : memref<1x256xf32, #tpu.memory_space<vmem>>, vector<1x256xf32>
    %20 = vector.broadcast %19 : vector<1x256xf32> to vector<2x256xf32>
    %21 = arith.addf %18, %20 : vector<2x256xf32>
    %c0_18 = arith.constant 0 : index
    %c0_19 = arith.constant 0 : index
    %22 = vector.load %arg9[%c0_18, %c0_19] : memref<2x32xf32, #tpu.memory_space<vmem>>, vector<2x32xf32>
    tpu.vector_store %arg9[%c0_18, %c0_19], %5 {strides = array<i32>} : memref<2x32xf32, #tpu.memory_space<vmem>>, vector<2x32xf32>,
    %c0_20 = arith.constant 0 : index
    %c0_21 = arith.constant 0 : index
    %23 = vector.load %arg10[%c0_20, %c0_21] : memref<2x32xf32, #tpu.memory_space<vmem>>, vector<2x32xf32>
    tpu.vector_store %arg10[%c0_20, %c0_21], %10 {strides = array<i32>} : memref<2x32xf32, #tpu.memory_space<vmem>>, vector<2x32xf32>,
    %c0_22 = arith.constant 0 : index
    %c0_23 = arith.constant 0 : index
    %24 = vector.load %arg11[%c0_22, %c0_23] : memref<2x32xf32, #tpu.memory_space<vmem>>, vector<2x32xf32>
    tpu.vector_store %arg11[%c0_22, %c0_23], %16 {strides = array<i32>} : memref<2x32xf32, #tpu.memory_space<vmem>>, vector<2x32xf32>,
    %c0_24 = arith.constant 0 : index
    %c0_25 = arith.constant 0 : index
    %25 = vector.load %arg12[%c0_24, %c0_25] : memref<2x256xf32, #tpu.memory_space<vmem>>, vector<2x256xf32>
    tpu.vector_store %arg12[%c0_24, %c0_25], %21 {strides = array<i32>} : memref<2x256xf32, #tpu.memory_space<vmem>>, vector<2x256xf32>,
    return
  }
  func.func @transform_0(%arg0: i32) -> (i32, i32) {
    %c0_i32 = arith.constant 0 : i32
    %c0_i32_0 = arith.constant 0 : i32
    %c0_i32_1 = arith.constant 0 : i32
    return %c0_i32, %c0_i32_0 : i32, i32
  }
  func.func @transform_1(%arg0: i32) -> (i32, i32) {
    %c0_i32 = arith.constant 0 : i32
    %c0_i32_0 = arith.constant 0 : i32
    %c0_i32_1 = arith.constant 0 : i32
    return %c0_i32, %c0_i32_0 : i32, i32
  }
  func.func @transform_2(%arg0: i32) -> (i32, i32) {
    %c0_i32 = arith.constant 0 : i32
    %c0_i32_0 = arith.constant 0 : i32
    %c0_i32_1 = arith.constant 0 : i32
    return %c0_i32, %c0_i32_0 : i32, i32
  }
  func.func @transform_3(%arg0: i32) -> (i32, i32) {
    %c0_i32 = arith.constant 0 : i32
    %c0_i32_0 = arith.constant 0 : i32
    %c0_i32_1 = arith.constant 0 : i32
    return %c0_i32, %c0_i32_0 : i32, i32
  }
  func.func @transform_4(%arg0: i32) -> (i32, i32) {
    %c0_i32 = arith.constant 0 : i32
    %c0_i32_0 = arith.constant 0 : i32
    %c0_i32_1 = arith.constant 0 : i32
    return %c0_i32, %c0_i32_0 : i32, i32
  }
  func.func @transform_5(%arg0: i32) -> (i32, i32) {
    %c0_i32 = arith.constant 0 : i32
    %c0_i32_0 = arith.constant 0 : i32
    %c0_i32_1 = arith.constant 0 : i32
    return %c0_i32, %c0_i32_0 : i32, i32
  }
  func.func @transform_6(%arg0: i32) -> (i32, i32) {
    %c0_i32 = arith.constant 0 : i32
    %c0_i32_0 = arith.constant 0 : i32
    %c0_i32_1 = arith.constant 0 : i32
    return %c0_i32, %c0_i32_0 : i32, i32
  }
  func.func @transform_7(%arg0: i32) -> (i32, i32) {
    %c0_i32 = arith.constant 0 : i32
    %c0_i32_0 = arith.constant 0 : i32
    %c0_i32_1 = arith.constant 0 : i32
    return %c0_i32, %c0_i32_0 : i32, i32
  }
  func.func @transform_8(%arg0: i32) -> (i32, i32) {
    %c0_i32 = arith.constant 0 : i32
    %c0_i32_0 = arith.constant 0 : i32
    %c0_i32_1 = arith.constant 0 : i32
    return %c0_i32, %c0_i32_0 : i32, i32
  }
  func.func @transform_9(%arg0: i32) -> (i32, i32) {
    %c0_i32 = arith.constant 0 : i32
    %c0_i32_0 = arith.constant 0 : i32
    %c0_i32_1 = arith.constant 0 : i32
    return %c0_i32, %c0_i32_0 : i32, i32
  }
  func.func @transform_10(%arg0: i32) -> (i32, i32) {
    %c0_i32 = arith.constant 0 : i32
    %c0_i32_0 = arith.constant 0 : i32
    %c0_i32_1 = arith.constant 0 : i32
    return %c0_i32, %c0_i32_0 : i32, i32
  }
  func.func @transform_11(%arg0: i32) -> (i32, i32) {
    %c0_i32 = arith.constant 0 : i32
    %c0_i32_0 = arith.constant 0 : i32
    %c0_i32_1 = arith.constant 0 : i32
    return %c0_i32, %c0_i32_0 : i32, i32
  }
}

module attributes {stable_mosaic.version = 11 : i64} {
  func.func @_matmul_bias_act_kernel(%arg0: i32, %arg1: memref<128x16xbf16, #tpu.memory_space<vmem>>, %arg2: memref<16x128xbf16, #tpu.memory_space<vmem>>, %arg3: memref<1x128xf32, #tpu.memory_space<vmem>>, %arg4: memref<128x128xf32, #tpu.memory_space<vmem>>) attributes {dimension_semantics = [#tpu.dimension_semantics<parallel>], iteration_bounds = array<i64: 1>, scalar_prefetch = 0 : i64, scratch_operands = 0 : i64, tpu.core_type = #tpu.core_type<tc>, window_params = [{transform_indices = @transform_0, window_bounds = array<i64: 128, 16>}, {pipeline_mode = #tpu.pipeline_mode<synchronous>, transform_indices = @transform_1, window_bounds = array<i64: 16, 128>}, {pipeline_mode = #tpu.pipeline_mode<synchronous>, transform_indices = @transform_2, window_bounds = array<i64: 1, 128>}, {transform_indices = @transform_3, window_bounds = array<i64: 128, 128>}]} {
    %c0 = arith.constant 0 : index
    %c0_0 = arith.constant 0 : index
    %0 = vector.load %arg1[%c0, %c0_0] : memref<128x16xbf16, #tpu.memory_space<vmem>>, vector<128x16xbf16>
    %c0_1 = arith.constant 0 : index
    %c0_2 = arith.constant 0 : index
    %1 = vector.load %arg2[%c0_1, %c0_2] : memref<16x128xbf16, #tpu.memory_space<vmem>>, vector<16x128xbf16>
    %cst = arith.constant dense<0.000000e+00> : vector<128x128xf32>
    %2 = tpu.matmul %0, %1, %cst {dimension_numbers = #tpu.dot_dimension_numbers<[1], [0], [0], [1], [0, 0, 1, 1], [], []>} : vector<128x16xbf16>, vector<16x128xbf16>, vector<128x128xf32> -> vector<128x128xf32>
    %c0_3 = arith.constant 0 : index
    %c0_4 = arith.constant 0 : index
    %3 = vector.load %arg3[%c0_3, %c0_4] : memref<1x128xf32, #tpu.memory_space<vmem>>, vector<1x128xf32>
    %4 = vector.broadcast %3 : vector<1x128xf32> to vector<128x128xf32>
    %5 = arith.addf %2, %4 : vector<128x128xf32>
    %c0_5 = arith.constant 0 : index
    %c0_6 = arith.constant 0 : index
    %6 = vector.load %arg4[%c0_5, %c0_6] : memref<128x128xf32, #tpu.memory_space<vmem>>, vector<128x128xf32>
    tpu.vector_store %arg4[%c0_5, %c0_6], %5 {strides = array<i32>} : memref<128x128xf32, #tpu.memory_space<vmem>>, vector<128x128xf32>,
    return
  }
  func.func @transform_0(%arg0: i32) -> (i32, i32) {
    %c0_i32 = arith.constant 0 : i32
    %c0_i32_0 = arith.constant 0 : i32
    return %arg0, %c0_i32 : i32, i32
  }
  func.func @transform_1(%arg0: i32) -> (i32, i32) {
    %c0_i32 = arith.constant 0 : i32
    %c0_i32_0 = arith.constant 0 : i32
    %c0_i32_1 = arith.constant 0 : i32
    return %c0_i32, %c0_i32_0 : i32, i32
  }
  func.func @transform_2(%arg0: i32) -> (i32, i32) {
    %c0_i32 = arith.constant 0 : i32
    %c0_i32_0 = arith.constant 0 : i32
    %c0_i32_1 = arith.constant 0 : i32
    return %c0_i32, %c0_i32_0 : i32, i32
  }
  func.func @transform_3(%arg0: i32) -> (i32, i32) {
    %c0_i32 = arith.constant 0 : i32
    %c0_i32_0 = arith.constant 0 : i32
    return %arg0, %c0_i32 : i32, i32
  }
}

module attributes {stable_mosaic.version = 11 : i64} {
  func.func @_matmul_bias_act_kernel(%arg0: i32, %arg1: memref<72x576xbf16, #tpu.memory_space<vmem>>, %arg2: memref<576x128xbf16, #tpu.memory_space<vmem>>, %arg3: memref<1x128xf32, #tpu.memory_space<vmem>>, %arg4: memref<72x128xf32, #tpu.memory_space<vmem>>) attributes {dimension_semantics = [#tpu.dimension_semantics<parallel>], iteration_bounds = array<i64: 1>, scalar_prefetch = 0 : i64, scratch_operands = 0 : i64, tpu.core_type = #tpu.core_type<tc>, window_params = [{transform_indices = @transform_0, window_bounds = array<i64: 72, 576>}, {pipeline_mode = #tpu.pipeline_mode<synchronous>, transform_indices = @transform_1, window_bounds = array<i64: 576, 128>}, {pipeline_mode = #tpu.pipeline_mode<synchronous>, transform_indices = @transform_2, window_bounds = array<i64: 1, 128>}, {transform_indices = @transform_3, window_bounds = array<i64: 72, 128>}]} {
    %c0 = arith.constant 0 : index
    %c0_0 = arith.constant 0 : index
    %0 = vector.load %arg1[%c0, %c0_0] : memref<72x576xbf16, #tpu.memory_space<vmem>>, vector<72x576xbf16>
    %c0_1 = arith.constant 0 : index
    %c0_2 = arith.constant 0 : index
    %1 = vector.load %arg2[%c0_1, %c0_2] : memref<576x128xbf16, #tpu.memory_space<vmem>>, vector<576x128xbf16>
    %cst = arith.constant dense<0.000000e+00> : vector<72x128xf32>
    %2 = tpu.matmul %0, %1, %cst {dimension_numbers = #tpu.dot_dimension_numbers<[1], [0], [0], [1], [0, 0, 1, 1], [], []>} : vector<72x576xbf16>, vector<576x128xbf16>, vector<72x128xf32> -> vector<72x128xf32>
    %c0_3 = arith.constant 0 : index
    %c0_4 = arith.constant 0 : index
    %3 = vector.load %arg3[%c0_3, %c0_4] : memref<1x128xf32, #tpu.memory_space<vmem>>, vector<1x128xf32>
    %4 = vector.broadcast %3 : vector<1x128xf32> to vector<72x128xf32>
    %5 = arith.addf %2, %4 : vector<72x128xf32>
    %cst_5 = arith.constant 0.000000e+00 : f32
    %6 = vector.broadcast %cst_5 : f32 to vector<72x128xf32>
    %7 = arith.maximumf %5, %6 : vector<72x128xf32>
    %c0_6 = arith.constant 0 : index
    %c0_7 = arith.constant 0 : index
    %8 = vector.load %arg4[%c0_6, %c0_7] : memref<72x128xf32, #tpu.memory_space<vmem>>, vector<72x128xf32>
    tpu.vector_store %arg4[%c0_6, %c0_7], %7 {strides = array<i32>} : memref<72x128xf32, #tpu.memory_space<vmem>>, vector<72x128xf32>,
    return
  }
  func.func @transform_0(%arg0: i32) -> (i32, i32) {
    %c0_i32 = arith.constant 0 : i32
    %c0_i32_0 = arith.constant 0 : i32
    return %arg0, %c0_i32 : i32, i32
  }
  func.func @transform_1(%arg0: i32) -> (i32, i32) {
    %c0_i32 = arith.constant 0 : i32
    %c0_i32_0 = arith.constant 0 : i32
    %c0_i32_1 = arith.constant 0 : i32
    return %c0_i32, %c0_i32_0 : i32, i32
  }
  func.func @transform_2(%arg0: i32) -> (i32, i32) {
    %c0_i32 = arith.constant 0 : i32
    %c0_i32_0 = arith.constant 0 : i32
    %c0_i32_1 = arith.constant 0 : i32
    return %c0_i32, %c0_i32_0 : i32, i32
  }
  func.func @transform_3(%arg0: i32) -> (i32, i32) {
    %c0_i32 = arith.constant 0 : i32
    %c0_i32_0 = arith.constant 0 : i32
    return %arg0, %c0_i32 : i32, i32
  }
}

module attributes {stable_mosaic.version = 11 : i64} {
  func.func @_matmul_bias_act_kernel(%arg0: i32, %arg1: memref<64x48xbf16, #tpu.memory_space<vmem>>, %arg2: memref<48x256xbf16, #tpu.memory_space<vmem>>, %arg3: memref<1x256xf32, #tpu.memory_space<vmem>>, %arg4: memref<64x256xf32, #tpu.memory_space<vmem>>) attributes {dimension_semantics = [#tpu.dimension_semantics<parallel>], iteration_bounds = array<i64: 1>, scalar_prefetch = 0 : i64, scratch_operands = 0 : i64, tpu.core_type = #tpu.core_type<tc>, window_params = [{transform_indices = @transform_0, window_bounds = array<i64: 64, 48>}, {pipeline_mode = #tpu.pipeline_mode<synchronous>, transform_indices = @transform_1, window_bounds = array<i64: 48, 256>}, {pipeline_mode = #tpu.pipeline_mode<synchronous>, transform_indices = @transform_2, window_bounds = array<i64: 1, 256>}, {transform_indices = @transform_3, window_bounds = array<i64: 64, 256>}]} {
    %c0 = arith.constant 0 : index
    %c0_0 = arith.constant 0 : index
    %0 = vector.load %arg1[%c0, %c0_0] : memref<64x48xbf16, #tpu.memory_space<vmem>>, vector<64x48xbf16>
    %c0_1 = arith.constant 0 : index
    %c0_2 = arith.constant 0 : index
    %1 = vector.load %arg2[%c0_1, %c0_2] : memref<48x256xbf16, #tpu.memory_space<vmem>>, vector<48x256xbf16>
    %cst = arith.constant dense<0.000000e+00> : vector<64x256xf32>
    %2 = tpu.matmul %0, %1, %cst {dimension_numbers = #tpu.dot_dimension_numbers<[1], [0], [0], [1], [0, 0, 1, 1], [], []>} : vector<64x48xbf16>, vector<48x256xbf16>, vector<64x256xf32> -> vector<64x256xf32>
    %c0_3 = arith.constant 0 : index
    %c0_4 = arith.constant 0 : index
    %3 = vector.load %arg3[%c0_3, %c0_4] : memref<1x256xf32, #tpu.memory_space<vmem>>, vector<1x256xf32>
    %4 = vector.broadcast %3 : vector<1x256xf32> to vector<64x256xf32>
    %5 = arith.addf %2, %4 : vector<64x256xf32>
    %c0_5 = arith.constant 0 : index
    %c0_6 = arith.constant 0 : index
    %6 = vector.load %arg4[%c0_5, %c0_6] : memref<64x256xf32, #tpu.memory_space<vmem>>, vector<64x256xf32>
    tpu.vector_store %arg4[%c0_5, %c0_6], %5 {strides = array<i32>} : memref<64x256xf32, #tpu.memory_space<vmem>>, vector<64x256xf32>,
    return
  }
  func.func @transform_0(%arg0: i32) -> (i32, i32) {
    %c0_i32 = arith.constant 0 : i32
    %c0_i32_0 = arith.constant 0 : i32
    return %arg0, %c0_i32 : i32, i32
  }
  func.func @transform_1(%arg0: i32) -> (i32, i32) {
    %c0_i32 = arith.constant 0 : i32
    %c0_i32_0 = arith.constant 0 : i32
    %c0_i32_1 = arith.constant 0 : i32
    return %c0_i32, %c0_i32_0 : i32, i32
  }
  func.func @transform_2(%arg0: i32) -> (i32, i32) {
    %c0_i32 = arith.constant 0 : i32
    %c0_i32_0 = arith.constant 0 : i32
    %c0_i32_1 = arith.constant 0 : i32
    return %c0_i32, %c0_i32_0 : i32, i32
  }
  func.func @transform_3(%arg0: i32) -> (i32, i32) {
    %c0_i32 = arith.constant 0 : i32
    %c0_i32_0 = arith.constant 0 : i32
    return %arg0, %c0_i32 : i32, i32
  }
}

module attributes {stable_mosaic.version = 11 : i64} {
  func.func @_matmul_bias_act_kernel(%arg0: i32, %arg1: memref<392x288xbf16, #tpu.memory_space<vmem>>, %arg2: memref<288x128xbf16, #tpu.memory_space<vmem>>, %arg3: memref<1x128xf32, #tpu.memory_space<vmem>>, %arg4: memref<392x128xf32, #tpu.memory_space<vmem>>) attributes {dimension_semantics = [#tpu.dimension_semantics<parallel>], iteration_bounds = array<i64: 1>, scalar_prefetch = 0 : i64, scratch_operands = 0 : i64, tpu.core_type = #tpu.core_type<tc>, window_params = [{transform_indices = @transform_0, window_bounds = array<i64: 392, 288>}, {pipeline_mode = #tpu.pipeline_mode<synchronous>, transform_indices = @transform_1, window_bounds = array<i64: 288, 128>}, {pipeline_mode = #tpu.pipeline_mode<synchronous>, transform_indices = @transform_2, window_bounds = array<i64: 1, 128>}, {transform_indices = @transform_3, window_bounds = array<i64: 392, 128>}]} {
    %c0 = arith.constant 0 : index
    %c0_0 = arith.constant 0 : index
    %0 = vector.load %arg1[%c0, %c0_0] : memref<392x288xbf16, #tpu.memory_space<vmem>>, vector<392x288xbf16>
    %c0_1 = arith.constant 0 : index
    %c0_2 = arith.constant 0 : index
    %1 = vector.load %arg2[%c0_1, %c0_2] : memref<288x128xbf16, #tpu.memory_space<vmem>>, vector<288x128xbf16>
    %cst = arith.constant dense<0.000000e+00> : vector<392x128xf32>
    %2 = tpu.matmul %0, %1, %cst {dimension_numbers = #tpu.dot_dimension_numbers<[1], [0], [0], [1], [0, 0, 1, 1], [], []>} : vector<392x288xbf16>, vector<288x128xbf16>, vector<392x128xf32> -> vector<392x128xf32>
    %c0_3 = arith.constant 0 : index
    %c0_4 = arith.constant 0 : index
    %3 = vector.load %arg3[%c0_3, %c0_4] : memref<1x128xf32, #tpu.memory_space<vmem>>, vector<1x128xf32>
    %4 = vector.broadcast %3 : vector<1x128xf32> to vector<392x128xf32>
    %5 = arith.addf %2, %4 : vector<392x128xf32>
    %cst_5 = arith.constant 0.000000e+00 : f32
    %6 = vector.broadcast %cst_5 : f32 to vector<392x128xf32>
    %7 = arith.maximumf %5, %6 : vector<392x128xf32>
    %c0_6 = arith.constant 0 : index
    %c0_7 = arith.constant 0 : index
    %8 = vector.load %arg4[%c0_6, %c0_7] : memref<392x128xf32, #tpu.memory_space<vmem>>, vector<392x128xf32>
    tpu.vector_store %arg4[%c0_6, %c0_7], %7 {strides = array<i32>} : memref<392x128xf32, #tpu.memory_space<vmem>>, vector<392x128xf32>,
    return
  }
  func.func @transform_0(%arg0: i32) -> (i32, i32) {
    %c0_i32 = arith.constant 0 : i32
    %c0_i32_0 = arith.constant 0 : i32
    return %arg0, %c0_i32 : i32, i32
  }
  func.func @transform_1(%arg0: i32) -> (i32, i32) {
    %c0_i32 = arith.constant 0 : i32
    %c0_i32_0 = arith.constant 0 : i32
    %c0_i32_1 = arith.constant 0 : i32
    return %c0_i32, %c0_i32_0 : i32, i32
  }
  func.func @transform_2(%arg0: i32) -> (i32, i32) {
    %c0_i32 = arith.constant 0 : i32
    %c0_i32_0 = arith.constant 0 : i32
    %c0_i32_1 = arith.constant 0 : i32
    return %c0_i32, %c0_i32_0 : i32, i32
  }
  func.func @transform_3(%arg0: i32) -> (i32, i32) {
    %c0_i32 = arith.constant 0 : i32
    %c0_i32_0 = arith.constant 0 : i32
    return %arg0, %c0_i32 : i32, i32
  }
}

module attributes {stable_mosaic.version = 11 : i64} {
  func.func @_matmul_bias_act_kernel(%arg0: i32, %arg1: memref<32x208xbf16, #tpu.memory_space<vmem>>, %arg2: memref<208x1024xbf16, #tpu.memory_space<vmem>>, %arg3: memref<1x1024xf32, #tpu.memory_space<vmem>>, %arg4: memref<32x1024xf32, #tpu.memory_space<vmem>>) attributes {dimension_semantics = [#tpu.dimension_semantics<parallel>], iteration_bounds = array<i64: 1>, scalar_prefetch = 0 : i64, scratch_operands = 0 : i64, tpu.core_type = #tpu.core_type<tc>, window_params = [{transform_indices = @transform_0, window_bounds = array<i64: 32, 208>}, {pipeline_mode = #tpu.pipeline_mode<synchronous>, transform_indices = @transform_1, window_bounds = array<i64: 208, 1024>}, {pipeline_mode = #tpu.pipeline_mode<synchronous>, transform_indices = @transform_2, window_bounds = array<i64: 1, 1024>}, {transform_indices = @transform_3, window_bounds = array<i64: 32, 1024>}]} {
    %c0 = arith.constant 0 : index
    %c0_0 = arith.constant 0 : index
    %0 = vector.load %arg1[%c0, %c0_0] : memref<32x208xbf16, #tpu.memory_space<vmem>>, vector<32x208xbf16>
    %c0_1 = arith.constant 0 : index
    %c0_2 = arith.constant 0 : index
    %1 = vector.load %arg2[%c0_1, %c0_2] : memref<208x1024xbf16, #tpu.memory_space<vmem>>, vector<208x1024xbf16>
    %cst = arith.constant dense<0.000000e+00> : vector<32x1024xf32>
    %2 = tpu.matmul %0, %1, %cst {dimension_numbers = #tpu.dot_dimension_numbers<[1], [0], [0], [1], [0, 0, 1, 1], [], []>} : vector<32x208xbf16>, vector<208x1024xbf16>, vector<32x1024xf32> -> vector<32x1024xf32>
    %c0_3 = arith.constant 0 : index
    %c0_4 = arith.constant 0 : index
    %3 = vector.load %arg3[%c0_3, %c0_4] : memref<1x1024xf32, #tpu.memory_space<vmem>>, vector<1x1024xf32>
    %4 = vector.broadcast %3 : vector<1x1024xf32> to vector<32x1024xf32>
    %5 = arith.addf %2, %4 : vector<32x1024xf32>
    %c0_5 = arith.constant 0 : index
    %c0_6 = arith.constant 0 : index
    %6 = vector.load %arg4[%c0_5, %c0_6] : memref<32x1024xf32, #tpu.memory_space<vmem>>, vector<32x1024xf32>
    tpu.vector_store %arg4[%c0_5, %c0_6], %5 {strides = array<i32>} : memref<32x1024xf32, #tpu.memory_space<vmem>>, vector<32x1024xf32>,
    return
  }
  func.func @transform_0(%arg0: i32) -> (i32, i32) {
    %c0_i32 = arith.constant 0 : i32
    %c0_i32_0 = arith.constant 0 : i32
    return %arg0, %c0_i32 : i32, i32
  }
  func.func @transform_1(%arg0: i32) -> (i32, i32) {
    %c0_i32 = arith.constant 0 : i32
    %c0_i32_0 = arith.constant 0 : i32
    %c0_i32_1 = arith.constant 0 : i32
    return %c0_i32, %c0_i32_0 : i32, i32
  }
  func.func @transform_2(%arg0: i32) -> (i32, i32) {
    %c0_i32 = arith.constant 0 : i32
    %c0_i32_0 = arith.constant 0 : i32
    %c0_i32_1 = arith.constant 0 : i32
    return %c0_i32, %c0_i32_0 : i32, i32
  }
  func.func @transform_3(%arg0: i32) -> (i32, i32) {
    %c0_i32 = arith.constant 0 : i32
    %c0_i32_0 = arith.constant 0 : i32
    return %arg0, %c0_i32 : i32, i32
  }
}

module attributes {stable_mosaic.version = 11 : i64} {
  func.func @_matmul_bias_act_kernel(%arg0: i32, %arg1: memref<512x144xbf16, #tpu.memory_space<vmem>>, %arg2: memref<144x128xbf16, #tpu.memory_space<vmem>>, %arg3: memref<1x128xf32, #tpu.memory_space<vmem>>, %arg4: memref<512x128xf32, #tpu.memory_space<vmem>>) attributes {dimension_semantics = [#tpu.dimension_semantics<parallel>], iteration_bounds = array<i64: 4>, scalar_prefetch = 0 : i64, scratch_operands = 0 : i64, tpu.core_type = #tpu.core_type<tc>, window_params = [{transform_indices = @transform_0, window_bounds = array<i64: 512, 144>}, {pipeline_mode = #tpu.pipeline_mode<synchronous>, transform_indices = @transform_1, window_bounds = array<i64: 144, 128>}, {pipeline_mode = #tpu.pipeline_mode<synchronous>, transform_indices = @transform_2, window_bounds = array<i64: 1, 128>}, {transform_indices = @transform_3, window_bounds = array<i64: 512, 128>}]} {
    %c0 = arith.constant 0 : index
    %c0_0 = arith.constant 0 : index
    %0 = vector.load %arg1[%c0, %c0_0] : memref<512x144xbf16, #tpu.memory_space<vmem>>, vector<512x144xbf16>
    %c0_1 = arith.constant 0 : index
    %c0_2 = arith.constant 0 : index
    %1 = vector.load %arg2[%c0_1, %c0_2] : memref<144x128xbf16, #tpu.memory_space<vmem>>, vector<144x128xbf16>
    %cst = arith.constant dense<0.000000e+00> : vector<512x128xf32>
    %2 = tpu.matmul %0, %1, %cst {dimension_numbers = #tpu.dot_dimension_numbers<[1], [0], [0], [1], [0, 0, 1, 1], [], []>} : vector<512x144xbf16>, vector<144x128xbf16>, vector<512x128xf32> -> vector<512x128xf32>
    %c0_3 = arith.constant 0 : index
    %c0_4 = arith.constant 0 : index
    %3 = vector.load %arg3[%c0_3, %c0_4] : memref<1x128xf32, #tpu.memory_space<vmem>>, vector<1x128xf32>
    %4 = vector.broadcast %3 : vector<1x128xf32> to vector<512x128xf32>
    %5 = arith.addf %2, %4 : vector<512x128xf32>
    %6 = math.tanh %5 : vector<512x128xf32>
    %c0_5 = arith.constant 0 : index
    %c0_6 = arith.constant 0 : index
    %7 = vector.load %arg4[%c0_5, %c0_6] : memref<512x128xf32, #tpu.memory_space<vmem>>, vector<512x128xf32>
    tpu.vector_store %arg4[%c0_5, %c0_6], %6 {strides = array<i32>} : memref<512x128xf32, #tpu.memory_space<vmem>>, vector<512x128xf32>,
    return
  }
  func.func @transform_0(%arg0: i32) -> (i32, i32) {
    %c0_i32 = arith.constant 0 : i32
    %c0_i32_0 = arith.constant 0 : i32
    return %arg0, %c0_i32 : i32, i32
  }
  func.func @transform_1(%arg0: i32) -> (i32, i32) {
    %c0_i32 = arith.constant 0 : i32
    %c0_i32_0 = arith.constant 0 : i32
    %c0_i32_1 = arith.constant 0 : i32
    return %c0_i32, %c0_i32_0 : i32, i32
  }
  func.func @transform_2(%arg0: i32) -> (i32, i32) {
    %c0_i32 = arith.constant 0 : i32
    %c0_i32_0 = arith.constant 0 : i32
    %c0_i32_1 = arith.constant 0 : i32
    return %c0_i32, %c0_i32_0 : i32, i32
  }
  func.func @transform_3(%arg0: i32) -> (i32, i32) {
    %c0_i32 = arith.constant 0 : i32
    %c0_i32_0 = arith.constant 0 : i32
    return %arg0, %c0_i32 : i32, i32
  }
}

</mosaic_0001>

<llo_original>
// kernel: vae_forward.10
$region0: #{vae_forward.10}
  #allocation0 [shape = 'u32[]', space=smem, size = 0x4, offset = 0x4, fixed_abs, tag = 'smem constant byte address 0x4 - core index']
  #allocation1 [shape = 'u32[72,128]{1,0:T(1,128)}', space=vmem, size = 0x9000, scoped, tag = 'internal scratch']
  %s0 = inlined_call_operand.vmem [shape: bf16[392,208], index: 0, kind: input, shape index: {}]
  %s1 = inlined_call_operand.vmem [shape: bf16[208,128], index: 1, kind: input, shape index: {}]
  %s2 = inlined_call_operand.vmem [shape: f32[1,128], index: 2, kind: input, shape index: {}]
  %s3 = inlined_call_operand.vmem [shape: f32[392,128], index: 3, kind: output, shape index: {}]
  %s4 = sld [smem:[#allocation0]]
  $region22: #{vae_forward.10} parent=0
    _
  %s6 = ssub.s32 1, %s4
  %s7 = scalar_select 0, %s6, %s4
  // Predicated region
  $region2: #{vae_forward.10} parent=0 // pred_check
    _
  $region3: #{vae_forward.10} parent=0 // pred_check_branch
    %9 = sbr.rel (0) target = $region5
  $region4: #{vae_forward.10} parent=0 // pred_region
    _
  $region5: #{vae_forward.10} parent=0 // pred_fallthru
    _
  // Predicated region
  $region6: #{vae_forward.10} parent=0 // pred_check
    _
  $region7: #{vae_forward.10} parent=0 // pred_check_branch
    %11 = sbr.rel (0) target = $region9
  $region8: #{vae_forward.10} parent=0 // pred_region
    _
  $region9: #{vae_forward.10} parent=0 // pred_fallthru
    _
  // Predicated region
  $region10: #{vae_forward.10} parent=0 // pred_check
    _
  $region11: #{vae_forward.10} parent=0 // pred_check_branch
    %13 = sbr.rel (0) target = $region13
  $region12: #{vae_forward.10} parent=0 // pred_region
    _
  $region13: #{vae_forward.10} parent=0 // pred_fallthru
    _
  %v15 = vld [vmem:[%s0] sm:$0xff]
  %v16 = vld [vmem:[%s0 + $0x8] sm:$0xff]
  %v17 = vld [vmem:[%s0 + $0x10] sm:$0xff]
  %v18 = vld [vmem:[%s0 + $0x18] sm:$0xff]
  %v19 = vld [vmem:[%s0 + $0x20] sm:$0xff]
  %v20 = vld [vmem:[%s0 + $0x28] sm:$0xff]
  %v21 = vld [vmem:[%s0 + $0x30] sm:$0xff]
  %v22 = vld [vmem:[%s0 + $0x38] sm:$0xff]
  %v23 = vld [vmem:[%s0 + $0x40] sm:$0xff]
  %v24 = vld [vmem:[%s0 + $0x48] sm:$0xff]
  %v25 = vld [vmem:[%s0 + $0x50] sm:$0xff]
  %v26 = vld [vmem:[%s0 + $0x58] sm:$0xff]
  %v27 = vld [vmem:[%s0 + $0x60] sm:$0xff]
  %v28 = vld [vmem:[%s0 + $0x68] sm:$0xff]
  %v29 = vld [vmem:[%s0 + $0x70] sm:$0xff]
  %v30 = vld [vmem:[%s0 + $0x78] sm:$0xff]
  %v31 = vld [vmem:[%s0 + $0x80] sm:$0xff]
  %v32 = vld [vmem:[%s0 + $0x88] sm:$0xff]
  %v33 = vld [vmem:[%s0 + $0x90] sm:$0xff]
  %v34 = vld [vmem:[%s0 + $0x98] sm:$0xff]
  %v35 = vld [vmem:[%s0 + $0xa0] sm:$0xff]
  %v36 = vld [vmem:[%s0 + $0xa8] sm:$0xff]
  %v37 = vld [vmem:[%s0 + $0xb0] sm:$0xff]
  %v38 = vld [vmem:[%s0 + $0xb8] sm:$0xff]
  %v39 = vld [vmem:[%s0 + $0xc0] sm:$0xff]
  %v40 = vld [vmem:[%s0 + $0xc8] sm:$0xff]
  %v41 = vld [vmem:[%s0 + $0xd0] sm:$0xff]
  %v42 = vld [vmem:[%s0 + $0xd8] sm:$0xff]
  %v43 = vld [vmem:[%s0 + $0xe0] sm:$0xff]
  %v44 = vld [vmem:[%s0 + $0xe8] sm:$0xff]
  %v45 = vld [vmem:[%s0 + $0xf0] sm:$0xff]
  %v46 = vld [vmem:[%s0 + $0xf8] sm:$0xff]
  %v47 = vld [vmem:[%s0 + $0x100] sm:$0xff]
  %v48 = vld [vmem:[%s0 + $0x108] sm:$0xff]
  %v49 = vld [vmem:[%s0 + $0x110] sm:$0xff]
  %v50 = vld [vmem:[%s0 + $0x118] sm:$0xff]
  %v51 = vld [vmem:[%s0 + $0x120] sm:$0xff]
  %v52 = vld [vmem:[%s0 + $0x128] sm:$0xff]
  %v53 = vld [vmem:[%s0 + $0x130] sm:$0xff]
  %v54 = vld [vmem:[%s0 + $0x138] sm:$0xff]
  %v55 = vld [vmem:[%s0 + $0x140] sm:$0xff]
  %v56 = vld [vmem:[%s0 + $0x148] sm:$0xff]
  %v57 = vld [vmem:[%s0 + $0x150] sm:$0xff]
  %v58 = vld [vmem:[%s0 + $0x158] sm:$0xff]
  %v59 = vld [vmem:[%s0 + $0x160] sm:$0xff]
  %v60 = vld [vmem:[%s0 + $0x168] sm:$0xff]
  %v61 = vld [vmem:[%s0 + $0x170] sm:$0xff]
  %v62 = vld [vmem:[%s0 + $0x178] sm:$0xff]
  %v63 = vld [vmem:[%s0 + $0x180] sm:$0xff]
  %v64 = vld [vmem:[%s1] sm:$0xf]
  %v65 = vld [vmem:[%s1 + $0x4] sm:$0xf]
  %v66 = vld [vmem:[%s1 + $0x8] sm:$0xf]
  %v67 = vld [vmem:[%s1 + $0xc] sm:$0xf]
  %v68 = vld [vmem:[%s1 + $0x10] sm:$0xf]
  %v69 = vld [vmem:[%s1 + $0x14] sm:$0xf]
  %v70 = vld [vmem:[%s1 + $0x18] sm:$0xf]
  %v71 = vld [vmem:[%s1 + $0x1c] sm:$0xf]
  %v72 = vld [vmem:[%s1 + $0x20] sm:$0xf]
  %v73 = vld [vmem:[%s1 + $0x24] sm:$0xf]
  %v74 = vld [vmem:[%s1 + $0x28] sm:$0xf]
  %v75 = vld [vmem:[%s1 + $0x2c] sm:$0xf]
  %v76 = vld [vmem:[%s1 + $0x30] sm:$0xf]
  %v77 = vld [vmem:[%s1 + $0x34] sm:$0xf]
  %v78 = vld [vmem:[%s1 + $0x38] sm:$0xf]
  %v79 = vld [vmem:[%s1 + $0x3c] sm:$0xf]
  %v80 = vld [vmem:[%s1 + $0x40] sm:$0xf]
  %v81 = vld [vmem:[%s1 + $0x44] sm:$0xf]
  %v82 = vld [vmem:[%s1 + $0x48] sm:$0xf]
  %v83 = vld [vmem:[%s1 + $0x4c] sm:$0xf]
  %v84 = vld [vmem:[%s1 + $0x50] sm:$0xf]
  %v85 = vld [vmem:[%s1 + $0x54] sm:$0xf]
  %v86 = vld [vmem:[%s1 + $0x58] sm:$0xf]
  %v87 = vld [vmem:[%s1 + $0x5c] sm:$0xf]
  %v88 = vld [vmem:[%s1 + $0x60] sm:$0xf]
  %v89 = vld [vmem:[%s1 + $0x64] sm:$0xf]
  %v90 = vld [vmem:[%s2] sm:$0x1]
  %v92 = vperm.slane %v90, 0
  %v143 = vunpack.c.l.b16 %v15
  %v144 = vunpack.c.h.b16 %v15
  %v145 = vunpack.c.l.b16 %v16
  %v146 = vunpack.c.h.b16 %v16
  %v147 = vunpack.c.l.b16 %v17
  %v148 = vunpack.c.h.b16 %v17
  %v149 = vunpack.c.l.b16 %v18
  %v150 = vunpack.c.h.b16 %v18
  %v151 = vunpack.c.l.b16 %v19
  %v152 = vunpack.c.h.b16 %v19
  %v153 = vunpack.c.l.b16 %v20
  %v154 = vunpack.c.h.b16 %v20
  %v155 = vunpack.c.l.b16 %v21
  %v156 = vunpack.c.h.b16 %v21
  %v157 = vunpack.c.l.b16 %v22
  %v158 = vunpack.c.h.b16 %v22
  %v159 = vunpack.c.l.b16 %v23
  %v160 = vunpack.c.h.b16 %v23
  %v161 = vunpack.c.l.b16 %v24
  %v162 = vunpack.c.h.b16 %v24
  %v163 = vunpack.c.l.b16 %v25
  %v164 = vunpack.c.h.b16 %v25
  %v165 = vunpack.c.l.b16 %v26
  %v166 = vunpack.c.h.b16 %v26
  %v167 = vunpack.c.l.b16 %v27
  %v168 = vunpack.c.h.b16 %v27
  %v169 = vunpack.c.l.b16 %v28
  %v170 = vunpack.c.h.b16 %v28
  %v171 = vunpack.c.l.b16 %v29
  %v172 = vunpack.c.h.b16 %v29
  %v173 = vunpack.c.l.b16 %v30
  %v174 = vunpack.c.h.b16 %v30
  %v175 = vunpack.c.l.b16 %v31
  %v176 = vunpack.c.h.b16 %v31
  %v177 = vunpack.c.l.b16 %v32
  %v178 = vunpack.c.h.b16 %v32
  %v179 = vunpack.c.l.b16 %v33
  %v180 = vunpack.c.h.b16 %v33
  %v181 = vunpack.c.l.b16 %v34
  %v182 = vunpack.c.h.b16 %v34
  %v183 = vunpack.c.l.b16 %v35
  %v184 = vunpack.c.h.b16 %v35
  %v185 = vunpack.c.l.b16 %v36
  %v186 = vunpack.c.h.b16 %v36
  %v187 = vunpack.c.l.b16 %v37
  %v188 = vunpack.c.h.b16 %v37
  %v189 = vunpack.c.l.b16 %v38
  %v190 = vunpack.c.h.b16 %v38
  %v191 = vunpack.c.l.b16 %v39
  %v192 = vunpack.c.h.b16 %v39
  %v193 = vunpack.c.l.b16 %v40
  %v194 = vunpack.c.h.b16 %v40
  %v195 = vunpack.c.l.b16 %v41
  %v196 = vunpack.c.h.b16 %v41
  %v197 = vunpack.c.l.b16 %v42
  %v198 = vunpack.c.h.b16 %v42
  %v199 = vunpack.c.l.b16 %v43
  %v200 = vunpack.c.h.b16 %v43
  %v201 = vunpack.c.l.b16 %v44
  %v202 = vunpack.c.h.b16 %v44
  %v203 = vunpack.c.l.b16 %v45
  %v204 = vunpack.c.h.b16 %v45
  %v205 = vunpack.c.l.b16 %v46
  %v206 = vunpack.c.h.b16 %v46
  %v207 = vunpack.c.l.b16 %v47
  %v208 = vunpack.c.h.b16 %v47
  %v209 = vunpack.c.l.b16 %v48
  %v210 = vunpack.c.h.b16 %v48
  %v211 = vunpack.c.l.b16 %v49
  %v212 = vunpack.c.h.b16 %v49
  %v213 = vunpack.c.l.b16 %v50
  %v214 = vunpack.c.h.b16 %v50
  %v215 = vunpack.c.l.b16 %v51
  %v216 = vunpack.c.h.b16 %v51
  %v217 = vunpack.c.l.b16 %v52
  %v218 = vunpack.c.h.b16 %v52
  %v219 = vunpack.c.l.b16 %v53
  %v220 = vunpack.c.h.b16 %v53
  %v221 = vunpack.c.l.b16 %v54
  %v222 = vunpack.c.h.b16 %v54
  %v223 = vunpack.c.l.b16 %v55
  %v224 = vunpack.c.h.b16 %v55
  %v225 = vunpack.c.l.b16 %v56
  %v226 = vunpack.c.h.b16 %v56
  %v227 = vunpack.c.l.b16 %v57
  %v228 = vunpack.c.h.b16 %v57
  %v229 = vunpack.c.l.b16 %v58
  %v230 = vunpack.c.h.b16 %v58
  %v231 = vunpack.c.l.b16 %v59
  %v232 = vunpack.c.h.b16 %v59
  %v233 = vunpack.c.l.b16 %v60
  %v234 = vunpack.c.h.b16 %v60
  %v235 = vunpack.c.l.b16 %v61
  %v236 = vunpack.c.h.b16 %v61
  %v237 = vunpack.c.l.b16 %v62
  %v238 = vunpack.c.h.b16 %v62
  %v239 = vunpack.c.l.b16 %v63
  %v240 = vunpack.c.h.b16 %v63
  %v241 = vpack.c.b16 %v145, %v143
  %v242 = vpack.c.b16 %v146, %v144
  %v243 = vpack.c.b16 %v149, %v147
  %v244 = vpack.c.b16 %v150, %v148
  %v245 = vpack.c.b16 %v153, %v151
  %v246 = vpack.c.b16 %v154, %v152
  %v247 = vpack.c.b16 %v157, %v155
  %v248 = vpack.c.b16 %v158, %v156
  %v249 = vpack.c.b16 %v161, %v159
  %v250 = vpack.c.b16 %v162, %v160
  %v251 = vpack.c.b16 %v165, %v163
  %v252 = vpack.c.b16 %v166, %v164
  %v253 = vpack.c.b16 %v169, %v167
  %v254 = vpack.c.b16 %v170, %v168
  %v255 = vpack.c.b16 %v173, %v171
  %v256 = vpack.c.b16 %v174, %v172
  %v257 = vpack.c.b16 %v177, %v175
  %v258 = vpack.c.b16 %v178, %v176
  %v259 = vpack.c.b16 %v181, %v179
  %v260 = vpack.c.b16 %v182, %v180
  %v261 = vpack.c.b16 %v185, %v183
  %v262 = vpack.c.b16 %v186, %v184
  %v263 = vpack.c.b16 %v189, %v187
  %v264 = vpack.c.b16 %v190, %v188
  %v265 = vpack.c.b16 %v193, %v191
  %v266 = vpack.c.b16 %v194, %v192
  %v267 = vpack.c.b16 %v197, %v195
  %v268 = vpack.c.b16 %v198, %v196
  %v269 = vpack.c.b16 %v201, %v199
  %v270 = vpack.c.b16 %v202, %v200
  %v271 = vpack.c.b16 %v205, %v203
  %v272 = vpack.c.b16 %v206, %v204
  %v273 = vpack.c.b16 %v209, %v207
  %v274 = vpack.c.b16 %v210, %v208
  %v275 = vpack.c.b16 %v213, %v211
  %v276 = vpack.c.b16 %v214, %v212
  %v277 = vpack.c.b16 %v217, %v215
  %v278 = vpack.c.b16 %v218, %v216
  %v279 = vpack.c.b16 %v221, %v219
  %v280 = vpack.c.b16 %v222, %v220
  %v281 = vpack.c.b16 %v225, %v223
  %v282 = vpack.c.b16 %v226, %v224
  %v283 = vpack.c.b16 %v229, %v227
  %v284 = vpack.c.b16 %v230, %v228
  %v285 = vpack.c.b16 %v233, %v231
  %v286 = vpack.c.b16 %v234, %v232
  %v287 = vpack.c.b16 %v237, %v235
  %v288 = vpack.c.b16 %v238, %v236
  %v289 = vpack.c.b16 %v239, %v239
  %v290 = vpack.c.b16 %v240, %v240
  %v342 = vunpack.c.l.b16 %v64
  %v343 = vunpack.c.l.b16 %v65
  %v344 = vunpack.c.l.b16 %v66
  %v345 = vunpack.c.l.b16 %v67
  %v346 = vunpack.c.l.b16 %v68
  %v347 = vunpack.c.l.b16 %v69
  %v348 = vunpack.c.l.b16 %v70
  %v349 = vunpack.c.l.b16 %v71
  %v350 = vunpack.c.l.b16 %v72
  %v351 = vunpack.c.l.b16 %v73
  %v352 = vunpack.c.l.b16 %v74
  %v353 = vunpack.c.l.b16 %v75
  %v354 = vunpack.c.l.b16 %v76
  %v355 = vunpack.c.l.b16 %v77
  %v356 = vunpack.c.l.b16 %v78
  %v357 = vunpack.c.l.b16 %v79
  %v358 = vunpack.c.l.b16 %v80
  %v359 = vunpack.c.l.b16 %v81
  %v360 = vunpack.c.l.b16 %v82
  %v361 = vunpack.c.l.b16 %v83
  %v362 = vunpack.c.l.b16 %v84
  %v363 = vunpack.c.l.b16 %v85
  %v364 = vunpack.c.l.b16 %v86
  %v365 = vunpack.c.l.b16 %v87
  %v366 = vunpack.c.l.b16 %v88
  %v367 = vunpack.c.l.b16 %v89
  %v368 = vpack.c.b16 %v343, %v342
  %v369 = vpack.c.b16 %v345, %v344
  %v370 = vpack.c.b16 %v347, %v346
  %v371 = vpack.c.b16 %v349, %v348
  %v372 = vpack.c.b16 %v351, %v350
  %v373 = vpack.c.b16 %v353, %v352
  %v374 = vpack.c.b16 %v355, %v354
  %v375 = vpack.c.b16 %v357, %v356
  %v376 = vpack.c.b16 %v359, %v358
  %v377 = vpack.c.b16 %v361, %v360
  %v378 = vpack.c.b16 %v363, %v362
  %v379 = vpack.c.b16 %v365, %v364
  %v380 = vpack.c.b16 %v367, %v366
  %vm394 = vcmask 654336
  %v396 = vsel %vm394, %v242, 0
  %v399 = vsel %vm394, %v244, 0
  %v402 = vsel %vm394, %v246, 0
  %v405 = vsel %vm394, %v248, 0
  %v408 = vsel %vm394, %v250, 0
  %v411 = vsel %vm394, %v252, 0
  %v414 = vsel %vm394, %v254, 0
  %v417 = vsel %vm394, %v256, 0
  %v420 = vsel %vm394, %v258, 0
  %v423 = vsel %vm394, %v260, 0
  %v426 = vsel %vm394, %v262, 0
  %v429 = vsel %vm394, %v264, 0
  %v432 = vsel %vm394, %v266, 0
  %v435 = vsel %vm394, %v268, 0
  %v438 = vsel %vm394, %v270, 0
  %v441 = vsel %vm394, %v272, 0
  %v444 = vsel %vm394, %v274, 0
  %v447 = vsel %vm394, %v276, 0
  %v450 = vsel %vm394, %v278, 0
  %v453 = vsel %vm394, %v280, 0
  %v456 = vsel %vm394, %v282, 0
  %v459 = vsel %vm394, %v284, 0
  %v462 = vsel %vm394, %v286, 0
  %v465 = vsel %vm394, %v288, 0
  %v468 = vsel %vm394, %v290, 0
  %470 = vmatpush.bf16.msra.mxu0 %v375
  %471 = vmatpush.bf16.msra.mxu0 %v374
  %472 = vmatpush.bf16.msra.mxu0 %v373
  %473 = vmatpush.bf16.msra.mxu0 %v372
  %474 = vmatpush.bf16.msra.mxu0 %v371
  %475 = vmatpush.bf16.msra.mxu0 %v370
  %476 = vmatpush.bf16.msra.mxu0 %v369
  %477 = vmatpush.bf16.msra.mxu0 %v368
  %478 = vmatmul.bf16.gmra.mxu0 %v241
  %v479 = vpop.f32.mrf.mxu0
  %v480 = vadd.f32 %v92, %v479
  %v481 = vpop.f32.mrf.mxu0
  %v482 = vadd.f32 %v92, %v481
  %483 = vmatmul.bf16.gmra.mxu0 %v243
  %v484 = vpop.f32.mrf.mxu0
  %v485 = vadd.f32 %v92, %v484
  %v486 = vpop.f32.mrf.mxu0
  %v487 = vadd.f32 %v92, %v486
  %488 = vmatmul.bf16.gmra.mxu0 %v245
  %v489 = vpop.f32.mrf.mxu0
  %v490 = vadd.f32 %v92, %v489
  %v491 = vpop.f32.mrf.mxu0
  %v492 = vadd.f32 %v92, %v491
  %493 = vmatmul.bf16.gmra.mxu0 %v247
  %v494 = vpop.f32.mrf.mxu0
  %v495 = vadd.f32 %v92, %v494
  %v496 = vpop.f32.mrf.mxu0
  %v497 = vadd.f32 %v92, %v496
  %498 = vmatmul.bf16.gmra.mxu0 %v249
  %v499 = vpop.f32.mrf.mxu0
  %v500 = vadd.f32 %v92, %v499
  %v501 = vpop.f32.mrf.mxu0
  %v502 = vadd.f32 %v92, %v501
  %503 = vmatmul.bf16.gmra.mxu0 %v251
  %v504 = vpop.f32.mrf.mxu0
  %v505 = vadd.f32 %v92, %v504
  %v506 = vpop.f32.mrf.mxu0
  %v507 = vadd.f32 %v92, %v506
  %508 = vmatmul.bf16.gmra.mxu0 %v253
  %v509 = vpop.f32.mrf.mxu0
  %v510 = vadd.f32 %v92, %v509
  %v511 = vpop.f32.mrf.mxu0
  %v512 = vadd.f32 %v92, %v511
  %513 = vmatmul.bf16.gmra.mxu0 %v255
  %v514 = vpop.f32.mrf.mxu0
  %v515 = vadd.f32 %v92, %v514
  %v516 = vpop.f32.mrf.mxu0
  %v517 = vadd.f32 %v92, %v516
  %518 = vmatmul.bf16.gmra.mxu0 %v257
  %v519 = vpop.f32.mrf.mxu0
  %v520 = vadd.f32 %v92, %v519
  %v521 = vpop.f32.mrf.mxu0
  %v522 = vadd.f32 %v92, %v521
  %523 = vmatmul.bf16.gmra.mxu0 %v259
  %v524 = vpop.f32.mrf.mxu0
  %v525 = vadd.f32 %v92, %v524
  %v526 = vpop.f32.mrf.mxu0
  %v527 = vadd.f32 %v92, %v526
  %528 = vmatmul.bf16.gmra.mxu0 %v261
  %v529 = vpop.f32.mrf.mxu0
  %v530 = vadd.f32 %v92, %v529
  %v531 = vpop.f32.mrf.mxu0
  %v532 = vadd.f32 %v92, %v531
  %533 = vmatmul.bf16.gmra.mxu0 %v263
  %v534 = vpop.f32.mrf.mxu0
  %v535 = vadd.f32 %v92, %v534
  %v536 = vpop.f32.mrf.mxu0
  %v537 = vadd.f32 %v92, %v536
  %538 = vmatmul.bf16.gmra.mxu0 %v265
  %v539 = vpop.f32.mrf.mxu0
  %v540 = vadd.f32 %v92, %v539
  %v541 = vpop.f32.mrf.mxu0
  %v542 = vadd.f32 %v92, %v541
  %543 = vmatmul.bf16.gmra.mxu0 %v267
  %v544 = vpop.f32.mrf.mxu0
  %v545 = vadd.f32 %v92, %v544
  %v546 = vpop.f32.mrf.mxu0
  %v547 = vadd.f32 %v92, %v546
  %548 = vmatmul.bf16.gmra.mxu0 %v269
  %v549 = vpop.f32.mrf.mxu0
  %v550 = vadd.f32 %v92, %v549
  %v551 = vpop.f32.mrf.mxu0
  %v552 = vadd.f32 %v92, %v551
  %553 = vmatmul.bf16.gmra.mxu0 %v271
  %v554 = vpop.f32.mrf.mxu0
  %v555 = vadd.f32 %v92, %v554
  %v556 = vpop.f32.mrf.mxu0
  %v557 = vadd.f32 %v92, %v556
  %558 = vmatmul.bf16.gmra.mxu0 %v273
  %v559 = vpop.f32.mrf.mxu0
  %v560 = vadd.f32 %v92, %v559
  %v561 = vpop.f32.mrf.mxu0
  %v562 = vadd.f32 %v92, %v561
  %563 = vmatmul.bf16.gmra.mxu0 %v275
  %v564 = vpop.f32.mrf.mxu0
  %v565 = vadd.f32 %v92, %v564
  %v566 = vpop.f32.mrf.mxu0
  %v567 = vadd.f32 %v92, %v566
  %568 = vmatmul.bf16.gmra.mxu0 %v277
  %v569 = vpop.f32.mrf.mxu0
  %v570 = vadd.f32 %v92, %v569
  %v571 = vpop.f32.mrf.mxu0
  %v572 = vadd.f32 %v92, %v571
  %573 = vmatmul.bf16.gmra.mxu0 %v279
  %v574 = vpop.f32.mrf.mxu0
  %v575 = vadd.f32 %v92, %v574
  %v576 = vpop.f32.mrf.mxu0
  %v577 = vadd.f32 %v92, %v576
  %578 = vmatmul.bf16.gmra.mxu0 %v281
  %v579 = vpop.f32.mrf.mxu0
  %v580 = vadd.f32 %v92, %v579
  %v581 = vpop.f32.mrf.mxu0
  %v582 = vadd.f32 %v92, %v581
  %583 = vmatmul.bf16.gmra.mxu0 %v283
  %v584 = vpop.f32.mrf.mxu0
  %v585 = vadd.f32 %v92, %v584
  %v586 = vpop.f32.mrf.mxu0
  %v587 = vadd.f32 %v92, %v586
  %588 = vmatmul.bf16.gmra.mxu0 %v285
  %v589 = vpop.f32.mrf.mxu0
  %v590 = vadd.f32 %v92, %v589
  %v591 = vpop.f32.mrf.mxu0
  %v592 = vadd.f32 %v92, %v591
  %593 = vmatmul.bf16.gmra.mxu0 %v287
  %v594 = vpop.f32.mrf.mxu0
  %v595 = vadd.f32 %v92, %v594
  %v596 = vpop.f32.mrf.mxu0
  %v597 = vadd.f32 %v92, %v596
  %598 = vmatmul.bf16.gmra.mxu0 %v289
  %v599 = vpop.f32.mrf.mxu0
  %v600 = vadd.f32 %v92, %v599
  %v601 = vpop.f32.mrf.mxu0
  %602 = vdwg.mxu0
  %603 = vmatpush.bf16.msra.mxu0 0
  %604 = vmatpush.bf16.msra.mxu0 0
  %605 = vmatpush.bf16.msra.mxu0 0
  %606 = vmatpush.bf16.msra.mxu0 %v380
  %607 = vmatpush.bf16.msra.mxu0 %v379
  %608 = vmatpush.bf16.msra.mxu0 %v378
  %609 = vmatpush.bf16.msra.mxu0 %v377
  %610 = vmatpush.bf16.msra.mxu0 %v376
  %611 = vmatmul.bf16.gmra.mxu0 %v396
  %v612 = vpop.f32.mrf.mxu0
  %v613 = vadd.f32 %v480, %v612
  %v614 = vpop.f32.mrf.mxu0
  %v615 = vadd.f32 %v482, %v614
  %616 = vmatmul.bf16.gmra.mxu0 %v399
  %v617 = vpop.f32.mrf.mxu0
  %v618 = vadd.f32 %v485, %v617
  %v619 = vpop.f32.mrf.mxu0
  %v620 = vadd.f32 %v487, %v619
  %621 = vmatmul.bf16.gmra.mxu0 %v402
  %v622 = vpop.f32.mrf.mxu0
  %v623 = vadd.f32 %v490, %v622
  %v624 = vpop.f32.mrf.mxu0
  %v625 = vadd.f32 %v492, %v624
  %626 = vmatmul.bf16.gmra.mxu0 %v405
  %v627 = vpop.f32.mrf.mxu0
  %v628 = vadd.f32 %v495, %v627
  %v629 = vpop.f32.mrf.mxu0
  %v630 = vadd.f32 %v497, %v629
  %631 = vmatmul.bf16.gmra.mxu0 %v408
  %v632 = vpop.f32.mrf.mxu0
  %v633 = vadd.f32 %v500, %v632
  %v634 = vpop.f32.mrf.mxu0
  %v635 = vadd.f32 %v502, %v634
  %636 = vmatmul.bf16.gmra.mxu0 %v411
  %v637 = vpop.f32.mrf.mxu0
  %v638 = vadd.f32 %v505, %v637
  %v639 = vpop.f32.mrf.mxu0
  %v640 = vadd.f32 %v507, %v639
  %641 = vmatmul.bf16.gmra.mxu0 %v414
  %v642 = vpop.f32.mrf.mxu0
  %v643 = vadd.f32 %v510, %v642
  %v644 = vpop.f32.mrf.mxu0
  %v645 = vadd.f32 %v512, %v644
  %646 = vmatmul.bf16.gmra.mxu0 %v417
  %v647 = vpop.f32.mrf.mxu0
  %v648 = vadd.f32 %v515, %v647
  %v649 = vpop.f32.mrf.mxu0
  %v650 = vadd.f32 %v517, %v649
  %651 = vmatmul.bf16.gmra.mxu0 %v420
  %v652 = vpop.f32.mrf.mxu0
  %v653 = vadd.f32 %v520, %v652
  %v654 = vpop.f32.mrf.mxu0
  %v655 = vadd.f32 %v522, %v654
  %656 = vmatmul.bf16.gmra.mxu0 %v423
  %v657 = vpop.f32.mrf.mxu0
  %v658 = vadd.f32 %v525, %v657
  %v659 = vpop.f32.mrf.mxu0
  %v660 = vadd.f32 %v527, %v659
  %661 = vmatmul.bf16.gmra.mxu0 %v426
  %v662 = vpop.f32.mrf.mxu0
  %v663 = vadd.f32 %v530, %v662
  %v664 = vpop.f32.mrf.mxu0
  %v665 = vadd.f32 %v532, %v664
  %666 = vmatmul.bf16.gmra.mxu0 %v429
  %v667 = vpop.f32.mrf.mxu0
  %v668 = vadd.f32 %v535, %v667
  %v669 = vpop.f32.mrf.mxu0
  %v670 = vadd.f32 %v537, %v669
  %671 = vmatmul.bf16.gmra.mxu0 %v432
  %v672 = vpop.f32.mrf.mxu0
  %v673 = vadd.f32 %v540, %v672
  %v674 = vpop.f32.mrf.mxu0
  %v675 = vadd.f32 %v542, %v674
  %676 = vmatmul.bf16.gmra.mxu0 %v435
  %v677 = vpop.f32.mrf.mxu0
  %v678 = vadd.f32 %v545, %v677
  %v679 = vpop.f32.mrf.mxu0
  %v680 = vadd.f32 %v547, %v679
  %681 = vmatmul.bf16.gmra.mxu0 %v438
  %v682 = vpop.f32.mrf.mxu0
  %v683 = vadd.f32 %v550, %v682
  %v684 = vpop.f32.mrf.mxu0
  %v685 = vadd.f32 %v552, %v684
  %686 = vmatmul.bf16.gmra.mxu0 %v441
  %v687 = vpop.f32.mrf.mxu0
  %v688 = vadd.f32 %v555, %v687
  %v689 = vpop.f32.mrf.mxu0
  %v690 = vadd.f32 %v557, %v689
  %691 = vmatmul.bf16.gmra.mxu0 %v444
  %v692 = vpop.f32.mrf.mxu0
  %v693 = vadd.f32 %v560, %v692
  %v694 = vpop.f32.mrf.mxu0
  %v695 = vadd.f32 %v562, %v694
  %696 = vmatmul.bf16.gmra.mxu0 %v447
  %v697 = vpop.f32.mrf.mxu0
  %v698 = vadd.f32 %v565, %v697
  %v699 = vpop.f32.mrf.mxu0
  %v700 = vadd.f32 %v567, %v699
  %701 = vmatmul.bf16.gmra.mxu0 %v450
  %v702 = vpop.f32.mrf.mxu0
  %v703 = vadd.f32 %v570, %v702
  %v704 = vpop.f32.mrf.mxu0
  %v705 = vadd.f32 %v572, %v704
  %706 = vmatmul.bf16.gmra.mxu0 %v453
  %v707 = vpop.f32.mrf.mxu0
  %v708 = vadd.f32 %v575, %v707
  %v709 = vpop.f32.mrf.mxu0
  %v710 = vadd.f32 %v577, %v709
  %711 = vmatmul.bf16.gmra.mxu0 %v456
  %v712 = vpop.f32.mrf.mxu0
  %v713 = vadd.f32 %v580, %v712
  %v714 = vpop.f32.mrf.mxu0
  %v715 = vadd.f32 %v582, %v714
  %716 = vmatmul.bf16.gmra.mxu0 %v459
  %v717 = vpop.f32.mrf.mxu0
  %v718 = vadd.f32 %v585, %v717
  %v719 = vpop.f32.mrf.mxu0
  %v720 = vadd.f32 %v587, %v719
  %721 = vmatmul.bf16.gmra.mxu0 %v462
  %v722 = vpop.f32.mrf.mxu0
  %v723 = vadd.f32 %v590, %v722
  %v724 = vpop.f32.mrf.mxu0
  %v725 = vadd.f32 %v592, %v724
  %726 = vmatmul.bf16.gmra.mxu0 %v465
  %v727 = vpop.f32.mrf.mxu0
  %v728 = vadd.f32 %v595, %v727
  %v729 = vpop.f32.mrf.mxu0
  %v730 = vadd.f32 %v597, %v729
  %731 = vmatmul.bf16.gmra.mxu0 %v468
  %v732 = vpop.f32.mrf.mxu0
  %v733 = vadd.f32 %v600, %v732
  %v734 = vpop.f32.mrf.mxu0
  %735 = vdwg.mxu0
  %v736 = vmax.f32 %v613, 0.0
  %v737 = vmax.f32 %v615, 0.0
  %v738 = vmax.f32 %v618, 0.0
  %v739 = vmax.f32 %v620, 0.0
  %v740 = vmax.f32 %v623, 0.0
  %v741 = vmax.f32 %v625, 0.0
  %v742 = vmax.f32 %v628, 0.0
  %v743 = vmax.f32 %v630, 0.0
  %v744 = vmax.f32 %v633, 0.0
  %v745 = vmax.f32 %v635, 0.0
  %v746 = vmax.f32 %v638, 0.0
  %v747 = vmax.f32 %v640, 0.0
  %v748 = vmax.f32 %v643, 0.0
  %v749 = vmax.f32 %v645, 0.0
  %v750 = vmax.f32 %v648, 0.0
  %v751 = vmax.f32 %v650, 0.0
  %v752 = vmax.f32 %v653, 0.0
  %v753 = vmax.f32 %v655, 0.0
  %v754 = vmax.f32 %v658, 0.0
  %v755 = vmax.f32 %v660, 0.0
  %v756 = vmax.f32 %v663, 0.0
  %v757 = vmax.f32 %v665, 0.0
  %v758 = vmax.f32 %v668, 0.0
  %v759 = vmax.f32 %v670, 0.0
  %v760 = vmax.f32 %v673, 0.0
  %v761 = vmax.f32 %v675, 0.0
  %v762 = vmax.f32 %v678, 0.0
  %v763 = vmax.f32 %v680, 0.0
  %v764 = vmax.f32 %v683, 0.0
  %v765 = vmax.f32 %v685, 0.0
  %v766 = vmax.f32 %v688, 0.0
  %v767 = vmax.f32 %v690, 0.0
  %v768 = vmax.f32 %v693, 0.0
  %v769 = vmax.f32 %v695, 0.0
  %v770 = vmax.f32 %v698, 0.0
  %v771 = vmax.f32 %v700, 0.0
  %v772 = vmax.f32 %v703, 0.0
  %v773 = vmax.f32 %v705, 0.0
  %v774 = vmax.f32 %v708, 0.0
  %v775 = vmax.f32 %v710, 0.0
  %v776 = vmax.f32 %v713, 0.0
  %v777 = vmax.f32 %v715, 0.0
  %v778 = vmax.f32 %v718, 0.0
  %v779 = vmax.f32 %v720, 0.0
  %v780 = vmax.f32 %v723, 0.0
  %v781 = vmax.f32 %v725, 0.0
  %v782 = vmax.f32 %v728, 0.0
  %v783 = vmax.f32 %v730, 0.0
  %v784 = vmax.f32 %v733, 0.0
  %785 = vst [vmem:[%s3] sm:$0xff] %v736
  %786 = vst [vmem:[%s3 + $0x8] sm:$0xff] %v737
  %787 = vst [vmem:[%s3 + $0x10] sm:$0xff] %v738
  %788 = vst [vmem:[%s3 + $0x18] sm:$0xff] %v739
  %789 = vst [vmem:[%s3 + $0x20] sm:$0xff] %v740
  %790 = vst [vmem:[%s3 + $0x28] sm:$0xff] %v741
  %791 = vst [vmem:[%s3 + $0x30] sm:$0xff] %v742
  %792 = vst [vmem:[%s3 + $0x38] sm:$0xff] %v743
  %793 = vst [vmem:[%s3 + $0x40] sm:$0xff] %v744
  %794 = vst [vmem:[%s3 + $0x48] sm:$0xff] %v745
  %795 = vst [vmem:[%s3 + $0x50] sm:$0xff] %v746
  %796 = vst [vmem:[%s3 + $0x58] sm:$0xff] %v747
  %797 = vst [vmem:[%s3 + $0x60] sm:$0xff] %v748
  %798 = vst [vmem:[%s3 + $0x68] sm:$0xff] %v749
  %799 = vst [vmem:[%s3 + $0x70] sm:$0xff] %v750
  %800 = vst [vmem:[%s3 + $0x78] sm:$0xff] %v751
  %801 = vst [vmem:[%s3 + $0x80] sm:$0xff] %v752
  %802 = vst [vmem:[%s3 + $0x88] sm:$0xff] %v753
  %803 = vst [vmem:[%s3 + $0x90] sm:$0xff] %v754
  %804 = vst [vmem:[%s3 + $0x98] sm:$0xff] %v755
  %805 = vst [vmem:[%s3 + $0xa0] sm:$0xff] %v756
  %806 = vst [vmem:[%s3 + $0xa8] sm:$0xff] %v757
  %807 = vst [vmem:[%s3 + $0xb0] sm:$0xff] %v758
  %808 = vst [vmem:[%s3 + $0xb8] sm:$0xff] %v759
  %809 = vst [vmem:[%s3 + $0xc0] sm:$0xff] %v760
  %810 = vst [vmem:[%s3 + $0xc8] sm:$0xff] %v761
  %811 = vst [vmem:[%s3 + $0xd0] sm:$0xff] %v762
  %812 = vst [vmem:[%s3 + $0xd8] sm:$0xff] %v763
  %813 = vst [vmem:[%s3 + $0xe0] sm:$0xff] %v764
  %814 = vst [vmem:[%s3 + $0xe8] sm:$0xff] %v765
  %815 = vst [vmem:[%s3 + $0xf0] sm:$0xff] %v766
  %816 = vst [vmem:[%s3 + $0xf8] sm:$0xff] %v767
  %817 = vst [vmem:[%s3 + $0x100] sm:$0xff] %v768
  %818 = vst [vmem:[%s3 + $0x108] sm:$0xff] %v769
  %819 = vst [vmem:[%s3 + $0x110] sm:$0xff] %v770
  %820 = vst [vmem:[%s3 + $0x118] sm:$0xff] %v771
  %821 = vst [vmem:[%s3 + $0x120] sm:$0xff] %v772
  %822 = vst [vmem:[%s3 + $0x128] sm:$0xff] %v773
  %823 = vst [vmem:[%s3 + $0x130] sm:$0xff] %v774
  %824 = vst [vmem:[%s3 + $0x138] sm:$0xff] %v775
  %825 = vst [vmem:[%s3 + $0x140] sm:$0xff] %v776
  %826 = vst [vmem:[%s3 + $0x148] sm:$0xff] %v777
  %827 = vst [vmem:[%s3 + $0x150] sm:$0xff] %v778
  %828 = vst [vmem:[%s3 + $0x158] sm:$0xff] %v779
  %829 = vst [vmem:[%s3 + $0x160] sm:$0xff] %v780
  %830 = vst [vmem:[%s3 + $0x168] sm:$0xff] %v781
  %831 = vst [vmem:[%s3 + $0x170] sm:$0xff] %v782
  %832 = vst [vmem:[%s3 + $0x178] sm:$0xff] %v783
  %833 = vst [vmem:[%s3 + $0x180] sm:$0xff] %v784
  // Predicated region
  $region14: #{vae_forward.10} parent=0 // pred_check
    _
  $region15: #{vae_forward.10} parent=0 // pred_check_branch
    %835 = sbr.rel (0) target = $region17
  $region16: #{vae_forward.10} parent=0 // pred_region
    _
  $region17: #{vae_forward.10} parent=0 // pred_fallthru
    _
  // Predicated region
  $region18: #{vae_forward.10} parent=0 // pred_check
    _
  $region19: #{vae_forward.10} parent=0 // pred_check_branch
    %837 = sbr.rel (0) target = $region21
  $region20: #{vae_forward.10} parent=0 // pred_region
    _
  $region21: #{vae_forward.10} parent=0 // pred_fallthru
    _

// kernel: vae_forward.11
$region0: #{vae_forward.11}
  #allocation0 [shape = 'u32[]', space=smem, size = 0x4, offset = 0x4, fixed_abs, tag = 'smem constant byte address 0x4 - core index']
  #allocation1 [shape = 'u32[72,128]{1,0:T(1,128)}', space=vmem, size = 0x9000, scoped, tag = 'internal scratch']
  %s0 = inlined_call_operand.vmem [shape: bf16[72,400], index: 0, kind: input, shape index: {}]
  %s1 = inlined_call_operand.vmem [shape: bf16[400,128], index: 1, kind: input, shape index: {}]
  %s2 = inlined_call_operand.vmem [shape: f32[1,128], index: 2, kind: input, shape index: {}]
  %s3 = inlined_call_operand.vmem [shape: f32[72,128], index: 3, kind: output, shape index: {}]
  %s4 = sld [smem:[#allocation0]]
  $region22: #{vae_forward.11} parent=0
    _
  %s6 = ssub.s32 1, %s4
  %s7 = scalar_select 0, %s6, %s4
  // Predicated region
  $region2: #{vae_forward.11} parent=0 // pred_check
    _
  $region3: #{vae_forward.11} parent=0 // pred_check_branch
    %9 = sbr.rel (0) target = $region5
  $region4: #{vae_forward.11} parent=0 // pred_region
    _
  $region5: #{vae_forward.11} parent=0 // pred_fallthru
    _
  // Predicated region
  $region6: #{vae_forward.11} parent=0 // pred_check
    _
  $region7: #{vae_forward.11} parent=0 // pred_check_branch
    %11 = sbr.rel (0) target = $region9
  $region8: #{vae_forward.11} parent=0 // pred_region
    _
  $region9: #{vae_forward.11} parent=0 // pred_fallthru
    _
  // Predicated region
  $region10: #{vae_forward.11} parent=0 // pred_check
    _
  $region11: #{vae_forward.11} parent=0 // pred_check_branch
    %13 = sbr.rel (0) target = $region13
  $region12: #{vae_forward.11} parent=0 // pred_region
    _
  $region13: #{vae_forward.11} parent=0 // pred_fallthru
    _
  %v15 = vld [vmem:[%s0] sm:$0xff]
  %v16 = vld [vmem:[%s0 + $0x8] sm:$0xff]
  %v17 = vld [vmem:[%s0 + $0x10] sm:$0xff]
  %v18 = vld [vmem:[%s0 + $0x18] sm:$0xff]
  %v19 = vld [vmem:[%s0 + $0x20] sm:$0xff]
  %v20 = vld [vmem:[%s0 + $0x28] sm:$0xff]
  %v21 = vld [vmem:[%s0 + $0x30] sm:$0xff]
  %v22 = vld [vmem:[%s0 + $0x38] sm:$0xff]
  %v23 = vld [vmem:[%s0 + $0x40] sm:$0xff]
  %v24 = vld [vmem:[%s0 + $0x48] sm:$0xff]
  %v25 = vld [vmem:[%s0 + $0x50] sm:$0xff]
  %v26 = vld [vmem:[%s0 + $0x58] sm:$0xff]
  %v27 = vld [vmem:[%s0 + $0x60] sm:$0xff]
  %v28 = vld [vmem:[%s0 + $0x68] sm:$0xff]
  %v29 = vld [vmem:[%s0 + $0x70] sm:$0xff]
  %v30 = vld [vmem:[%s0 + $0x78] sm:$0xff]
  %v31 = vld [vmem:[%s0 + $0x80] sm:$0xff]
  %v32 = vld [vmem:[%s0 + $0x88] sm:$0xff]
  %v33 = vld [vmem:[%s1] sm:$0xf]
  %v34 = vld [vmem:[%s1 + $0x4] sm:$0xf]
  %v35 = vld [vmem:[%s1 + $0x8] sm:$0xf]
  %v36 = vld [vmem:[%s1 + $0xc] sm:$0xf]
  %v37 = vld [vmem:[%s1 + $0x10] sm:$0xf]
  %v38 = vld [vmem:[%s1 + $0x14] sm:$0xf]
  %v39 = vld [vmem:[%s1 + $0x18] sm:$0xf]
  %v40 = vld [vmem:[%s1 + $0x1c] sm:$0xf]
  %v41 = vld [vmem:[%s1 + $0x20] sm:$0xf]
  %v42 = vld [vmem:[%s1 + $0x24] sm:$0xf]
  %v43 = vld [vmem:[%s1 + $0x28] sm:$0xf]
  %v44 = vld [vmem:[%s1 + $0x2c] sm:$0xf]
  %v45 = vld [vmem:[%s1 + $0x30] sm:$0xf]
  %v46 = vld [vmem:[%s1 + $0x34] sm:$0xf]
  %v47 = vld [vmem:[%s1 + $0x38] sm:$0xf]
  %v48 = vld [vmem:[%s1 + $0x3c] sm:$0xf]
  %v49 = vld [vmem:[%s1 + $0x40] sm:$0xf]
  %v50 = vld [vmem:[%s1 + $0x44] sm:$0xf]
  %v51 = vld [vmem:[%s1 + $0x48] sm:$0xf]
  %v52 = vld [vmem:[%s1 + $0x4c] sm:$0xf]
  %v53 = vld [vmem:[%s1 + $0x50] sm:$0xf]
  %v54 = vld [vmem:[%s1 + $0x54] sm:$0xf]
  %v55 = vld [vmem:[%s1 + $0x58] sm:$0xf]
  %v56 = vld [vmem:[%s1 + $0x5c] sm:$0xf]
  %v57 = vld [vmem:[%s1 + $0x60] sm:$0xf]
  %v58 = vld [vmem:[%s1 + $0x64] sm:$0xf]
  %v59 = vld [vmem:[%s1 + $0x68] sm:$0xf]
  %v60 = vld [vmem:[%s1 + $0x6c] sm:$0xf]
  %v61 = vld [vmem:[%s1 + $0x70] sm:$0xf]
  %v62 = vld [vmem:[%s1 + $0x74] sm:$0xf]
  %v63 = vld [vmem:[%s1 + $0x78] sm:$0xf]
  %v64 = vld [vmem:[%s1 + $0x7c] sm:$0xf]
  %v65 = vld [vmem:[%s1 + $0x80] sm:$0xf]
  %v66 = vld [vmem:[%s1 + $0x84] sm:$0xf]
  %v67 = vld [vmem:[%s1 + $0x88] sm:$0xf]
  %v68 = vld [vmem:[%s1 + $0x8c] sm:$0xf]
  %v69 = vld [vmem:[%s1 + $0x90] sm:$0xf]
  %v70 = vld [vmem:[%s1 + $0x94] sm:$0xf]
  %v71 = vld [vmem:[%s1 + $0x98] sm:$0xf]
  %v72 = vld [vmem:[%s1 + $0x9c] sm:$0xf]
  %v73 = vld [vmem:[%s1 + $0xa0] sm:$0xf]
  %v74 = vld [vmem:[%s1 + $0xa4] sm:$0xf]
  %v75 = vld [vmem:[%s1 + $0xa8] sm:$0xf]
  %v76 = vld [vmem:[%s1 + $0xac] sm:$0xf]
  %v77 = vld [vmem:[%s1 + $0xb0] sm:$0xf]
  %v78 = vld [vmem:[%s1 + $0xb4] sm:$0xf]
  %v79 = vld [vmem:[%s1 + $0xb8] sm:$0xf]
  %v80 = vld [vmem:[%s1 + $0xbc] sm:$0xf]
  %v81 = vld [vmem:[%s1 + $0xc0] sm:$0xf]
  %v82 = vld [vmem:[%s1 + $0xc4] sm:$0xf]
  %v83 = vld [vmem:[%s2] sm:$0x1]
  %v85 = vperm.slane %v83, 0
  %v105 = vunpack.c.l.b16 %v15
  %v106 = vunpack.c.h.b16 %v15
  %v107 = vunpack.c.l.b16 %v16
  %v108 = vunpack.c.h.b16 %v16
  %v109 = vunpack.c.l.b16 %v17
  %v110 = vunpack.c.h.b16 %v17
  %v111 = vunpack.c.l.b16 %v18
  %v112 = vunpack.c.h.b16 %v18
  %v113 = vunpack.c.l.b16 %v19
  %v114 = vunpack.c.h.b16 %v19
  %v115 = vunpack.c.l.b16 %v20
  %v116 = vunpack.c.h.b16 %v20
  %v117 = vunpack.c.l.b16 %v21
  %v118 = vunpack.c.h.b16 %v21
  %v119 = vunpack.c.l.b16 %v22
  %v120 = vunpack.c.h.b16 %v22
  %v121 = vunpack.c.l.b16 %v23
  %v122 = vunpack.c.h.b16 %v23
  %v123 = vunpack.c.l.b16 %v24
  %v124 = vunpack.c.h.b16 %v24
  %v125 = vunpack.c.l.b16 %v25
  %v126 = vunpack.c.h.b16 %v25
  %v127 = vunpack.c.l.b16 %v26
  %v128 = vunpack.c.h.b16 %v26
  %v129 = vunpack.c.l.b16 %v27
  %v130 = vunpack.c.h.b16 %v27
  %v131 = vunpack.c.l.b16 %v28
  %v132 = vunpack.c.h.b16 %v28
  %v133 = vunpack.c.l.b16 %v29
  %v134 = vunpack.c.h.b16 %v29
  %v135 = vunpack.c.l.b16 %v30
  %v136 = vunpack.c.h.b16 %v30
  %v137 = vunpack.c.l.b16 %v31
  %v138 = vunpack.c.h.b16 %v31
  %v139 = vunpack.c.l.b16 %v32
  %v140 = vunpack.c.h.b16 %v32
  %v141 = vpack.c.b16 %v109, %v105
  %v142 = vpack.c.b16 %v110, %v106
  %v143 = vpack.c.b16 %v111, %v107
  %v144 = vpack.c.b16 %v112, %v108
  %v145 = vpack.c.b16 %v117, %v113
  %v146 = vpack.c.b16 %v118, %v114
  %v147 = vpack.c.b16 %v119, %v115
  %v148 = vpack.c.b16 %v120, %v116
  %v149 = vpack.c.b16 %v125, %v121
  %v150 = vpack.c.b16 %v126, %v122
  %v151 = vpack.c.b16 %v127, %v123
  %v152 = vpack.c.b16 %v128, %v124
  %v153 = vpack.c.b16 %v133, %v129
  %v154 = vpack.c.b16 %v134, %v130
  %v155 = vpack.c.b16 %v135, %v131
  %v156 = vpack.c.b16 %v136, %v132
  %v157 = vpack.c.b16 %v137, %v137
  %v158 = vpack.c.b16 %v138, %v138
  %v159 = vpack.c.b16 %v139, %v139
  %v160 = vpack.c.b16 %v140, %v140
  %v226 = vunpack.c.l.b16 %v33
  %v227 = vunpack.c.l.b16 %v34
  %v228 = vunpack.c.l.b16 %v35
  %v229 = vunpack.c.l.b16 %v36
  %v230 = vunpack.c.l.b16 %v37
  %v231 = vunpack.c.l.b16 %v38
  %v232 = vunpack.c.l.b16 %v39
  %v233 = vunpack.c.l.b16 %v40
  %v234 = vunpack.c.l.b16 %v41
  %v235 = vunpack.c.l.b16 %v42
  %v236 = vunpack.c.l.b16 %v43
  %v237 = vunpack.c.l.b16 %v44
  %v238 = vunpack.c.l.b16 %v45
  %v239 = vunpack.c.l.b16 %v46
  %v240 = vunpack.c.l.b16 %v47
  %v241 = vunpack.c.l.b16 %v48
  %v242 = vunpack.c.l.b16 %v49
  %v243 = vunpack.c.l.b16 %v50
  %v244 = vunpack.c.l.b16 %v51
  %v245 = vunpack.c.l.b16 %v52
  %v246 = vunpack.c.l.b16 %v53
  %v247 = vunpack.c.l.b16 %v54
  %v248 = vunpack.c.l.b16 %v55
  %v249 = vunpack.c.l.b16 %v56
  %v250 = vunpack.c.l.b16 %v57
  %v251 = vunpack.c.l.b16 %v58
  %v252 = vunpack.c.l.b16 %v59
  %v253 = vunpack.c.l.b16 %v60
  %v254 = vunpack.c.l.b16 %v61
  %v255 = vunpack.c.l.b16 %v62
  %v256 = vunpack.c.l.b16 %v63
  %v257 = vunpack.c.l.b16 %v64
  %v258 = vunpack.c.l.b16 %v65
  %v259 = vunpack.c.l.b16 %v66
  %v260 = vunpack.c.l.b16 %v67
  %v261 = vunpack.c.l.b16 %v68
  %v262 = vunpack.c.l.b16 %v69
  %v263 = vunpack.c.l.b16 %v70
  %v264 = vunpack.c.l.b16 %v71
  %v265 = vunpack.c.l.b16 %v72
  %v266 = vunpack.c.l.b16 %v73
  %v267 = vunpack.c.l.b16 %v74
  %v268 = vunpack.c.l.b16 %v75
  %v269 = vunpack.c.l.b16 %v76
  %v270 = vunpack.c.l.b16 %v77
  %v271 = vunpack.c.l.b16 %v78
  %v272 = vunpack.c.l.b16 %v79
  %v273 = vunpack.c.l.b16 %v80
  %v274 = vunpack.c.l.b16 %v81
  %v275 = vunpack.c.l.b16 %v82
  %v276 = vpack.c.b16 %v227, %v226
  %v277 = vpack.c.b16 %v229, %v228
  %v278 = vpack.c.b16 %v231, %v230
  %v279 = vpack.c.b16 %v233, %v232
  %v280 = vpack.c.b16 %v235, %v234
  %v281 = vpack.c.b16 %v237, %v236
  %v282 = vpack.c.b16 %v239, %v238
  %v283 = vpack.c.b16 %v241, %v240
  %v284 = vpack.c.b16 %v243, %v242
  %v285 = vpack.c.b16 %v245, %v244
  %v286 = vpack.c.b16 %v247, %v246
  %v287 = vpack.c.b16 %v249, %v248
  %v288 = vpack.c.b16 %v251, %v250
  %v289 = vpack.c.b16 %v253, %v252
  %v290 = vpack.c.b16 %v255, %v254
  %v291 = vpack.c.b16 %v257, %v256
  %v292 = vpack.c.b16 %v259, %v258
  %v293 = vpack.c.b16 %v261, %v260
  %v294 = vpack.c.b16 %v263, %v262
  %v295 = vpack.c.b16 %v265, %v264
  %v296 = vpack.c.b16 %v267, %v266
  %v297 = vpack.c.b16 %v269, %v268
  %v298 = vpack.c.b16 %v271, %v270
  %v299 = vpack.c.b16 %v273, %v272
  %v300 = vpack.c.b16 %v275, %v274
  %vm326 = vcmask 130048
  %v328 = vsel %vm326, %v144, 0
  %v331 = vsel %vm326, %v148, 0
  %v334 = vsel %vm326, %v152, 0
  %v337 = vsel %vm326, %v156, 0
  %v340 = vsel %vm326, %v160, 0
  %342 = vmatpush.bf16.msra.mxu0 %v283
  %343 = vmatpush.bf16.msra.mxu0 %v282
  %344 = vmatpush.bf16.msra.mxu0 %v281
  %345 = vmatpush.bf16.msra.mxu0 %v280
  %346 = vmatpush.bf16.msra.mxu0 %v279
  %347 = vmatpush.bf16.msra.mxu0 %v278
  %348 = vmatpush.bf16.msra.mxu0 %v277
  %349 = vmatpush.bf16.msra.mxu0 %v276
  %350 = vmatmul.bf16.gmra.mxu0 %v141
  %v351 = vpop.f32.mrf.mxu0
  %v352 = vadd.f32 %v85, %v351
  %v353 = vpop.f32.mrf.mxu0
  %v354 = vadd.f32 %v85, %v353
  %355 = vmatmul.bf16.gmra.mxu0 %v145
  %v356 = vpop.f32.mrf.mxu0
  %v357 = vadd.f32 %v85, %v356
  %v358 = vpop.f32.mrf.mxu0
  %v359 = vadd.f32 %v85, %v358
  %360 = vmatmul.bf16.gmra.mxu0 %v149
  %v361 = vpop.f32.mrf.mxu0
  %v362 = vadd.f32 %v85, %v361
  %v363 = vpop.f32.mrf.mxu0
  %v364 = vadd.f32 %v85, %v363
  %365 = vmatmul.bf16.gmra.mxu0 %v153
  %v366 = vpop.f32.mrf.mxu0
  %v367 = vadd.f32 %v85, %v366
  %v368 = vpop.f32.mrf.mxu0
  %v369 = vadd.f32 %v85, %v368
  %370 = vmatmul.bf16.gmra.mxu0 %v157
  %v371 = vpop.f32.mrf.mxu0
  %v372 = vadd.f32 %v85, %v371
  %v373 = vpop.f32.mrf.mxu0
  %374 = vdwg.mxu0
  %375 = vmatpush.bf16.msra.mxu0 %v291
  %376 = vmatpush.bf16.msra.mxu0 %v290
  %377 = vmatpush.bf16.msra.mxu0 %v289
  %378 = vmatpush.bf16.msra.mxu0 %v288
  %379 = vmatpush.bf16.msra.mxu0 %v287
  %380 = vmatpush.bf16.msra.mxu0 %v286
  %381 = vmatpush.bf16.msra.mxu0 %v285
  %382 = vmatpush.bf16.msra.mxu0 %v284
  %383 = vmatmul.bf16.gmra.mxu0 %v142
  %v384 = vpop.f32.mrf.mxu0
  %v385 = vadd.f32 %v352, %v384
  %v386 = vpop.f32.mrf.mxu0
  %v387 = vadd.f32 %v354, %v386
  %388 = vmatmul.bf16.gmra.mxu0 %v146
  %v389 = vpop.f32.mrf.mxu0
  %v390 = vadd.f32 %v357, %v389
  %v391 = vpop.f32.mrf.mxu0
  %v392 = vadd.f32 %v359, %v391
  %393 = vmatmul.bf16.gmra.mxu0 %v150
  %v394 = vpop.f32.mrf.mxu0
  %v395 = vadd.f32 %v362, %v394
  %v396 = vpop.f32.mrf.mxu0
  %v397 = vadd.f32 %v364, %v396
  %398 = vmatmul.bf16.gmra.mxu0 %v154
  %v399 = vpop.f32.mrf.mxu0
  %v400 = vadd.f32 %v367, %v399
  %v401 = vpop.f32.mrf.mxu0
  %v402 = vadd.f32 %v369, %v401
  %403 = vmatmul.bf16.gmra.mxu0 %v158
  %v404 = vpop.f32.mrf.mxu0
  %v405 = vadd.f32 %v372, %v404
  %v406 = vpop.f32.mrf.mxu0
  %407 = vdwg.mxu0
  %408 = vmatpush.bf16.msra.mxu0 %v299
  %409 = vmatpush.bf16.msra.mxu0 %v298
  %410 = vmatpush.bf16.msra.mxu0 %v297
  %411 = vmatpush.bf16.msra.mxu0 %v296
  %412 = vmatpush.bf16.msra.mxu0 %v295
  %413 = vmatpush.bf16.msra.mxu0 %v294
  %414 = vmatpush.bf16.msra.mxu0 %v293
  %415 = vmatpush.bf16.msra.mxu0 %v292
  %416 = vmatmul.bf16.gmra.mxu0 %v143
  %v417 = vpop.f32.mrf.mxu0
  %v418 = vadd.f32 %v385, %v417
  %v419 = vpop.f32.mrf.mxu0
  %v420 = vadd.f32 %v387, %v419
  %421 = vmatmul.bf16.gmra.mxu0 %v147
  %v422 = vpop.f32.mrf.mxu0
  %v423 = vadd.f32 %v390, %v422
  %v424 = vpop.f32.mrf.mxu0
  %v425 = vadd.f32 %v392, %v424
  %426 = vmatmul.bf16.gmra.mxu0 %v151
  %v427 = vpop.f32.mrf.mxu0
  %v428 = vadd.f32 %v395, %v427
  %v429 = vpop.f32.mrf.mxu0
  %v430 = vadd.f32 %v397, %v429
  %431 = vmatmul.bf16.gmra.mxu0 %v155
  %v432 = vpop.f32.mrf.mxu0
  %v433 = vadd.f32 %v400, %v432
  %v434 = vpop.f32.mrf.mxu0
  %v435 = vadd.f32 %v402, %v434
  %436 = vmatmul.bf16.gmra.mxu0 %v159
  %v437 = vpop.f32.mrf.mxu0
  %v438 = vadd.f32 %v405, %v437
  %v439 = vpop.f32.mrf.mxu0
  %440 = vdwg.mxu0
  %441 = vmatpush.bf16.msra.mxu0 0
  %442 = vmatpush.bf16.msra.mxu0 0
  %443 = vmatpush.bf16.msra.mxu0 0
  %444 = vmatpush.bf16.msra.mxu0 0
  %445 = vmatpush.bf16.msra.mxu0 0
  %446 = vmatpush.bf16.msra.mxu0 0
  %447 = vmatpush.bf16.msra.mxu0 0
  %448 = vmatpush.bf16.msra.mxu0 %v300
  %449 = vmatmul.bf16.gmra.mxu0 %v328
  %v450 = vpop.f32.mrf.mxu0
  %v451 = vadd.f32 %v418, %v450
  %v452 = vpop.f32.mrf.mxu0
  %v453 = vadd.f32 %v420, %v452
  %454 = vmatmul.bf16.gmra.mxu0 %v331
  %v455 = vpop.f32.mrf.mxu0
  %v456 = vadd.f32 %v423, %v455
  %v457 = vpop.f32.mrf.mxu0
  %v458 = vadd.f32 %v425, %v457
  %459 = vmatmul.bf16.gmra.mxu0 %v334
  %v460 = vpop.f32.mrf.mxu0
  %v461 = vadd.f32 %v428, %v460
  %v462 = vpop.f32.mrf.mxu0
  %v463 = vadd.f32 %v430, %v462
  %464 = vmatmul.bf16.gmra.mxu0 %v337
  %v465 = vpop.f32.mrf.mxu0
  %v466 = vadd.f32 %v433, %v465
  %v467 = vpop.f32.mrf.mxu0
  %v468 = vadd.f32 %v435, %v467
  %469 = vmatmul.bf16.gmra.mxu0 %v340
  %v470 = vpop.f32.mrf.mxu0
  %v471 = vadd.f32 %v438, %v470
  %v472 = vpop.f32.mrf.mxu0
  %473 = vdwg.mxu0
  %v474 = vmax.f32 %v451, 0.0
  %v475 = vmax.f32 %v453, 0.0
  %v476 = vmax.f32 %v456, 0.0
  %v477 = vmax.f32 %v458, 0.0
  %v478 = vmax.f32 %v461, 0.0
  %v479 = vmax.f32 %v463, 0.0
  %v480 = vmax.f32 %v466, 0.0
  %v481 = vmax.f32 %v468, 0.0
  %v482 = vmax.f32 %v471, 0.0
  %483 = vst [vmem:[%s3] sm:$0xff] %v474
  %484 = vst [vmem:[%s3 + $0x8] sm:$0xff] %v475
  %485 = vst [vmem:[%s3 + $0x10] sm:$0xff] %v476
  %486 = vst [vmem:[%s3 + $0x18] sm:$0xff] %v477
  %487 = vst [vmem:[%s3 + $0x20] sm:$0xff] %v478
  %488 = vst [vmem:[%s3 + $0x28] sm:$0xff] %v479
  %489 = vst [vmem:[%s3 + $0x30] sm:$0xff] %v480
  %490 = vst [vmem:[%s3 + $0x38] sm:$0xff] %v481
  %491 = vst [vmem:[%s3 + $0x40] sm:$0xff] %v482
  // Predicated region
  $region14: #{vae_forward.11} parent=0 // pred_check
    _
  $region15: #{vae_forward.11} parent=0 // pred_check_branch
    %493 = sbr.rel (0) target = $region17
  $region16: #{vae_forward.11} parent=0 // pred_region
    _
  $region17: #{vae_forward.11} parent=0 // pred_fallthru
    _
  // Predicated region
  $region18: #{vae_forward.11} parent=0 // pred_check
    _
  $region19: #{vae_forward.11} parent=0 // pred_check_branch
    %495 = sbr.rel (0) target = $region21
  $region20: #{vae_forward.11} parent=0 // pred_region
    _
  $region21: #{vae_forward.11} parent=0 // pred_fallthru
    _

// kernel: vae_forward.12
$region0: #{vae_forward.12}
  #allocation0 [shape = 'u32[]', space=smem, size = 0x4, offset = 0x4, fixed_abs, tag = 'smem constant byte address 0x4 - core index']
  #allocation1 [shape = 'u32[72,128]{1,0:T(1,128)}', space=vmem, size = 0x9000, scoped, tag = 'internal scratch']
  %s0 = inlined_call_operand.vmem [shape: bf16[8,800], index: 0, kind: input, shape index: {}]
  %s1 = inlined_call_operand.vmem [shape: bf16[800,128], index: 1, kind: input, shape index: {}]
  %s2 = inlined_call_operand.vmem [shape: f32[1,128], index: 2, kind: input, shape index: {}]
  %s3 = inlined_call_operand.vmem [shape: f32[8,128], index: 3, kind: output, shape index: {}]
  %s4 = sld [smem:[#allocation0]]
  $region22: #{vae_forward.12} parent=0
    _
  %s6 = ssub.s32 1, %s4
  %s7 = scalar_select 0, %s6, %s4
  // Predicated region
  $region2: #{vae_forward.12} parent=0 // pred_check
    _
  $region3: #{vae_forward.12} parent=0 // pred_check_branch
    %9 = sbr.rel (0) target = $region5
  $region4: #{vae_forward.12} parent=0 // pred_region
    _
  $region5: #{vae_forward.12} parent=0 // pred_fallthru
    _
  // Predicated region
  $region6: #{vae_forward.12} parent=0 // pred_check
    _
  $region7: #{vae_forward.12} parent=0 // pred_check_branch
    %11 = sbr.rel (0) target = $region9
  $region8: #{vae_forward.12} parent=0 // pred_region
    _
  $region9: #{vae_forward.12} parent=0 // pred_fallthru
    _
  // Predicated region
  $region10: #{vae_forward.12} parent=0 // pred_check
    _
  $region11: #{vae_forward.12} parent=0 // pred_check_branch
    %13 = sbr.rel (0) target = $region13
  $region12: #{vae_forward.12} parent=0 // pred_region
    _
  $region13: #{vae_forward.12} parent=0 // pred_fallthru
    _
  %v15 = vld [vmem:[%s0] sm:$0xff]
  %v16 = vld [vmem:[%s0 + $0x8] sm:$0xff]
  %v17 = vld [vmem:[%s0 + $0x10] sm:$0xff]
  %v18 = vld [vmem:[%s0 + $0x18] sm:$0xf]
  %v19 = vld [vmem:[%s1] sm:$0xf]
  %v20 = vld [vmem:[%s1 + $0x4] sm:$0xf]
  %v21 = vld [vmem:[%s1 + $0x8] sm:$0xf]
  %v22 = vld [vmem:[%s1 + $0xc] sm:$0xf]
  %v23 = vld [vmem:[%s1 + $0x10] sm:$0xf]
  %v24 = vld [vmem:[%s1 + $0x14] sm:$0xf]
  %v25 = vld [vmem:[%s1 + $0x18] sm:$0xf]
  %v26 = vld [vmem:[%s1 + $0x1c] sm:$0xf]
  %v27 = vld [vmem:[%s1 + $0x20] sm:$0xf]
  %v28 = vld [vmem:[%s1 + $0x24] sm:$0xf]
  %v29 = vld [vmem:[%s1 + $0x28] sm:$0xf]
  %v30 = vld [vmem:[%s1 + $0x2c] sm:$0xf]
  %v31 = vld [vmem:[%s1 + $0x30] sm:$0xf]
  %v32 = vld [vmem:[%s1 + $0x34] sm:$0xf]
  %v33 = vld [vmem:[%s1 + $0x38] sm:$0xf]
  %v34 = vld [vmem:[%s1 + $0x3c] sm:$0xf]
  %v35 = vld [vmem:[%s1 + $0x40] sm:$0xf]
  %v36 = vld [vmem:[%s1 + $0x44] sm:$0xf]
  %v37 = vld [vmem:[%s1 + $0x48] sm:$0xf]
  %v38 = vld [vmem:[%s1 + $0x4c] sm:$0xf]
  %v39 = vld [vmem:[%s1 + $0x50] sm:$0xf]
  %v40 = vld [vmem:[%s1 + $0x54] sm:$0xf]
  %v41 = vld [vmem:[%s1 + $0x58] sm:$0xf]
  %v42 = vld [vmem:[%s1 + $0x5c] sm:$0xf]
  %v43 = vld [vmem:[%s1 + $0x60] sm:$0xf]
  %v44 = vld [vmem:[%s1 + $0x64] sm:$0xf]
  %v45 = vld [vmem:[%s1 + $0x68] sm:$0xf]
  %v46 = vld [vmem:[%s1 + $0x6c] sm:$0xf]
  %v47 = vld [vmem:[%s1 + $0x70] sm:$0xf]
  %v48 = vld [vmem:[%s1 + $0x74] sm:$0xf]
  %v49 = vld [vmem:[%s1 + $0x78] sm:$0xf]
  %v50 = vld [vmem:[%s1 + $0x7c] sm:$0xf]
  %v51 = vld [vmem:[%s1 + $0x80] sm:$0xf]
  %v52 = vld [vmem:[%s1 + $0x84] sm:$0xf]
  %v53 = vld [vmem:[%s1 + $0x88] sm:$0xf]
  %v54 = vld [vmem:[%s1 + $0x8c] sm:$0xf]
  %v55 = vld [vmem:[%s1 + $0x90] sm:$0xf]
  %v56 = vld [vmem:[%s1 + $0x94] sm:$0xf]
  %v57 = vld [vmem:[%s1 + $0x98] sm:$0xf]
  %v58 = vld [vmem:[%s1 + $0x9c] sm:$0xf]
  %v59 = vld [vmem:[%s1 + $0xa0] sm:$0xf]
  %v60 = vld [vmem:[%s1 + $0xa4] sm:$0xf]
  %v61 = vld [vmem:[%s1 + $0xa8] sm:$0xf]
  %v62 = vld [vmem:[%s1 + $0xac] sm:$0xf]
  %v63 = vld [vmem:[%s1 + $0xb0] sm:$0xf]
  %v64 = vld [vmem:[%s1 + $0xb4] sm:$0xf]
  %v65 = vld [vmem:[%s1 + $0xb8] sm:$0xf]
  %v66 = vld [vmem:[%s1 + $0xbc] sm:$0xf]
  %v67 = vld [vmem:[%s1 + $0xc0] sm:$0xf]
  %v68 = vld [vmem:[%s1 + $0xc4] sm:$0xf]
  %v69 = vld [vmem:[%s1 + $0xc8] sm:$0xf]
  %v70 = vld [vmem:[%s1 + $0xcc] sm:$0xf]
  %v71 = vld [vmem:[%s1 + $0xd0] sm:$0xf]
  %v72 = vld [vmem:[%s1 + $0xd4] sm:$0xf]
  %v73 = vld [vmem:[%s1 + $0xd8] sm:$0xf]
  %v74 = vld [vmem:[%s1 + $0xdc] sm:$0xf]
  %v75 = vld [vmem:[%s1 + $0xe0] sm:$0xf]
  %v76 = vld [vmem:[%s1 + $0xe4] sm:$0xf]
  %v77 = vld [vmem:[%s1 + $0xe8] sm:$0xf]
  %v78 = vld [vmem:[%s1 + $0xec] sm:$0xf]
  %v79 = vld [vmem:[%s1 + $0xf0] sm:$0xf]
  %v80 = vld [vmem:[%s1 + $0xf4] sm:$0xf]
  %v81 = vld [vmem:[%s1 + $0xf8] sm:$0xf]
  %v82 = vld [vmem:[%s1 + $0xfc] sm:$0xf]
  %v83 = vld [vmem:[%s1 + $0x100] sm:$0xf]
  %v84 = vld [vmem:[%s1 + $0x104] sm:$0xf]
  %v85 = vld [vmem:[%s1 + $0x108] sm:$0xf]
  %v86 = vld [vmem:[%s1 + $0x10c] sm:$0xf]
  %v87 = vld [vmem:[%s1 + $0x110] sm:$0xf]
  %v88 = vld [vmem:[%s1 + $0x114] sm:$0xf]
  %v89 = vld [vmem:[%s1 + $0x118] sm:$0xf]
  %v90 = vld [vmem:[%s1 + $0x11c] sm:$0xf]
  %v91 = vld [vmem:[%s1 + $0x120] sm:$0xf]
  %v92 = vld [vmem:[%s1 + $0x124] sm:$0xf]
  %v93 = vld [vmem:[%s1 + $0x128] sm:$0xf]
  %v94 = vld [vmem:[%s1 + $0x12c] sm:$0xf]
  %v95 = vld [vmem:[%s1 + $0x130] sm:$0xf]
  %v96 = vld [vmem:[%s1 + $0x134] sm:$0xf]
  %v97 = vld [vmem:[%s1 + $0x138] sm:$0xf]
  %v98 = vld [vmem:[%s1 + $0x13c] sm:$0xf]
  %v99 = vld [vmem:[%s1 + $0x140] sm:$0xf]
  %v100 = vld [vmem:[%s1 + $0x144] sm:$0xf]
  %v101 = vld [vmem:[%s1 + $0x148] sm:$0xf]
  %v102 = vld [vmem:[%s1 + $0x14c] sm:$0xf]
  %v103 = vld [vmem:[%s1 + $0x150] sm:$0xf]
  %v104 = vld [vmem:[%s1 + $0x154] sm:$0xf]
  %v105 = vld [vmem:[%s1 + $0x158] sm:$0xf]
  %v106 = vld [vmem:[%s1 + $0x15c] sm:$0xf]
  %v107 = vld [vmem:[%s1 + $0x160] sm:$0xf]
  %v108 = vld [vmem:[%s1 + $0x164] sm:$0xf]
  %v109 = vld [vmem:[%s1 + $0x168] sm:$0xf]
  %v110 = vld [vmem:[%s1 + $0x16c] sm:$0xf]
  %v111 = vld [vmem:[%s1 + $0x170] sm:$0xf]
  %v112 = vld [vmem:[%s1 + $0x174] sm:$0xf]
  %v113 = vld [vmem:[%s1 + $0x178] sm:$0xf]
  %v114 = vld [vmem:[%s1 + $0x17c] sm:$0xf]
  %v115 = vld [vmem:[%s1 + $0x180] sm:$0xf]
  %v116 = vld [vmem:[%s1 + $0x184] sm:$0xf]
  %v117 = vld [vmem:[%s1 + $0x188] sm:$0xf]
  %v118 = vld [vmem:[%s1 + $0x18c] sm:$0xf]
  %v119 = vld [vmem:[%s2] sm:$0x1]
  %v121 = vperm.slane %v119, 0
  %v127 = vunpack.c.l.b16 %v15
  %v128 = vunpack.c.h.b16 %v15
  %v129 = vunpack.c.l.b16 %v16
  %v130 = vunpack.c.h.b16 %v16
  %v131 = vunpack.c.l.b16 %v17
  %v132 = vunpack.c.h.b16 %v17
  %v133 = vunpack.c.l.b16 %v18
  %v134 = vpack.c.b16 %v127, %v127
  %v135 = vpack.c.b16 %v128, %v128
  %v136 = vpack.c.b16 %v129, %v129
  %v137 = vpack.c.b16 %v130, %v130
  %v138 = vpack.c.b16 %v131, %v131
  %v139 = vpack.c.b16 %v132, %v132
  %v140 = vpack.c.b16 %v133, %v133
  %v247 = vunpack.c.l.b16 %v19
  %v248 = vunpack.c.l.b16 %v20
  %v249 = vunpack.c.l.b16 %v21
  %v250 = vunpack.c.l.b16 %v22
  %v251 = vunpack.c.l.b16 %v23
  %v252 = vunpack.c.l.b16 %v24
  %v253 = vunpack.c.l.b16 %v25
  %v254 = vunpack.c.l.b16 %v26
  %v255 = vunpack.c.l.b16 %v27
  %v256 = vunpack.c.l.b16 %v28
  %v257 = vunpack.c.l.b16 %v29
  %v258 = vunpack.c.l.b16 %v30
  %v259 = vunpack.c.l.b16 %v31
  %v260 = vunpack.c.l.b16 %v32
  %v261 = vunpack.c.l.b16 %v33
  %v262 = vunpack.c.l.b16 %v34
  %v263 = vunpack.c.l.b16 %v35
  %v264 = vunpack.c.l.b16 %v36
  %v265 = vunpack.c.l.b16 %v37
  %v266 = vunpack.c.l.b16 %v38
  %v267 = vunpack.c.l.b16 %v39
  %v268 = vunpack.c.l.b16 %v40
  %v269 = vunpack.c.l.b16 %v41
  %v270 = vunpack.c.l.b16 %v42
  %v271 = vunpack.c.l.b16 %v43
  %v272 = vunpack.c.l.b16 %v44
  %v273 = vunpack.c.l.b16 %v45
  %v274 = vunpack.c.l.b16 %v46
  %v275 = vunpack.c.l.b16 %v47
  %v276 = vunpack.c.l.b16 %v48
  %v277 = vunpack.c.l.b16 %v49
  %v278 = vunpack.c.l.b16 %v50
  %v279 = vunpack.c.l.b16 %v51
  %v280 = vunpack.c.l.b16 %v52
  %v281 = vunpack.c.l.b16 %v53
  %v282 = vunpack.c.l.b16 %v54
  %v283 = vunpack.c.l.b16 %v55
  %v284 = vunpack.c.l.b16 %v56
  %v285 = vunpack.c.l.b16 %v57
  %v286 = vunpack.c.l.b16 %v58
  %v287 = vunpack.c.l.b16 %v59
  %v288 = vunpack.c.l.b16 %v60
  %v289 = vunpack.c.l.b16 %v61
  %v290 = vunpack.c.l.b16 %v62
  %v291 = vunpack.c.l.b16 %v63
  %v292 = vunpack.c.l.b16 %v64
  %v293 = vunpack.c.l.b16 %v65
  %v294 = vunpack.c.l.b16 %v66
  %v295 = vunpack.c.l.b16 %v67
  %v296 = vunpack.c.l.b16 %v68
  %v297 = vunpack.c.l.b16 %v69
  %v298 = vunpack.c.l.b16 %v70
  %v299 = vunpack.c.l.b16 %v71
  %v300 = vunpack.c.l.b16 %v72
  %v301 = vunpack.c.l.b16 %v73
  %v302 = vunpack.c.l.b16 %v74
  %v303 = vunpack.c.l.b16 %v75
  %v304 = vunpack.c.l.b16 %v76
  %v305 = vunpack.c.l.b16 %v77
  %v306 = vunpack.c.l.b16 %v78
  %v307 = vunpack.c.l.b16 %v79
  %v308 = vunpack.c.l.b16 %v80
  %v309 = vunpack.c.l.b16 %v81
  %v310 = vunpack.c.l.b16 %v82
  %v311 = vunpack.c.l.b16 %v83
  %v312 = vunpack.c.l.b16 %v84
  %v313 = vunpack.c.l.b16 %v85
  %v314 = vunpack.c.l.b16 %v86
  %v315 = vunpack.c.l.b16 %v87
  %v316 = vunpack.c.l.b16 %v88
  %v317 = vunpack.c.l.b16 %v89
  %v318 = vunpack.c.l.b16 %v90
  %v319 = vunpack.c.l.b16 %v91
  %v320 = vunpack.c.l.b16 %v92
  %v321 = vunpack.c.l.b16 %v93
  %v322 = vunpack.c.l.b16 %v94
  %v323 = vunpack.c.l.b16 %v95
  %v324 = vunpack.c.l.b16 %v96
  %v325 = vunpack.c.l.b16 %v97
  %v326 = vunpack.c.l.b16 %v98
  %v327 = vunpack.c.l.b16 %v99
  %v328 = vunpack.c.l.b16 %v100
  %v329 = vunpack.c.l.b16 %v101
  %v330 = vunpack.c.l.b16 %v102
  %v331 = vunpack.c.l.b16 %v103
  %v332 = vunpack.c.l.b16 %v104
  %v333 = vunpack.c.l.b16 %v105
  %v334 = vunpack.c.l.b16 %v106
  %v335 = vunpack.c.l.b16 %v107
  %v336 = vunpack.c.l.b16 %v108
  %v337 = vunpack.c.l.b16 %v109
  %v338 = vunpack.c.l.b16 %v110
  %v339 = vunpack.c.l.b16 %v111
  %v340 = vunpack.c.l.b16 %v112
  %v341 = vunpack.c.l.b16 %v113
  %v342 = vunpack.c.l.b16 %v114
  %v343 = vunpack.c.l.b16 %v115
  %v344 = vunpack.c.l.b16 %v116
  %v345 = vunpack.c.l.b16 %v117
  %v346 = vunpack.c.l.b16 %v118
  %v347 = vpack.c.b16 %v248, %v247
  %v348 = vpack.c.b16 %v250, %v249
  %v349 = vpack.c.b16 %v252, %v251
  %v350 = vpack.c.b16 %v254, %v253
  %v351 = vpack.c.b16 %v256, %v255
  %v352 = vpack.c.b16 %v258, %v257
  %v353 = vpack.c.b16 %v260, %v259
  %v354 = vpack.c.b16 %v262, %v261
  %v355 = vpack.c.b16 %v264, %v263
  %v356 = vpack.c.b16 %v266, %v265
  %v357 = vpack.c.b16 %v268, %v267
  %v358 = vpack.c.b16 %v270, %v269
  %v359 = vpack.c.b16 %v272, %v271
  %v360 = vpack.c.b16 %v274, %v273
  %v361 = vpack.c.b16 %v276, %v275
  %v362 = vpack.c.b16 %v278, %v277
  %v363 = vpack.c.b16 %v280, %v279
  %v364 = vpack.c.b16 %v282, %v281
  %v365 = vpack.c.b16 %v284, %v283
  %v366 = vpack.c.b16 %v286, %v285
  %v367 = vpack.c.b16 %v288, %v287
  %v368 = vpack.c.b16 %v290, %v289
  %v369 = vpack.c.b16 %v292, %v291
  %v370 = vpack.c.b16 %v294, %v293
  %v371 = vpack.c.b16 %v296, %v295
  %v372 = vpack.c.b16 %v298, %v297
  %v373 = vpack.c.b16 %v300, %v299
  %v374 = vpack.c.b16 %v302, %v301
  %v375 = vpack.c.b16 %v304, %v303
  %v376 = vpack.c.b16 %v306, %v305
  %v377 = vpack.c.b16 %v308, %v307
  %v378 = vpack.c.b16 %v310, %v309
  %v379 = vpack.c.b16 %v312, %v311
  %v380 = vpack.c.b16 %v314, %v313
  %v381 = vpack.c.b16 %v316, %v315
  %v382 = vpack.c.b16 %v318, %v317
  %v383 = vpack.c.b16 %v320, %v319
  %v384 = vpack.c.b16 %v322, %v321
  %v385 = vpack.c.b16 %v324, %v323
  %v386 = vpack.c.b16 %v326, %v325
  %v387 = vpack.c.b16 %v328, %v327
  %v388 = vpack.c.b16 %v330, %v329
  %v389 = vpack.c.b16 %v332, %v331
  %v390 = vpack.c.b16 %v334, %v333
  %v391 = vpack.c.b16 %v336, %v335
  %v392 = vpack.c.b16 %v338, %v337
  %v393 = vpack.c.b16 %v340, %v339
  %v394 = vpack.c.b16 %v342, %v341
  %v395 = vpack.c.b16 %v344, %v343
  %v396 = vpack.c.b16 %v346, %v345
  %vm447 = vcmask 261120
  %v449 = vsel %vm447, %v140, 0
  %451 = vmatpush.bf16.msra.mxu0 %v354
  %452 = vmatpush.bf16.msra.mxu0 %v353
  %453 = vmatpush.bf16.msra.mxu0 %v352
  %454 = vmatpush.bf16.msra.mxu0 %v351
  %455 = vmatpush.bf16.msra.mxu0 %v350
  %456 = vmatpush.bf16.msra.mxu0 %v349
  %457 = vmatpush.bf16.msra.mxu0 %v348
  %458 = vmatpush.bf16.msra.mxu0 %v347
  %459 = vmatmul.bf16.gmra.mxu0 %v134
  %v460 = vpop.f32.mrf.mxu0
  %v461 = vadd.f32 %v121, %v460
  %v462 = vpop.f32.mrf.mxu0
  %463 = vdwg.mxu0
  %464 = vmatpush.bf16.msra.mxu0 %v362
  %465 = vmatpush.bf16.msra.mxu0 %v361
  %466 = vmatpush.bf16.msra.mxu0 %v360
  %467 = vmatpush.bf16.msra.mxu0 %v359
  %468 = vmatpush.bf16.msra.mxu0 %v358
  %469 = vmatpush.bf16.msra.mxu0 %v357
  %470 = vmatpush.bf16.msra.mxu0 %v356
  %471 = vmatpush.bf16.msra.mxu0 %v355
  %472 = vmatmul.bf16.gmra.mxu0 %v135
  %v473 = vpop.f32.mrf.mxu0
  %v474 = vadd.f32 %v461, %v473
  %v475 = vpop.f32.mrf.mxu0
  %476 = vdwg.mxu0
  %477 = vmatpush.bf16.msra.mxu0 %v370
  %478 = vmatpush.bf16.msra.mxu0 %v369
  %479 = vmatpush.bf16.msra.mxu0 %v368
  %480 = vmatpush.bf16.msra.mxu0 %v367
  %481 = vmatpush.bf16.msra.mxu0 %v366
  %482 = vmatpush.bf16.msra.mxu0 %v365
  %483 = vmatpush.bf16.msra.mxu0 %v364
  %484 = vmatpush.bf16.msra.mxu0 %v363
  %485 = vmatmul.bf16.gmra.mxu0 %v136
  %v486 = vpop.f32.mrf.mxu0
  %v487 = vadd.f32 %v474, %v486
  %v488 = vpop.f32.mrf.mxu0
  %489 = vdwg.mxu0
  %490 = vmatpush.bf16.msra.mxu0 %v378
  %491 = vmatpush.bf16.msra.mxu0 %v377
  %492 = vmatpush.bf16.msra.mxu0 %v376
  %493 = vmatpush.bf16.msra.mxu0 %v375
  %494 = vmatpush.bf16.msra.mxu0 %v374
  %495 = vmatpush.bf16.msra.mxu0 %v373
  %496 = vmatpush.bf16.msra.mxu0 %v372
  %497 = vmatpush.bf16.msra.mxu0 %v371
  %498 = vmatmul.bf16.gmra.mxu0 %v137
  %v499 = vpop.f32.mrf.mxu0
  %v500 = vadd.f32 %v487, %v499
  %v501 = vpop.f32.mrf.mxu0
  %502 = vdwg.mxu0
  %503 = vmatpush.bf16.msra.mxu0 %v386
  %504 = vmatpush.bf16.msra.mxu0 %v385
  %505 = vmatpush.bf16.msra.mxu0 %v384
  %506 = vmatpush.bf16.msra.mxu0 %v383
  %507 = vmatpush.bf16.msra.mxu0 %v382
  %508 = vmatpush.bf16.msra.mxu0 %v381
  %509 = vmatpush.bf16.msra.mxu0 %v380
  %510 = vmatpush.bf16.msra.mxu0 %v379
  %511 = vmatmul.bf16.gmra.mxu0 %v138
  %v512 = vpop.f32.mrf.mxu0
  %v513 = vadd.f32 %v500, %v512
  %v514 = vpop.f32.mrf.mxu0
  %515 = vdwg.mxu0
  %516 = vmatpush.bf16.msra.mxu0 %v394
  %517 = vmatpush.bf16.msra.mxu0 %v393
  %518 = vmatpush.bf16.msra.mxu0 %v392
  %519 = vmatpush.bf16.msra.mxu0 %v391
  %520 = vmatpush.bf16.msra.mxu0 %v390
  %521 = vmatpush.bf16.msra.mxu0 %v389
  %522 = vmatpush.bf16.msra.mxu0 %v388
  %523 = vmatpush.bf16.msra.mxu0 %v387
  %524 = vmatmul.bf16.gmra.mxu0 %v139
  %v525 = vpop.f32.mrf.mxu0
  %v526 = vadd.f32 %v513, %v525
  %v527 = vpop.f32.mrf.mxu0
  %528 = vdwg.mxu0
  %529 = vmatpush.bf16.msra.mxu0 0
  %530 = vmatpush.bf16.msra.mxu0 0
  %531 = vmatpush.bf16.msra.mxu0 0
  %532 = vmatpush.bf16.msra.mxu0 0
  %533 = vmatpush.bf16.msra.mxu0 0
  %534 = vmatpush.bf16.msra.mxu0 0
  %535 = vmatpush.bf16.msra.mxu0 %v396
  %536 = vmatpush.bf16.msra.mxu0 %v395
  %537 = vmatmul.bf16.gmra.mxu0 %v449
  %v538 = vpop.f32.mrf.mxu0
  %v539 = vadd.f32 %v526, %v538
  %v540 = vpop.f32.mrf.mxu0
  %541 = vdwg.mxu0
  %v542 = vmax.f32 %v539, 0.0
  %543 = vst [vmem:[%s3] sm:$0xff] %v542
  // Predicated region
  $region14: #{vae_forward.12} parent=0 // pred_check
    _
  $region15: #{vae_forward.12} parent=0 // pred_check_branch
    %545 = sbr.rel (0) target = $region17
  $region16: #{vae_forward.12} parent=0 // pred_region
    _
  $region17: #{vae_forward.12} parent=0 // pred_fallthru
    _
  // Predicated region
  $region18: #{vae_forward.12} parent=0 // pred_check
    _
  $region19: #{vae_forward.12} parent=0 // pred_check_branch
    %547 = sbr.rel (0) target = $region21
  $region20: #{vae_forward.12} parent=0 // pred_region
    _
  $region21: #{vae_forward.12} parent=0 // pred_fallthru
    _

// kernel: vae_forward.13
$region0: #{vae_forward.13}
  #allocation0 [shape = 'u32[]', space=smem, size = 0x4, offset = 0x4, fixed_abs, tag = 'smem constant byte address 0x4 - core index']
  #allocation1 [shape = 'u32[72,128]{1,0:T(1,128)}', space=vmem, size = 0x9000, scoped, tag = 'internal scratch']
  %s0 = inlined_call_operand.vmem [shape: f32[2,256], index: 0, kind: input, shape index: {}]
  %s1 = inlined_call_operand.vmem [shape: f32[256,32], index: 1, kind: input, shape index: {}]
  %s2 = inlined_call_operand.vmem [shape: f32[1,32], index: 2, kind: input, shape index: {}]
  %s3 = inlined_call_operand.vmem [shape: f32[256,32], index: 3, kind: input, shape index: {}]
  %s4 = inlined_call_operand.vmem [shape: f32[1,32], index: 4, kind: input, shape index: {}]
  %s5 = inlined_call_operand.vmem [shape: f32[2,32], index: 5, kind: input, shape index: {}]
  %s6 = inlined_call_operand.vmem [shape: f32[32,256], index: 6, kind: input, shape index: {}]
  %s7 = inlined_call_operand.vmem [shape: f32[1,256], index: 7, kind: input, shape index: {}]
  %s8 = inlined_call_operand.hbm [shape: f32[2,32], index: 8, kind: output, shape index: {0}]
  %s9 = inlined_call_operand.hbm [shape: f32[2,32], index: 9, kind: output, shape index: {1}]
  %s10 = inlined_call_operand.hbm [shape: f32[2,32], index: 10, kind: output, shape index: {2}]
  %s11 = inlined_call_operand.vmem [shape: f32[2,256], index: 11, kind: output, shape index: {3}]
  %12 = xla_tuple %s8, %s9, %s10, %s11
  %s13 = sld [smem:[#allocation0]]
  $region66: #{vae_forward.13} parent=0
    _
  %s15 = ssub.s32 1, %s13
  %s16 = scalar_select 0, %s15, %s13
  $region1: #{vae_forward.13} parent=0
    #allocation2 [shape = 'u8[1024]{0}', space=vmem, size = 0x400, scoped, tag = 'output window, operand 0, single buffered']
    #allocation3 [shape = 's32[1]{0}', space=sflag, size = 0x4, scoped, tag = 'scoped memory for vae_forward.13']
    #allocation4 [shape = 'u8[1024]{0}', space=vmem, size = 0x400, scoped, tag = 'output window, operand 1, single buffered']
    #allocation5 [shape = 's32[1]{0}', space=sflag, size = 0x4, scoped, tag = 'scoped memory for vae_forward.13']
    #allocation6 [shape = 'u8[1024]{0}', space=vmem, size = 0x400, scoped, tag = 'output window, operand 2, single buffered']
    %17 = vsyncpa [#allocation3], 0
    %18 = vsyncpa [#allocation5], 0
    // Predicated region
    $region2: #{vae_forward.13} parent=1 // pred_check
      _
    $region3: #{vae_forward.13} parent=1 // pred_check_branch
      %20 = sbr.rel (0) target = $region5
    $region4: #{vae_forward.13} parent=1 // pred_region
      _
    $region5: #{vae_forward.13} parent=1 // pred_fallthru
      _
    // Predicated region
    $region6: #{vae_forward.13} parent=1 // pred_check
      _
    $region7: #{vae_forward.13} parent=1 // pred_check_branch
      %22 = sbr.rel (0) target = $region9
    $region8: #{vae_forward.13} parent=1 // pred_region
      _
    $region9: #{vae_forward.13} parent=1 // pred_fallthru
      _
    // Predicated region
    $region10: #{vae_forward.13} parent=1 // pred_check
      _
    $region11: #{vae_forward.13} parent=1 // pred_check_branch
      %24 = sbr.rel (0) target = $region13
    $region12: #{vae_forward.13} parent=1 // pred_region
      _
    $region13: #{vae_forward.13} parent=1 // pred_fallthru
      _
    // Predicated region
    $region14: #{vae_forward.13} parent=1 // pred_check
      _
    $region15: #{vae_forward.13} parent=1 // pred_check_branch
      %26 = sbr.rel (0) target = $region17
    $region16: #{vae_forward.13} parent=1 // pred_region
      _
    $region17: #{vae_forward.13} parent=1 // pred_fallthru
      _
    // Predicated region
    $region18: #{vae_forward.13} parent=1 // pred_check
      _
    $region19: #{vae_forward.13} parent=1 // pred_check_branch
      %28 = sbr.rel (0) target = $region21
    $region20: #{vae_forward.13} parent=1 // pred_region
      _
    $region21: #{vae_forward.13} parent=1 // pred_fallthru
      _
    // Predicated region
    $region22: #{vae_forward.13} parent=1 // pred_check
      _
    $region23: #{vae_forward.13} parent=1 // pred_check_branch
      %30 = sbr.rel (0) target = $region25
    $region24: #{vae_forward.13} parent=1 // pred_region
      _
    $region25: #{vae_forward.13} parent=1 // pred_fallthru
      _
    // Predicated region
    $region26: #{vae_forward.13} parent=1 // pred_check
      _
    $region27: #{vae_forward.13} parent=1 // pred_check_branch
      %32 = sbr.rel (0) target = $region29
    $region28: #{vae_forward.13} parent=1 // pred_region
      _
    $region29: #{vae_forward.13} parent=1 // pred_fallthru
      _
    // Predicated region
    $region30: #{vae_forward.13} parent=1 // pred_check
      _
    $region31: #{vae_forward.13} parent=1 // pred_check_branch
      %34 = sbr.rel (0) target = $region33
    $region32: #{vae_forward.13} parent=1 // pred_region
      _
    $region33: #{vae_forward.13} parent=1 // pred_fallthru
      _
    %v35 = vld [vmem:[%s0] sm:$0xf]
    %v36 = vld [vmem:[%s1] sm:$0xff]
    %v37 = vld [vmem:[%s1 + $0x8] sm:$0xff]
    %v38 = vld [vmem:[%s1 + $0x10] sm:$0xff]
    %v39 = vld [vmem:[%s1 + $0x18] sm:$0xff]
    %v40 = vld [vmem:[%s1 + $0x20] sm:$0xff]
    %v41 = vld [vmem:[%s1 + $0x28] sm:$0xff]
    %v42 = vld [vmem:[%s1 + $0x30] sm:$0xff]
    %v43 = vld [vmem:[%s1 + $0x38] sm:$0xff]
    %v44 = vld [vmem:[%s1 + $0x40] sm:$0xff]
    %v45 = vld [vmem:[%s1 + $0x48] sm:$0xff]
    %v46 = vld [vmem:[%s1 + $0x50] sm:$0xff]
    %v47 = vld [vmem:[%s1 + $0x58] sm:$0xff]
    %v48 = vld [vmem:[%s1 + $0x60] sm:$0xff]
    %v49 = vld [vmem:[%s1 + $0x68] sm:$0xff]
    %v50 = vld [vmem:[%s1 + $0x70] sm:$0xff]
    %v51 = vld [vmem:[%s1 + $0x78] sm:$0xff]
    %v52 = vld [vmem:[%s1 + $0x80] sm:$0xff]
    %v53 = vld [vmem:[%s1 + $0x88] sm:$0xff]
    %v54 = vld [vmem:[%s1 + $0x90] sm:$0xff]
    %v55 = vld [vmem:[%s1 + $0x98] sm:$0xff]
    %v56 = vld [vmem:[%s1 + $0xa0] sm:$0xff]
    %v57 = vld [vmem:[%s1 + $0xa8] sm:$0xff]
    %v58 = vld [vmem:[%s1 + $0xb0] sm:$0xff]
    %v59 = vld [vmem:[%s1 + $0xb8] sm:$0xff]
    %v60 = vld [vmem:[%s1 + $0xc0] sm:$0xff]
    %v61 = vld [vmem:[%s1 + $0xc8] sm:$0xff]
    %v62 = vld [vmem:[%s1 + $0xd0] sm:$0xff]
    %v63 = vld [vmem:[%s1 + $0xd8] sm:$0xff]
    %v64 = vld [vmem:[%s1 + $0xe0] sm:$0xff]
    %v65 = vld [vmem:[%s1 + $0xe8] sm:$0xff]
    %v66 = vld [vmem:[%s1 + $0xf0] sm:$0xff]
    %v67 = vld [vmem:[%s1 + $0xf8] sm:$0xff]
    %v68 = vld [vmem:[%s2] sm:$0x1]
    %v70 = vperm.slane %v68, 0
    %73 = vst [vmem:[#allocation1] ss:$4 sm:$0xff] %v35
    %v74 = vld.sshfl [vmem:[#allocation1] sm:$0xff pattern:$0x73625140]
    %v75 = vld.sshfl [vmem:[#allocation1 + $0x8] sm:$0xff pattern:$0x73625140]
    %78 = vmatpush.msra.mxu0 %v51
    %79 = vmatpush.msra.mxu0 %v50
    %80 = vmatpush.msra.mxu0 %v49
    %81 = vmatpush.msra.mxu0 %v48
    %82 = vmatpush.msra.mxu0 %v47
    %83 = vmatpush.msra.mxu0 %v46
    %84 = vmatpush.msra.mxu0 %v45
    %85 = vmatpush.msra.mxu0 %v44
    %86 = vmatpush.msra.mxu0 %v43
    %87 = vmatpush.msra.mxu0 %v42
    %88 = vmatpush.msra.mxu0 %v41
    %89 = vmatpush.msra.mxu0 %v40
    %90 = vmatpush.msra.mxu0 %v39
    %91 = vmatpush.msra.mxu0 %v38
    %92 = vmatpush.msra.mxu0 %v37
    %93 = vmatpush.msra.mxu0 %v36
    %94 = vmatmul.f32.gmra.mxu0 %v74
    %v95 = vpop.f32.mrf.mxu0
    %v96 = vadd.f32 %v70, %v95
    %97 = vdwg.mxu0
    %98 = vmatpush.msra.mxu0 %v67
    %99 = vmatpush.msra.mxu0 %v66
    %100 = vmatpush.msra.mxu0 %v65
    %101 = vmatpush.msra.mxu0 %v64
    %102 = vmatpush.msra.mxu0 %v63
    %103 = vmatpush.msra.mxu0 %v62
    %104 = vmatpush.msra.mxu0 %v61
    %105 = vmatpush.msra.mxu0 %v60
    %106 = vmatpush.msra.mxu0 %v59
    %107 = vmatpush.msra.mxu0 %v58
    %108 = vmatpush.msra.mxu0 %v57
    %109 = vmatpush.msra.mxu0 %v56
    %110 = vmatpush.msra.mxu0 %v55
    %111 = vmatpush.msra.mxu0 %v54
    %112 = vmatpush.msra.mxu0 %v53
    %113 = vmatpush.msra.mxu0 %v52
    %114 = vmatmul.f32.gmra.mxu0 %v75
    %v115 = vpop.f32.mrf.mxu0
    %v116 = vadd.f32 %v96, %v115
    %117 = vdwg.mxu0
    %v118 = vld [vmem:[%s3] sm:$0xff]
    %v119 = vld [vmem:[%s3 + $0x8] sm:$0xff]
    %v120 = vld [vmem:[%s3 + $0x10] sm:$0xff]
    %v121 = vld [vmem:[%s3 + $0x18] sm:$0xff]
    %v122 = vld [vmem:[%s3 + $0x20] sm:$0xff]
    %v123 = vld [vmem:[%s3 + $0x28] sm:$0xff]
    %v124 = vld [vmem:[%s3 + $0x30] sm:$0xff]
    %v125 = vld [vmem:[%s3 + $0x38] sm:$0xff]
    %v126 = vld [vmem:[%s3 + $0x40] sm:$0xff]
    %v127 = vld [vmem:[%s3 + $0x48] sm:$0xff]
    %v128 = vld [vmem:[%s3 + $0x50] sm:$0xff]
    %v129 = vld [vmem:[%s3 + $0x58] sm:$0xff]
    %v130 = vld [vmem:[%s3 + $0x60] sm:$0xff]
    %v131 = vld [vmem:[%s3 + $0x68] sm:$0xff]
    %v132 = vld [vmem:[%s3 + $0x70] sm:$0xff]
    %v133 = vld [vmem:[%s3 + $0x78] sm:$0xff]
    %v134 = vld [vmem:[%s3 + $0x80] sm:$0xff]
    %v135 = vld [vmem:[%s3 + $0x88] sm:$0xff]
    %v136 = vld [vmem:[%s3 + $0x90] sm:$0xff]
    %v137 = vld [vmem:[%s3 + $0x98] sm:$0xff]
    %v138 = vld [vmem:[%s3 + $0xa0] sm:$0xff]
    %v139 = vld [vmem:[%s3 + $0xa8] sm:$0xff]
    %v140 = vld [vmem:[%s3 + $0xb0] sm:$0xff]
    %v141 = vld [vmem:[%s3 + $0xb8] sm:$0xff]
    %v142 = vld [vmem:[%s3 + $0xc0] sm:$0xff]
    %v143 = vld [vmem:[%s3 + $0xc8] sm:$0xff]
    %v144 = vld [vmem:[%s3 + $0xd0] sm:$0xff]
    %v145 = vld [vmem:[%s3 + $0xd8] sm:$0xff]
    %v146 = vld [vmem:[%s3 + $0xe0] sm:$0xff]
    %v147 = vld [vmem:[%s3 + $0xe8] sm:$0xff]
    %v148 = vld [vmem:[%s3 + $0xf0] sm:$0xff]
    %v149 = vld [vmem:[%s3 + $0xf8] sm:$0xff]
    %v150 = vld [vmem:[%s4] sm:$0x1]
    %v152 = vperm.slane %v150, 0
    %154 = vst [vmem:[#allocation1] ss:$4 sm:$0xff] %v35
    %v155 = vld.sshfl [vmem:[#allocation1] sm:$0xff pattern:$0x73625140]
    %v156 = vld.sshfl [vmem:[#allocation1 + $0x8] sm:$0xff pattern:$0x73625140]
    %159 = vmatpush.msra.mxu0 %v133
    %160 = vmatpush.msra.mxu0 %v132
    %161 = vmatpush.msra.mxu0 %v131
    %162 = vmatpush.msra.mxu0 %v130
    %163 = vmatpush.msra.mxu0 %v129
    %164 = vmatpush.msra.mxu0 %v128
    %165 = vmatpush.msra.mxu0 %v127
    %166 = vmatpush.msra.mxu0 %v126
    %167 = vmatpush.msra.mxu0 %v125
    %168 = vmatpush.msra.mxu0 %v124
    %169 = vmatpush.msra.mxu0 %v123
    %170 = vmatpush.msra.mxu0 %v122
    %171 = vmatpush.msra.mxu0 %v121
    %172 = vmatpush.msra.mxu0 %v120
    %173 = vmatpush.msra.mxu0 %v119
    %174 = vmatpush.msra.mxu0 %v118
    %175 = vmatmul.f32.gmra.mxu0 %v155
    %v176 = vpop.f32.mrf.mxu0
    %v177 = vadd.f32 %v152, %v176
    %178 = vdwg.mxu0
    %179 = vmatpush.msra.mxu0 %v149
    %180 = vmatpush.msra.mxu0 %v148
    %181 = vmatpush.msra.mxu0 %v147
    %182 = vmatpush.msra.mxu0 %v146
    %183 = vmatpush.msra.mxu0 %v145
    %184 = vmatpush.msra.mxu0 %v144
    %185 = vmatpush.msra.mxu0 %v143
    %186 = vmatpush.msra.mxu0 %v142
    %187 = vmatpush.msra.mxu0 %v141
    %188 = vmatpush.msra.mxu0 %v140
    %189 = vmatpush.msra.mxu0 %v139
    %190 = vmatpush.msra.mxu0 %v138
    %191 = vmatpush.msra.mxu0 %v137
    %192 = vmatpush.msra.mxu0 %v136
    %193 = vmatpush.msra.mxu0 %v135
    %194 = vmatpush.msra.mxu0 %v134
    %195 = vmatmul.f32.gmra.mxu0 %v156
    %v196 = vpop.f32.mrf.mxu0
    %v197 = vadd.f32 %v177, %v196
    %198 = vdwg.mxu0
    %v199 = vld [vmem:[%s5] sm:$0x3]
    %v200 = vmul.f32 %v197, 0.5
    %v201 = vmul.f32 %v200, 1.442695
    %v202 = vpow.pop %v201
    %v203 = vmul.f32 %v199, %v202
    %v204 = vadd.f32 %v116, %v203
    %v205 = vld [vmem:[%s6] sm:$0xff]
    %v206 = vld [vmem:[%s6 + $0x8] sm:$0xff]
    %v207 = vld [vmem:[%s6 + $0x10] sm:$0xff]
    %v208 = vld [vmem:[%s6 + $0x18] sm:$0xff]
    %v209 = vld [vmem:[%s6 + $0x20] sm:$0xff]
    %v210 = vld [vmem:[%s6 + $0x28] sm:$0xff]
    %v211 = vld [vmem:[%s6 + $0x30] sm:$0xff]
    %v212 = vld [vmem:[%s6 + $0x38] sm:$0xff]
    %v213 = vld [vmem:[%s7] sm:$0x3]
    %v215 = vperm.slane %v213, 0
    %v216 = vperm.slane %v213, 1
    %vm219 = vcmask 261120
    %v221 = vsel %vm219, %v204, 0
    %223 = vmatpush.msra.mxu0 0.0
    %224 = vmatpush.msra.mxu0 0.0
    %225 = vmatpush.msra.mxu0 0.0
    %226 = vmatpush.msra.mxu0 0.0
    %227 = vmatpush.msra.mxu0 0.0
    %228 = vmatpush.msra.mxu0 0.0
    %229 = vmatpush.msra.mxu0 0.0
    %230 = vmatpush.msra.mxu0 0.0
    %231 = vmatpush.msra.mxu0 0.0
    %232 = vmatpush.msra.mxu0 0.0
    %233 = vmatpush.msra.mxu0 0.0
    %234 = vmatpush.msra.mxu0 0.0
    %235 = vmatpush.msra.mxu0 %v211
    %236 = vmatpush.msra.mxu0 %v209
    %237 = vmatpush.msra.mxu0 %v207
    %238 = vmatpush.msra.mxu0 %v205
    %239 = vmatmul.f32.gmra.mxu0 %v221
    %v240 = vpop.f32.mrf.mxu0
    %v241 = vadd.f32 %v215, %v240
    %242 = vdwg.mxu0
    %243 = vmatpush.msra.mxu0 0.0
    %244 = vmatpush.msra.mxu0 0.0
    %245 = vmatpush.msra.mxu0 0.0
    %246 = vmatpush.msra.mxu0 0.0
    %247 = vmatpush.msra.mxu0 0.0
    %248 = vmatpush.msra.mxu0 0.0
    %249 = vmatpush.msra.mxu0 0.0
    %250 = vmatpush.msra.mxu0 0.0
    %251 = vmatpush.msra.mxu0 0.0
    %252 = vmatpush.msra.mxu0 0.0
    %253 = vmatpush.msra.mxu0 0.0
    %254 = vmatpush.msra.mxu0 0.0
    %255 = vmatpush.msra.mxu0 %v212
    %256 = vmatpush.msra.mxu0 %v210
    %257 = vmatpush.msra.mxu0 %v208
    %258 = vmatpush.msra.mxu0 %v206
    %259 = vmatmul.f32.gmra.mxu0 %v221
    %v260 = vpop.f32.mrf.mxu0
    %v261 = vadd.f32 %v216, %v260
    %262 = vdwg.mxu0
    %vm263 = vcmask 254976
    %264 = vst.msk [vmem:[#allocation2] sm:$0x3] %vm263, %v116
    %265 = vst.msk [vmem:[#allocation4] sm:$0x3] %vm263, %v197
    %266 = vst.msk [vmem:[#allocation6] sm:$0x3] %vm263, %v204
    %v269 = vrot.slane %v261, 6
    %vm270 = vcmask 1041408
    %v271 = vsel %vm270, %v241, %v269
    %273 = vst [vmem:[%s11] sm:$0xf] %v271
    // Predicated region
    $region34: #{vae_forward.13} parent=1 // pred_check
      _
    $region35: #{vae_forward.13} parent=1 // pred_check_branch
      %275 = sbr.rel (0) target = $region37
    $region36: #{vae_forward.13} parent=1 // pred_region
      %277 = vsyncadd [#allocation3], 0
      %s279 = sshll.u32 [#allocation2], 4
      %s280 = int_to_ptr.vmem [resolvable:$true] %s279
      %s281 = sshll.u32 %s8, 4
      %s282 = int_to_ptr.hbm [resolvable:$true] %s281
      %284 = dma.vmem_to_hbm [thread:$0]  %s280, 32, %s282, [#allocation3]
    $region37: #{vae_forward.13} parent=1 // pred_fallthru
      _
    // Predicated region
    $region38: #{vae_forward.13} parent=1 // pred_check
      _
    $region39: #{vae_forward.13} parent=1 // pred_check_branch
      %286 = sbr.rel (0) target = $region41
    $region40: #{vae_forward.13} parent=1 // pred_region
      %288 = vsyncadd [#allocation5], 0
      %s290 = sshll.u32 [#allocation4], 4
      %s291 = int_to_ptr.vmem [resolvable:$true] %s290
      %s292 = sshll.u32 %s9, 4
      %s293 = int_to_ptr.hbm [resolvable:$true] %s292
      %295 = dma.vmem_to_hbm [thread:$0]  %s291, 32, %s293, [#allocation5]
    $region41: #{vae_forward.13} parent=1 // pred_fallthru
      _
    // Predicated region
    $region42: #{vae_forward.13} parent=1 // pred_check
      _
    $region43: #{vae_forward.13} parent=1 // pred_check_branch
      %297 = sbr.rel (0) target = $region45
    $region44: #{vae_forward.13} parent=1 // pred_region
      %299 = vsyncadd [#allocation5], 0
      %s301 = sshll.u32 [#allocation6], 4
      %s302 = int_to_ptr.vmem [resolvable:$true] %s301
      %s303 = sshll.u32 %s10, 4
      %s304 = int_to_ptr.hbm [resolvable:$true] %s303
      %306 = dma.vmem_to_hbm [thread:$0]  %s302, 32, %s304, [#allocation5]
    $region45: #{vae_forward.13} parent=1 // pred_fallthru
      _
    // Predicated region
    $region46: #{vae_forward.13} parent=1 // pred_check
      _
    $region47: #{vae_forward.13} parent=1 // pred_check_branch
      %308 = sbr.rel (0) target = $region49
    $region48: #{vae_forward.13} parent=1 // pred_region
      _
    $region49: #{vae_forward.13} parent=1 // pred_fallthru
      _
    // Predicated region
    $region50: #{vae_forward.13} parent=1 // pred_check
      _
    $region51: #{vae_forward.13} parent=1 // pred_check_branch
      %310 = sbr.rel (0) target = $region53
    $region52: #{vae_forward.13} parent=1 // pred_region
      %312 = dma.done [#allocation3], 32
    $region53: #{vae_forward.13} parent=1 // pred_fallthru
      _
    // Predicated region
    $region54: #{vae_forward.13} parent=1 // pred_check
      _
    $region55: #{vae_forward.13} parent=1 // pred_check_branch
      %314 = sbr.rel (0) target = $region57
    $region56: #{vae_forward.13} parent=1 // pred_region
      %316 = dma.done [#allocation5], 32
    $region57: #{vae_forward.13} parent=1 // pred_fallthru
      _
    // Predicated region
    $region58: #{vae_forward.13} parent=1 // pred_check
      _
    $region59: #{vae_forward.13} parent=1 // pred_check_branch
      %318 = sbr.rel (0) target = $region61
    $region60: #{vae_forward.13} parent=1 // pred_region
      %320 = dma.done [#allocation5], 32
    $region61: #{vae_forward.13} parent=1 // pred_fallthru
      _
    // Predicated region
    $region62: #{vae_forward.13} parent=1 // pred_check
      _
    $region63: #{vae_forward.13} parent=1 // pred_check_branch
      %322 = sbr.rel (0) target = $region65
    $region64: #{vae_forward.13} parent=1 // pred_region
      _
    $region65: #{vae_forward.13} parent=1 // pred_fallthru
      _
    %323 = vsyncpa [#allocation3], 1
    %324 = vsyncpa [#allocation5], 1

// kernel: vae_forward.14
$region0: #{vae_forward.14}
  #allocation0 [shape = 'u32[]', space=smem, size = 0x4, offset = 0x4, fixed_abs, tag = 'smem constant byte address 0x4 - core index']
  #allocation1 [shape = 'u32[72,128]{1,0:T(1,128)}', space=vmem, size = 0x9000, scoped, tag = 'internal scratch']
  %s0 = inlined_call_operand.vmem [shape: bf16[128,16], index: 0, kind: input, shape index: {}]
  %s1 = inlined_call_operand.vmem [shape: bf16[16,128], index: 1, kind: input, shape index: {}]
  %s2 = inlined_call_operand.vmem [shape: f32[1,128], index: 2, kind: input, shape index: {}]
  %s3 = inlined_call_operand.vmem [shape: f32[128,128], index: 3, kind: output, shape index: {}]
  %s4 = sld [smem:[#allocation0]]
  $region22: #{vae_forward.14} parent=0
    _
  %s6 = ssub.s32 1, %s4
  %s7 = scalar_select 0, %s6, %s4
  // Predicated region
  $region2: #{vae_forward.14} parent=0 // pred_check
    _
  $region3: #{vae_forward.14} parent=0 // pred_check_branch
    %9 = sbr.rel (0) target = $region5
  $region4: #{vae_forward.14} parent=0 // pred_region
    _
  $region5: #{vae_forward.14} parent=0 // pred_fallthru
    _
  // Predicated region
  $region6: #{vae_forward.14} parent=0 // pred_check
    _
  $region7: #{vae_forward.14} parent=0 // pred_check_branch
    %11 = sbr.rel (0) target = $region9
  $region8: #{vae_forward.14} parent=0 // pred_region
    _
  $region9: #{vae_forward.14} parent=0 // pred_fallthru
    _
  // Predicated region
  $region10: #{vae_forward.14} parent=0 // pred_check
    _
  $region11: #{vae_forward.14} parent=0 // pred_check_branch
    %13 = sbr.rel (0) target = $region13
  $region12: #{vae_forward.14} parent=0 // pred_region
    _
  $region13: #{vae_forward.14} parent=0 // pred_fallthru
    _
  %v15 = vld [vmem:[%s0] sm:$0xf]
  %v16 = vld [vmem:[%s0 + $0x4] sm:$0xf]
  %v17 = vld [vmem:[%s0 + $0x8] sm:$0xf]
  %v18 = vld [vmem:[%s0 + $0xc] sm:$0xf]
  %v19 = vld [vmem:[%s0 + $0x10] sm:$0xf]
  %v20 = vld [vmem:[%s0 + $0x14] sm:$0xf]
  %v21 = vld [vmem:[%s0 + $0x18] sm:$0xf]
  %v22 = vld [vmem:[%s0 + $0x1c] sm:$0xf]
  %v23 = vld [vmem:[%s0 + $0x20] sm:$0xf]
  %v24 = vld [vmem:[%s0 + $0x24] sm:$0xf]
  %v25 = vld [vmem:[%s0 + $0x28] sm:$0xf]
  %v26 = vld [vmem:[%s0 + $0x2c] sm:$0xf]
  %v27 = vld [vmem:[%s0 + $0x30] sm:$0xf]
  %v28 = vld [vmem:[%s0 + $0x34] sm:$0xf]
  %v29 = vld [vmem:[%s0 + $0x38] sm:$0xf]
  %v30 = vld [vmem:[%s0 + $0x3c] sm:$0xf]
  %v31 = vld [vmem:[%s1] sm:$0xf]
  %v32 = vld [vmem:[%s1 + $0x4] sm:$0xf]
  %v33 = vld [vmem:[%s2] sm:$0x1]
  %v35 = vperm.slane %v33, 0
  %v53 = vunpack.c.l.b16 %v15
  %v54 = vunpack.c.l.b16 %v16
  %v55 = vunpack.c.l.b16 %v17
  %v56 = vunpack.c.l.b16 %v18
  %v57 = vunpack.c.l.b16 %v19
  %v58 = vunpack.c.l.b16 %v20
  %v59 = vunpack.c.l.b16 %v21
  %v60 = vunpack.c.l.b16 %v22
  %v61 = vunpack.c.l.b16 %v23
  %v62 = vunpack.c.l.b16 %v24
  %v63 = vunpack.c.l.b16 %v25
  %v64 = vunpack.c.l.b16 %v26
  %v65 = vunpack.c.l.b16 %v27
  %v66 = vunpack.c.l.b16 %v28
  %v67 = vunpack.c.l.b16 %v29
  %v68 = vunpack.c.l.b16 %v30
  %v69 = vpack.c.b16 %v54, %v53
  %v70 = vpack.c.b16 %v56, %v55
  %v71 = vpack.c.b16 %v58, %v57
  %v72 = vpack.c.b16 %v60, %v59
  %v73 = vpack.c.b16 %v62, %v61
  %v74 = vpack.c.b16 %v64, %v63
  %v75 = vpack.c.b16 %v66, %v65
  %v76 = vpack.c.b16 %v68, %v67
  %v79 = vunpack.c.l.b16 %v31
  %v80 = vunpack.c.l.b16 %v32
  %v81 = vpack.c.b16 %v80, %v79
  %vm83 = vcmask 130048
  %v85 = vsel %vm83, %v69, 0
  %v88 = vsel %vm83, %v70, 0
  %v91 = vsel %vm83, %v71, 0
  %v94 = vsel %vm83, %v72, 0
  %v97 = vsel %vm83, %v73, 0
  %v100 = vsel %vm83, %v74, 0
  %v103 = vsel %vm83, %v75, 0
  %v106 = vsel %vm83, %v76, 0
  %108 = vmatpush.bf16.msra.mxu0 0
  %109 = vmatpush.bf16.msra.mxu0 0
  %110 = vmatpush.bf16.msra.mxu0 0
  %111 = vmatpush.bf16.msra.mxu0 0
  %112 = vmatpush.bf16.msra.mxu0 0
  %113 = vmatpush.bf16.msra.mxu0 0
  %114 = vmatpush.bf16.msra.mxu0 0
  %115 = vmatpush.bf16.msra.mxu0 %v81
  %116 = vmatmul.bf16.gmra.mxu0 %v85
  %v117 = vpop.f32.mrf.mxu0
  %v118 = vadd.f32 %v35, %v117
  %v119 = vpop.f32.mrf.mxu0
  %v120 = vadd.f32 %v35, %v119
  %121 = vmatmul.bf16.gmra.mxu0 %v88
  %v122 = vpop.f32.mrf.mxu0
  %v123 = vadd.f32 %v35, %v122
  %v124 = vpop.f32.mrf.mxu0
  %v125 = vadd.f32 %v35, %v124
  %126 = vmatmul.bf16.gmra.mxu0 %v91
  %v127 = vpop.f32.mrf.mxu0
  %v128 = vadd.f32 %v35, %v127
  %v129 = vpop.f32.mrf.mxu0
  %v130 = vadd.f32 %v35, %v129
  %131 = vmatmul.bf16.gmra.mxu0 %v94
  %v132 = vpop.f32.mrf.mxu0
  %v133 = vadd.f32 %v35, %v132
  %v134 = vpop.f32.mrf.mxu0
  %v135 = vadd.f32 %v35, %v134
  %136 = vmatmul.bf16.gmra.mxu0 %v97
  %v137 = vpop.f32.mrf.mxu0
  %v138 = vadd.f32 %v35, %v137
  %v139 = vpop.f32.mrf.mxu0
  %v140 = vadd.f32 %v35, %v139
  %141 = vmatmul.bf16.gmra.mxu0 %v100
  %v142 = vpop.f32.mrf.mxu0
  %v143 = vadd.f32 %v35, %v142
  %v144 = vpop.f32.mrf.mxu0
  %v145 = vadd.f32 %v35, %v144
  %146 = vmatmul.bf16.gmra.mxu0 %v103
  %v147 = vpop.f32.mrf.mxu0
  %v148 = vadd.f32 %v35, %v147
  %v149 = vpop.f32.mrf.mxu0
  %v150 = vadd.f32 %v35, %v149
  %151 = vmatmul.bf16.gmra.mxu0 %v106
  %v152 = vpop.f32.mrf.mxu0
  %v153 = vadd.f32 %v35, %v152
  %v154 = vpop.f32.mrf.mxu0
  %v155 = vadd.f32 %v35, %v154
  %156 = vdwg.mxu0
  %157 = vst [vmem:[%s3] sm:$0xff] %v118
  %158 = vst [vmem:[%s3 + $0x8] sm:$0xff] %v120
  %159 = vst [vmem:[%s3 + $0x10] sm:$0xff] %v123
  %160 = vst [vmem:[%s3 + $0x18] sm:$0xff] %v125
  %161 = vst [vmem:[%s3 + $0x20] sm:$0xff] %v128
  %162 = vst [vmem:[%s3 + $0x28] sm:$0xff] %v130
  %163 = vst [vmem:[%s3 + $0x30] sm:$0xff] %v133
  %164 = vst [vmem:[%s3 + $0x38] sm:$0xff] %v135
  %165 = vst [vmem:[%s3 + $0x40] sm:$0xff] %v138
  %166 = vst [vmem:[%s3 + $0x48] sm:$0xff] %v140
  %167 = vst [vmem:[%s3 + $0x50] sm:$0xff] %v143
  %168 = vst [vmem:[%s3 + $0x58] sm:$0xff] %v145
  %169 = vst [vmem:[%s3 + $0x60] sm:$0xff] %v148
  %170 = vst [vmem:[%s3 + $0x68] sm:$0xff] %v150
  %171 = vst [vmem:[%s3 + $0x70] sm:$0xff] %v153
  %172 = vst [vmem:[%s3 + $0x78] sm:$0xff] %v155
  // Predicated region
  $region14: #{vae_forward.14} parent=0 // pred_check
    _
  $region15: #{vae_forward.14} parent=0 // pred_check_branch
    %174 = sbr.rel (0) target = $region17
  $region16: #{vae_forward.14} parent=0 // pred_region
    _
  $region17: #{vae_forward.14} parent=0 // pred_fallthru
    _
  // Predicated region
  $region18: #{vae_forward.14} parent=0 // pred_check
    _
  $region19: #{vae_forward.14} parent=0 // pred_check_branch
    %176 = sbr.rel (0) target = $region21
  $region20: #{vae_forward.14} parent=0 // pred_region
    _
  $region21: #{vae_forward.14} parent=0 // pred_fallthru
    _

// kernel: vae_forward.15
$region0: #{vae_forward.15}
  #allocation0 [shape = 'u32[]', space=smem, size = 0x4, offset = 0x4, fixed_abs, tag = 'smem constant byte address 0x4 - core index']
  #allocation1 [shape = 'u32[72,128]{1,0:T(1,128)}', space=vmem, size = 0x9000, scoped, tag = 'internal scratch']
  %s0 = inlined_call_operand.vmem [shape: bf16[72,576], index: 0, kind: input, shape index: {}]
  %s1 = inlined_call_operand.vmem [shape: bf16[576,128], index: 1, kind: input, shape index: {}]
  %s2 = inlined_call_operand.vmem [shape: f32[1,128], index: 2, kind: input, shape index: {}]
  %s3 = inlined_call_operand.vmem [shape: f32[72,128], index: 3, kind: output, shape index: {}]
  %s4 = sld [smem:[#allocation0]]
  $region22: #{vae_forward.15} parent=0
    _
  %s6 = ssub.s32 1, %s4
  %s7 = scalar_select 0, %s6, %s4
  // Predicated region
  $region2: #{vae_forward.15} parent=0 // pred_check
    _
  $region3: #{vae_forward.15} parent=0 // pred_check_branch
    %9 = sbr.rel (0) target = $region5
  $region4: #{vae_forward.15} parent=0 // pred_region
    _
  $region5: #{vae_forward.15} parent=0 // pred_fallthru
    _
  // Predicated region
  $region6: #{vae_forward.15} parent=0 // pred_check
    _
  $region7: #{vae_forward.15} parent=0 // pred_check_branch
    %11 = sbr.rel (0) target = $region9
  $region8: #{vae_forward.15} parent=0 // pred_region
    _
  $region9: #{vae_forward.15} parent=0 // pred_fallthru
    _
  // Predicated region
  $region10: #{vae_forward.15} parent=0 // pred_check
    _
  $region11: #{vae_forward.15} parent=0 // pred_check_branch
    %13 = sbr.rel (0) target = $region13
  $region12: #{vae_forward.15} parent=0 // pred_region
    _
  $region13: #{vae_forward.15} parent=0 // pred_fallthru
    _
  %v15 = vld [vmem:[%s0] sm:$0xff]
  %v16 = vld [vmem:[%s0 + $0x8] sm:$0xff]
  %v17 = vld [vmem:[%s0 + $0x10] sm:$0xf]
  %v18 = vld [vmem:[%s0 + $0x14] sm:$0xff]
  %v19 = vld [vmem:[%s0 + $0x1c] sm:$0xff]
  %v20 = vld [vmem:[%s0 + $0x24] sm:$0xf]
  %v21 = vld [vmem:[%s0 + $0x28] sm:$0xff]
  %v22 = vld [vmem:[%s0 + $0x30] sm:$0xff]
  %v23 = vld [vmem:[%s0 + $0x38] sm:$0xf]
  %v24 = vld [vmem:[%s0 + $0x3c] sm:$0xff]
  %v25 = vld [vmem:[%s0 + $0x44] sm:$0xff]
  %v26 = vld [vmem:[%s0 + $0x4c] sm:$0xf]
  %v27 = vld [vmem:[%s0 + $0x50] sm:$0xff]
  %v28 = vld [vmem:[%s0 + $0x58] sm:$0xff]
  %v29 = vld [vmem:[%s0 + $0x60] sm:$0xf]
  %v30 = vld [vmem:[%s0 + $0x64] sm:$0xff]
  %v31 = vld [vmem:[%s0 + $0x6c] sm:$0xff]
  %v32 = vld [vmem:[%s0 + $0x74] sm:$0xf]
  %v33 = vld [vmem:[%s0 + $0x78] sm:$0xff]
  %v34 = vld [vmem:[%s0 + $0x80] sm:$0xff]
  %v35 = vld [vmem:[%s0 + $0x88] sm:$0xf]
  %v36 = vld [vmem:[%s0 + $0x8c] sm:$0xff]
  %v37 = vld [vmem:[%s0 + $0x94] sm:$0xff]
  %v38 = vld [vmem:[%s0 + $0x9c] sm:$0xf]
  %v39 = vld [vmem:[%s0 + $0xa0] sm:$0xff]
  %v40 = vld [vmem:[%s0 + $0xa8] sm:$0xff]
  %v41 = vld [vmem:[%s0 + $0xb0] sm:$0xf]
  %v42 = vld [vmem:[%s1] sm:$0xf]
  %v43 = vld [vmem:[%s1 + $0x4] sm:$0xf]
  %v44 = vld [vmem:[%s1 + $0x8] sm:$0xf]
  %v45 = vld [vmem:[%s1 + $0xc] sm:$0xf]
  %v46 = vld [vmem:[%s1 + $0x10] sm:$0xf]
  %v47 = vld [vmem:[%s1 + $0x14] sm:$0xf]
  %v48 = vld [vmem:[%s1 + $0x18] sm:$0xf]
  %v49 = vld [vmem:[%s1 + $0x1c] sm:$0xf]
  %v50 = vld [vmem:[%s1 + $0x20] sm:$0xf]
  %v51 = vld [vmem:[%s1 + $0x24] sm:$0xf]
  %v52 = vld [vmem:[%s1 + $0x28] sm:$0xf]
  %v53 = vld [vmem:[%s1 + $0x2c] sm:$0xf]
  %v54 = vld [vmem:[%s1 + $0x30] sm:$0xf]
  %v55 = vld [vmem:[%s1 + $0x34] sm:$0xf]
  %v56 = vld [vmem:[%s1 + $0x38] sm:$0xf]
  %v57 = vld [vmem:[%s1 + $0x3c] sm:$0xf]
  %v58 = vld [vmem:[%s1 + $0x40] sm:$0xf]
  %v59 = vld [vmem:[%s1 + $0x44] sm:$0xf]
  %v60 = vld [vmem:[%s1 + $0x48] sm:$0xf]
  %v61 = vld [vmem:[%s1 + $0x4c] sm:$0xf]
  %v62 = vld [vmem:[%s1 + $0x50] sm:$0xf]
  %v63 = vld [vmem:[%s1 + $0x54] sm:$0xf]
  %v64 = vld [vmem:[%s1 + $0x58] sm:$0xf]
  %v65 = vld [vmem:[%s1 + $0x5c] sm:$0xf]
  %v66 = vld [vmem:[%s1 + $0x60] sm:$0xf]
  %v67 = vld [vmem:[%s1 + $0x64] sm:$0xf]
  %v68 = vld [vmem:[%s1 + $0x68] sm:$0xf]
  %v69 = vld [vmem:[%s1 + $0x6c] sm:$0xf]
  %v70 = vld [vmem:[%s1 + $0x70] sm:$0xf]
  %v71 = vld [vmem:[%s1 + $0x74] sm:$0xf]
  %v72 = vld [vmem:[%s1 + $0x78] sm:$0xf]
  %v73 = vld [vmem:[%s1 + $0x7c] sm:$0xf]
  %v74 = vld [vmem:[%s1 + $0x80] sm:$0xf]
  %v75 = vld [vmem:[%s1 + $0x84] sm:$0xf]
  %v76 = vld [vmem:[%s1 + $0x88] sm:$0xf]
  %v77 = vld [vmem:[%s1 + $0x8c] sm:$0xf]
  %v78 = vld [vmem:[%s1 + $0x90] sm:$0xf]
  %v79 = vld [vmem:[%s1 + $0x94] sm:$0xf]
  %v80 = vld [vmem:[%s1 + $0x98] sm:$0xf]
  %v81 = vld [vmem:[%s1 + $0x9c] sm:$0xf]
  %v82 = vld [vmem:[%s1 + $0xa0] sm:$0xf]
  %v83 = vld [vmem:[%s1 + $0xa4] sm:$0xf]
  %v84 = vld [vmem:[%s1 + $0xa8] sm:$0xf]
  %v85 = vld [vmem:[%s1 + $0xac] sm:$0xf]
  %v86 = vld [vmem:[%s1 + $0xb0] sm:$0xf]
  %v87 = vld [vmem:[%s1 + $0xb4] sm:$0xf]
  %v88 = vld [vmem:[%s1 + $0xb8] sm:$0xf]
  %v89 = vld [vmem:[%s1 + $0xbc] sm:$0xf]
  %v90 = vld [vmem:[%s1 + $0xc0] sm:$0xf]
  %v91 = vld [vmem:[%s1 + $0xc4] sm:$0xf]
  %v92 = vld [vmem:[%s1 + $0xc8] sm:$0xf]
  %v93 = vld [vmem:[%s1 + $0xcc] sm:$0xf]
  %v94 = vld [vmem:[%s1 + $0xd0] sm:$0xf]
  %v95 = vld [vmem:[%s1 + $0xd4] sm:$0xf]
  %v96 = vld [vmem:[%s1 + $0xd8] sm:$0xf]
  %v97 = vld [vmem:[%s1 + $0xdc] sm:$0xf]
  %v98 = vld [vmem:[%s1 + $0xe0] sm:$0xf]
  %v99 = vld [vmem:[%s1 + $0xe4] sm:$0xf]
  %v100 = vld [vmem:[%s1 + $0xe8] sm:$0xf]
  %v101 = vld [vmem:[%s1 + $0xec] sm:$0xf]
  %v102 = vld [vmem:[%s1 + $0xf0] sm:$0xf]
  %v103 = vld [vmem:[%s1 + $0xf4] sm:$0xf]
  %v104 = vld [vmem:[%s1 + $0xf8] sm:$0xf]
  %v105 = vld [vmem:[%s1 + $0xfc] sm:$0xf]
  %v106 = vld [vmem:[%s1 + $0x100] sm:$0xf]
  %v107 = vld [vmem:[%s1 + $0x104] sm:$0xf]
  %v108 = vld [vmem:[%s1 + $0x108] sm:$0xf]
  %v109 = vld [vmem:[%s1 + $0x10c] sm:$0xf]
  %v110 = vld [vmem:[%s1 + $0x110] sm:$0xf]
  %v111 = vld [vmem:[%s1 + $0x114] sm:$0xf]
  %v112 = vld [vmem:[%s1 + $0x118] sm:$0xf]
  %v113 = vld [vmem:[%s1 + $0x11c] sm:$0xf]
  %v114 = vld [vmem:[%s2] sm:$0x1]
  %v116 = vperm.slane %v114, 0
  %v145 = vunpack.c.l.b16 %v15
  %v146 = vunpack.c.h.b16 %v15
  %v147 = vunpack.c.l.b16 %v16
  %v148 = vunpack.c.h.b16 %v16
  %v149 = vunpack.c.l.b16 %v17
  %v150 = vunpack.c.l.b16 %v18
  %v151 = vunpack.c.h.b16 %v18
  %v152 = vunpack.c.l.b16 %v19
  %v153 = vunpack.c.h.b16 %v19
  %v154 = vunpack.c.l.b16 %v20
  %v155 = vunpack.c.l.b16 %v21
  %v156 = vunpack.c.h.b16 %v21
  %v157 = vunpack.c.l.b16 %v22
  %v158 = vunpack.c.h.b16 %v22
  %v159 = vunpack.c.l.b16 %v23
  %v160 = vunpack.c.l.b16 %v24
  %v161 = vunpack.c.h.b16 %v24
  %v162 = vunpack.c.l.b16 %v25
  %v163 = vunpack.c.h.b16 %v25
  %v164 = vunpack.c.l.b16 %v26
  %v165 = vunpack.c.l.b16 %v27
  %v166 = vunpack.c.h.b16 %v27
  %v167 = vunpack.c.l.b16 %v28
  %v168 = vunpack.c.h.b16 %v28
  %v169 = vunpack.c.l.b16 %v29
  %v170 = vunpack.c.l.b16 %v30
  %v171 = vunpack.c.h.b16 %v30
  %v172 = vunpack.c.l.b16 %v31
  %v173 = vunpack.c.h.b16 %v31
  %v174 = vunpack.c.l.b16 %v32
  %v175 = vunpack.c.l.b16 %v33
  %v176 = vunpack.c.h.b16 %v33
  %v177 = vunpack.c.l.b16 %v34
  %v178 = vunpack.c.h.b16 %v34
  %v179 = vunpack.c.l.b16 %v35
  %v180 = vunpack.c.l.b16 %v36
  %v181 = vunpack.c.h.b16 %v36
  %v182 = vunpack.c.l.b16 %v37
  %v183 = vunpack.c.h.b16 %v37
  %v184 = vunpack.c.l.b16 %v38
  %v185 = vunpack.c.l.b16 %v39
  %v186 = vunpack.c.h.b16 %v39
  %v187 = vunpack.c.l.b16 %v40
  %v188 = vunpack.c.h.b16 %v40
  %v189 = vunpack.c.l.b16 %v41
  %v190 = vpack.c.b16 %v150, %v145
  %v191 = vpack.c.b16 %v151, %v146
  %v192 = vpack.c.b16 %v152, %v147
  %v193 = vpack.c.b16 %v153, %v148
  %v194 = vpack.c.b16 %v154, %v149
  %v195 = vpack.c.b16 %v160, %v155
  %v196 = vpack.c.b16 %v161, %v156
  %v197 = vpack.c.b16 %v162, %v157
  %v198 = vpack.c.b16 %v163, %v158
  %v199 = vpack.c.b16 %v164, %v159
  %v200 = vpack.c.b16 %v170, %v165
  %v201 = vpack.c.b16 %v171, %v166
  %v202 = vpack.c.b16 %v172, %v167
  %v203 = vpack.c.b16 %v173, %v168
  %v204 = vpack.c.b16 %v174, %v169
  %v205 = vpack.c.b16 %v180, %v175
  %v206 = vpack.c.b16 %v181, %v176
  %v207 = vpack.c.b16 %v182, %v177
  %v208 = vpack.c.b16 %v183, %v178
  %v209 = vpack.c.b16 %v184, %v179
  %v210 = vpack.c.b16 %v185, %v185
  %v211 = vpack.c.b16 %v186, %v186
  %v212 = vpack.c.b16 %v187, %v187
  %v213 = vpack.c.b16 %v188, %v188
  %v214 = vpack.c.b16 %v189, %v189
  %v307 = vunpack.c.l.b16 %v42
  %v308 = vunpack.c.l.b16 %v43
  %v309 = vunpack.c.l.b16 %v44
  %v310 = vunpack.c.l.b16 %v45
  %v311 = vunpack.c.l.b16 %v46
  %v312 = vunpack.c.l.b16 %v47
  %v313 = vunpack.c.l.b16 %v48
  %v314 = vunpack.c.l.b16 %v49
  %v315 = vunpack.c.l.b16 %v50
  %v316 = vunpack.c.l.b16 %v51
  %v317 = vunpack.c.l.b16 %v52
  %v318 = vunpack.c.l.b16 %v53
  %v319 = vunpack.c.l.b16 %v54
  %v320 = vunpack.c.l.b16 %v55
  %v321 = vunpack.c.l.b16 %v56
  %v322 = vunpack.c.l.b16 %v57
  %v323 = vunpack.c.l.b16 %v58
  %v324 = vunpack.c.l.b16 %v59
  %v325 = vunpack.c.l.b16 %v60
  %v326 = vunpack.c.l.b16 %v61
  %v327 = vunpack.c.l.b16 %v62
  %v328 = vunpack.c.l.b16 %v63
  %v329 = vunpack.c.l.b16 %v64
  %v330 = vunpack.c.l.b16 %v65
  %v331 = vunpack.c.l.b16 %v66
  %v332 = vunpack.c.l.b16 %v67
  %v333 = vunpack.c.l.b16 %v68
  %v334 = vunpack.c.l.b16 %v69
  %v335 = vunpack.c.l.b16 %v70
  %v336 = vunpack.c.l.b16 %v71
  %v337 = vunpack.c.l.b16 %v72
  %v338 = vunpack.c.l.b16 %v73
  %v339 = vunpack.c.l.b16 %v74
  %v340 = vunpack.c.l.b16 %v75
  %v341 = vunpack.c.l.b16 %v76
  %v342 = vunpack.c.l.b16 %v77
  %v343 = vunpack.c.l.b16 %v78
  %v344 = vunpack.c.l.b16 %v79
  %v345 = vunpack.c.l.b16 %v80
  %v346 = vunpack.c.l.b16 %v81
  %v347 = vunpack.c.l.b16 %v82
  %v348 = vunpack.c.l.b16 %v83
  %v349 = vunpack.c.l.b16 %v84
  %v350 = vunpack.c.l.b16 %v85
  %v351 = vunpack.c.l.b16 %v86
  %v352 = vunpack.c.l.b16 %v87
  %v353 = vunpack.c.l.b16 %v88
  %v354 = vunpack.c.l.b16 %v89
  %v355 = vunpack.c.l.b16 %v90
  %v356 = vunpack.c.l.b16 %v91
  %v357 = vunpack.c.l.b16 %v92
  %v358 = vunpack.c.l.b16 %v93
  %v359 = vunpack.c.l.b16 %v94
  %v360 = vunpack.c.l.b16 %v95
  %v361 = vunpack.c.l.b16 %v96
  %v362 = vunpack.c.l.b16 %v97
  %v363 = vunpack.c.l.b16 %v98
  %v364 = vunpack.c.l.b16 %v99
  %v365 = vunpack.c.l.b16 %v100
  %v366 = vunpack.c.l.b16 %v101
  %v367 = vunpack.c.l.b16 %v102
  %v368 = vunpack.c.l.b16 %v103
  %v369 = vunpack.c.l.b16 %v104
  %v370 = vunpack.c.l.b16 %v105
  %v371 = vunpack.c.l.b16 %v106
  %v372 = vunpack.c.l.b16 %v107
  %v373 = vunpack.c.l.b16 %v108
  %v374 = vunpack.c.l.b16 %v109
  %v375 = vunpack.c.l.b16 %v110
  %v376 = vunpack.c.l.b16 %v111
  %v377 = vunpack.c.l.b16 %v112
  %v378 = vunpack.c.l.b16 %v113
  %v379 = vpack.c.b16 %v308, %v307
  %v380 = vpack.c.b16 %v310, %v309
  %v381 = vpack.c.b16 %v312, %v311
  %v382 = vpack.c.b16 %v314, %v313
  %v383 = vpack.c.b16 %v316, %v315
  %v384 = vpack.c.b16 %v318, %v317
  %v385 = vpack.c.b16 %v320, %v319
  %v386 = vpack.c.b16 %v322, %v321
  %v387 = vpack.c.b16 %v324, %v323
  %v388 = vpack.c.b16 %v326, %v325
  %v389 = vpack.c.b16 %v328, %v327
  %v390 = vpack.c.b16 %v330, %v329
  %v391 = vpack.c.b16 %v332, %v331
  %v392 = vpack.c.b16 %v334, %v333
  %v393 = vpack.c.b16 %v336, %v335
  %v394 = vpack.c.b16 %v338, %v337
  %v395 = vpack.c.b16 %v340, %v339
  %v396 = vpack.c.b16 %v342, %v341
  %v397 = vpack.c.b16 %v344, %v343
  %v398 = vpack.c.b16 %v346, %v345
  %v399 = vpack.c.b16 %v348, %v347
  %v400 = vpack.c.b16 %v350, %v349
  %v401 = vpack.c.b16 %v352, %v351
  %v402 = vpack.c.b16 %v354, %v353
  %v403 = vpack.c.b16 %v356, %v355
  %v404 = vpack.c.b16 %v358, %v357
  %v405 = vpack.c.b16 %v360, %v359
  %v406 = vpack.c.b16 %v362, %v361
  %v407 = vpack.c.b16 %v364, %v363
  %v408 = vpack.c.b16 %v366, %v365
  %v409 = vpack.c.b16 %v368, %v367
  %v410 = vpack.c.b16 %v370, %v369
  %v411 = vpack.c.b16 %v372, %v371
  %v412 = vpack.c.b16 %v374, %v373
  %v413 = vpack.c.b16 %v376, %v375
  %v414 = vpack.c.b16 %v378, %v377
  %vm451 = vcmask 523264
  %v453 = vsel %vm451, %v194, 0
  %v456 = vsel %vm451, %v199, 0
  %v459 = vsel %vm451, %v204, 0
  %v462 = vsel %vm451, %v209, 0
  %v465 = vsel %vm451, %v214, 0
  %467 = vmatpush.bf16.msra.mxu0 %v386
  %468 = vmatpush.bf16.msra.mxu0 %v385
  %469 = vmatpush.bf16.msra.mxu0 %v384
  %470 = vmatpush.bf16.msra.mxu0 %v383
  %471 = vmatpush.bf16.msra.mxu0 %v382
  %472 = vmatpush.bf16.msra.mxu0 %v381
  %473 = vmatpush.bf16.msra.mxu0 %v380
  %474 = vmatpush.bf16.msra.mxu0 %v379
  %475 = vmatmul.bf16.gmra.mxu0 %v190
  %v476 = vpop.f32.mrf.mxu0
  %v477 = vadd.f32 %v116, %v476
  %v478 = vpop.f32.mrf.mxu0
  %v479 = vadd.f32 %v116, %v478
  %480 = vmatmul.bf16.gmra.mxu0 %v195
  %v481 = vpop.f32.mrf.mxu0
  %v482 = vadd.f32 %v116, %v481
  %v483 = vpop.f32.mrf.mxu0
  %v484 = vadd.f32 %v116, %v483
  %485 = vmatmul.bf16.gmra.mxu0 %v200
  %v486 = vpop.f32.mrf.mxu0
  %v487 = vadd.f32 %v116, %v486
  %v488 = vpop.f32.mrf.mxu0
  %v489 = vadd.f32 %v116, %v488
  %490 = vmatmul.bf16.gmra.mxu0 %v205
  %v491 = vpop.f32.mrf.mxu0
  %v492 = vadd.f32 %v116, %v491
  %v493 = vpop.f32.mrf.mxu0
  %v494 = vadd.f32 %v116, %v493
  %495 = vmatmul.bf16.gmra.mxu0 %v210
  %v496 = vpop.f32.mrf.mxu0
  %v497 = vadd.f32 %v116, %v496
  %v498 = vpop.f32.mrf.mxu0
  %499 = vdwg.mxu0
  %500 = vmatpush.bf16.msra.mxu0 %v394
  %501 = vmatpush.bf16.msra.mxu0 %v393
  %502 = vmatpush.bf16.msra.mxu0 %v392
  %503 = vmatpush.bf16.msra.mxu0 %v391
  %504 = vmatpush.bf16.msra.mxu0 %v390
  %505 = vmatpush.bf16.msra.mxu0 %v389
  %506 = vmatpush.bf16.msra.mxu0 %v388
  %507 = vmatpush.bf16.msra.mxu0 %v387
  %508 = vmatmul.bf16.gmra.mxu0 %v191
  %v509 = vpop.f32.mrf.mxu0
  %v510 = vadd.f32 %v477, %v509
  %v511 = vpop.f32.mrf.mxu0
  %v512 = vadd.f32 %v479, %v511
  %513 = vmatmul.bf16.gmra.mxu0 %v196
  %v514 = vpop.f32.mrf.mxu0
  %v515 = vadd.f32 %v482, %v514
  %v516 = vpop.f32.mrf.mxu0
  %v517 = vadd.f32 %v484, %v516
  %518 = vmatmul.bf16.gmra.mxu0 %v201
  %v519 = vpop.f32.mrf.mxu0
  %v520 = vadd.f32 %v487, %v519
  %v521 = vpop.f32.mrf.mxu0
  %v522 = vadd.f32 %v489, %v521
  %523 = vmatmul.bf16.gmra.mxu0 %v206
  %v524 = vpop.f32.mrf.mxu0
  %v525 = vadd.f32 %v492, %v524
  %v526 = vpop.f32.mrf.mxu0
  %v527 = vadd.f32 %v494, %v526
  %528 = vmatmul.bf16.gmra.mxu0 %v211
  %v529 = vpop.f32.mrf.mxu0
  %v530 = vadd.f32 %v497, %v529
  %v531 = vpop.f32.mrf.mxu0
  %532 = vdwg.mxu0
  %533 = vmatpush.bf16.msra.mxu0 %v402
  %534 = vmatpush.bf16.msra.mxu0 %v401
  %535 = vmatpush.bf16.msra.mxu0 %v400
  %536 = vmatpush.bf16.msra.mxu0 %v399
  %537 = vmatpush.bf16.msra.mxu0 %v398
  %538 = vmatpush.bf16.msra.mxu0 %v397
  %539 = vmatpush.bf16.msra.mxu0 %v396
  %540 = vmatpush.bf16.msra.mxu0 %v395
  %541 = vmatmul.bf16.gmra.mxu0 %v192
  %v542 = vpop.f32.mrf.mxu0
  %v543 = vadd.f32 %v510, %v542
  %v544 = vpop.f32.mrf.mxu0
  %v545 = vadd.f32 %v512, %v544
  %546 = vmatmul.bf16.gmra.mxu0 %v197
  %v547 = vpop.f32.mrf.mxu0
  %v548 = vadd.f32 %v515, %v547
  %v549 = vpop.f32.mrf.mxu0
  %v550 = vadd.f32 %v517, %v549
  %551 = vmatmul.bf16.gmra.mxu0 %v202
  %v552 = vpop.f32.mrf.mxu0
  %v553 = vadd.f32 %v520, %v552
  %v554 = vpop.f32.mrf.mxu0
  %v555 = vadd.f32 %v522, %v554
  %556 = vmatmul.bf16.gmra.mxu0 %v207
  %v557 = vpop.f32.mrf.mxu0
  %v558 = vadd.f32 %v525, %v557
  %v559 = vpop.f32.mrf.mxu0
  %v560 = vadd.f32 %v527, %v559
  %561 = vmatmul.bf16.gmra.mxu0 %v212
  %v562 = vpop.f32.mrf.mxu0
  %v563 = vadd.f32 %v530, %v562
  %v564 = vpop.f32.mrf.mxu0
  %565 = vdwg.mxu0
  %566 = vmatpush.bf16.msra.mxu0 %v410
  %567 = vmatpush.bf16.msra.mxu0 %v409
  %568 = vmatpush.bf16.msra.mxu0 %v408
  %569 = vmatpush.bf16.msra.mxu0 %v407
  %570 = vmatpush.bf16.msra.mxu0 %v406
  %571 = vmatpush.bf16.msra.mxu0 %v405
  %572 = vmatpush.bf16.msra.mxu0 %v404
  %573 = vmatpush.bf16.msra.mxu0 %v403
  %574 = vmatmul.bf16.gmra.mxu0 %v193
  %v575 = vpop.f32.mrf.mxu0
  %v576 = vadd.f32 %v543, %v575
  %v577 = vpop.f32.mrf.mxu0
  %v578 = vadd.f32 %v545, %v577
  %579 = vmatmul.bf16.gmra.mxu0 %v198
  %v580 = vpop.f32.mrf.mxu0
  %v581 = vadd.f32 %v548, %v580
  %v582 = vpop.f32.mrf.mxu0
  %v583 = vadd.f32 %v550, %v582
  %584 = vmatmul.bf16.gmra.mxu0 %v203
  %v585 = vpop.f32.mrf.mxu0
  %v586 = vadd.f32 %v553, %v585
  %v587 = vpop.f32.mrf.mxu0
  %v588 = vadd.f32 %v555, %v587
  %589 = vmatmul.bf16.gmra.mxu0 %v208
  %v590 = vpop.f32.mrf.mxu0
  %v591 = vadd.f32 %v558, %v590
  %v592 = vpop.f32.mrf.mxu0
  %v593 = vadd.f32 %v560, %v592
  %594 = vmatmul.bf16.gmra.mxu0 %v213
  %v595 = vpop.f32.mrf.mxu0
  %v596 = vadd.f32 %v563, %v595
  %v597 = vpop.f32.mrf.mxu0
  %598 = vdwg.mxu0
  %599 = vmatpush.bf16.msra.mxu0 0
  %600 = vmatpush.bf16.msra.mxu0 0
  %601 = vmatpush.bf16.msra.mxu0 0
  %602 = vmatpush.bf16.msra.mxu0 0
  %603 = vmatpush.bf16.msra.mxu0 %v414
  %604 = vmatpush.bf16.msra.mxu0 %v413
  %605 = vmatpush.bf16.msra.mxu0 %v412
  %606 = vmatpush.bf16.msra.mxu0 %v411
  %607 = vmatmul.bf16.gmra.mxu0 %v453
  %v608 = vpop.f32.mrf.mxu0
  %v609 = vadd.f32 %v576, %v608
  %v610 = vpop.f32.mrf.mxu0
  %v611 = vadd.f32 %v578, %v610
  %612 = vmatmul.bf16.gmra.mxu0 %v456
  %v613 = vpop.f32.mrf.mxu0
  %v614 = vadd.f32 %v581, %v613
  %v615 = vpop.f32.mrf.mxu0
  %v616 = vadd.f32 %v583, %v615
  %617 = vmatmul.bf16.gmra.mxu0 %v459
  %v618 = vpop.f32.mrf.mxu0
  %v619 = vadd.f32 %v586, %v618
  %v620 = vpop.f32.mrf.mxu0
  %v621 = vadd.f32 %v588, %v620
  %622 = vmatmul.bf16.gmra.mxu0 %v462
  %v623 = vpop.f32.mrf.mxu0
  %v624 = vadd.f32 %v591, %v623
  %v625 = vpop.f32.mrf.mxu0
  %v626 = vadd.f32 %v593, %v625
  %627 = vmatmul.bf16.gmra.mxu0 %v465
  %v628 = vpop.f32.mrf.mxu0
  %v629 = vadd.f32 %v596, %v628
  %v630 = vpop.f32.mrf.mxu0
  %631 = vdwg.mxu0
  %v632 = vmax.f32 %v609, 0.0
  %v633 = vmax.f32 %v611, 0.0
  %v634 = vmax.f32 %v614, 0.0
  %v635 = vmax.f32 %v616, 0.0
  %v636 = vmax.f32 %v619, 0.0
  %v637 = vmax.f32 %v621, 0.0
  %v638 = vmax.f32 %v624, 0.0
  %v639 = vmax.f32 %v626, 0.0
  %v640 = vmax.f32 %v629, 0.0
  %641 = vst [vmem:[%s3] sm:$0xff] %v632
  %642 = vst [vmem:[%s3 + $0x8] sm:$0xff] %v633
  %643 = vst [vmem:[%s3 + $0x10] sm:$0xff] %v634
  %644 = vst [vmem:[%s3 + $0x18] sm:$0xff] %v635
  %645 = vst [vmem:[%s3 + $0x20] sm:$0xff] %v636
  %646 = vst [vmem:[%s3 + $0x28] sm:$0xff] %v637
  %647 = vst [vmem:[%s3 + $0x30] sm:$0xff] %v638
  %648 = vst [vmem:[%s3 + $0x38] sm:$0xff] %v639
  %649 = vst [vmem:[%s3 + $0x40] sm:$0xff] %v640
  // Predicated region
  $region14: #{vae_forward.15} parent=0 // pred_check
    _
  $region15: #{vae_forward.15} parent=0 // pred_check_branch
    %651 = sbr.rel (0) target = $region17
  $region16: #{vae_forward.15} parent=0 // pred_region
    _
  $region17: #{vae_forward.15} parent=0 // pred_fallthru
    _
  // Predicated region
  $region18: #{vae_forward.15} parent=0 // pred_check
    _
  $region19: #{vae_forward.15} parent=0 // pred_check_branch
    %653 = sbr.rel (0) target = $region21
  $region20: #{vae_forward.15} parent=0 // pred_region
    _
  $region21: #{vae_forward.15} parent=0 // pred_fallthru
    _

// kernel: vae_forward.16
$region0: #{vae_forward.16}
  #allocation0 [shape = 'u32[]', space=smem, size = 0x4, offset = 0x4, fixed_abs, tag = 'smem constant byte address 0x4 - core index']
  #allocation1 [shape = 'u32[72,128]{1,0:T(1,128)}', space=vmem, size = 0x9000, scoped, tag = 'internal scratch']
  %s0 = inlined_call_operand.vmem [shape: bf16[64,48], index: 0, kind: input, shape index: {}]
  %s1 = inlined_call_operand.vmem [shape: bf16[48,256], index: 1, kind: input, shape index: {}]
  %s2 = inlined_call_operand.vmem [shape: f32[1,256], index: 2, kind: input, shape index: {}]
  %s3 = inlined_call_operand.vmem [shape: f32[64,256], index: 3, kind: output, shape index: {}]
  %s4 = sld [smem:[#allocation0]]
  $region22: #{vae_forward.16} parent=0
    _
  %s6 = ssub.s32 1, %s4
  %s7 = scalar_select 0, %s6, %s4
  // Predicated region
  $region2: #{vae_forward.16} parent=0 // pred_check
    _
  $region3: #{vae_forward.16} parent=0 // pred_check_branch
    %9 = sbr.rel (0) target = $region5
  $region4: #{vae_forward.16} parent=0 // pred_region
    _
  $region5: #{vae_forward.16} parent=0 // pred_fallthru
    _
  // Predicated region
  $region6: #{vae_forward.16} parent=0 // pred_check
    _
  $region7: #{vae_forward.16} parent=0 // pred_check_branch
    %11 = sbr.rel (0) target = $region9
  $region8: #{vae_forward.16} parent=0 // pred_region
    _
  $region9: #{vae_forward.16} parent=0 // pred_fallthru
    _
  // Predicated region
  $region10: #{vae_forward.16} parent=0 // pred_check
    _
  $region11: #{vae_forward.16} parent=0 // pred_check_branch
    %13 = sbr.rel (0) target = $region13
  $region12: #{vae_forward.16} parent=0 // pred_region
    _
  $region13: #{vae_forward.16} parent=0 // pred_fallthru
    _
  %v15 = vld [vmem:[%s0] sm:$0xf]
  %v16 = vld [vmem:[%s0 + $0x4] sm:$0xf]
  %v17 = vld [vmem:[%s0 + $0x8] sm:$0xf]
  %v18 = vld [vmem:[%s0 + $0xc] sm:$0xf]
  %v19 = vld [vmem:[%s0 + $0x10] sm:$0xf]
  %v20 = vld [vmem:[%s0 + $0x14] sm:$0xf]
  %v21 = vld [vmem:[%s0 + $0x18] sm:$0xf]
  %v22 = vld [vmem:[%s0 + $0x1c] sm:$0xf]
  %v23 = vld [vmem:[%s1] sm:$0xff]
  %v24 = vld [vmem:[%s1 + $0x8] sm:$0xff]
  %v25 = vld [vmem:[%s1 + $0x10] sm:$0xff]
  %v26 = vld [vmem:[%s1 + $0x18] sm:$0xff]
  %v27 = vld [vmem:[%s1 + $0x20] sm:$0xff]
  %v28 = vld [vmem:[%s1 + $0x28] sm:$0xff]
  %v29 = vld [vmem:[%s2] sm:$0x3]
  %v31 = vperm.slane %v29, 0
  %v32 = vperm.slane %v29, 1
  %v43 = vunpack.c.l.b16 %v15
  %v44 = vunpack.c.l.b16 %v16
  %v45 = vunpack.c.l.b16 %v17
  %v46 = vunpack.c.l.b16 %v18
  %v47 = vunpack.c.l.b16 %v19
  %v48 = vunpack.c.l.b16 %v20
  %v49 = vunpack.c.l.b16 %v21
  %v50 = vunpack.c.l.b16 %v22
  %v51 = vpack.c.b16 %v44, %v43
  %v52 = vpack.c.b16 %v46, %v45
  %v53 = vpack.c.b16 %v48, %v47
  %v54 = vpack.c.b16 %v50, %v49
  %v61 = vunpack.c.l.b16 %v23
  %v62 = vunpack.c.h.b16 %v23
  %v63 = vunpack.c.l.b16 %v24
  %v64 = vunpack.c.h.b16 %v24
  %v65 = vunpack.c.l.b16 %v25
  %v66 = vunpack.c.h.b16 %v25
  %v67 = vunpack.c.l.b16 %v26
  %v68 = vunpack.c.h.b16 %v26
  %v69 = vunpack.c.l.b16 %v27
  %v70 = vunpack.c.h.b16 %v27
  %v71 = vunpack.c.l.b16 %v28
  %v72 = vunpack.c.h.b16 %v28
  %v73 = vpack.c.b16 %v63, %v61
  %v74 = vpack.c.b16 %v64, %v62
  %v75 = vpack.c.b16 %v67, %v65
  %v76 = vpack.c.b16 %v68, %v66
  %v77 = vpack.c.b16 %v71, %v69
  %v78 = vpack.c.b16 %v72, %v70
  %vm85 = vcmask 392192
  %v87 = vsel %vm85, %v51, 0
  %v90 = vsel %vm85, %v52, 0
  %v93 = vsel %vm85, %v53, 0
  %v96 = vsel %vm85, %v54, 0
  %98 = vmatpush.bf16.msra.mxu0 0
  %99 = vmatpush.bf16.msra.mxu0 0
  %100 = vmatpush.bf16.msra.mxu0 0
  %101 = vmatpush.bf16.msra.mxu0 0
  %102 = vmatpush.bf16.msra.mxu0 0
  %103 = vmatpush.bf16.msra.mxu0 %v77
  %104 = vmatpush.bf16.msra.mxu0 %v75
  %105 = vmatpush.bf16.msra.mxu0 %v73
  %106 = vmatmul.bf16.gmra.mxu0 %v87
  %v107 = vpop.f32.mrf.mxu0
  %v108 = vadd.f32 %v31, %v107
  %v109 = vpop.f32.mrf.mxu0
  %v110 = vadd.f32 %v31, %v109
  %111 = vmatmul.bf16.gmra.mxu0 %v90
  %v112 = vpop.f32.mrf.mxu0
  %v113 = vadd.f32 %v31, %v112
  %v114 = vpop.f32.mrf.mxu0
  %v115 = vadd.f32 %v31, %v114
  %116 = vmatmul.bf16.gmra.mxu0 %v93
  %v117 = vpop.f32.mrf.mxu0
  %v118 = vadd.f32 %v31, %v117
  %v119 = vpop.f32.mrf.mxu0
  %v120 = vadd.f32 %v31, %v119
  %121 = vmatmul.bf16.gmra.mxu0 %v96
  %v122 = vpop.f32.mrf.mxu0
  %v123 = vadd.f32 %v31, %v122
  %v124 = vpop.f32.mrf.mxu0
  %v125 = vadd.f32 %v31, %v124
  %126 = vdwg.mxu0
  %127 = vmatpush.bf16.msra.mxu0 0
  %128 = vmatpush.bf16.msra.mxu0 0
  %129 = vmatpush.bf16.msra.mxu0 0
  %130 = vmatpush.bf16.msra.mxu0 0
  %131 = vmatpush.bf16.msra.mxu0 0
  %132 = vmatpush.bf16.msra.mxu0 %v78
  %133 = vmatpush.bf16.msra.mxu0 %v76
  %134 = vmatpush.bf16.msra.mxu0 %v74
  %135 = vmatmul.bf16.gmra.mxu0 %v87
  %v136 = vpop.f32.mrf.mxu0
  %v137 = vadd.f32 %v32, %v136
  %v138 = vpop.f32.mrf.mxu0
  %v139 = vadd.f32 %v32, %v138
  %140 = vmatmul.bf16.gmra.mxu0 %v90
  %v141 = vpop.f32.mrf.mxu0
  %v142 = vadd.f32 %v32, %v141
  %v143 = vpop.f32.mrf.mxu0
  %v144 = vadd.f32 %v32, %v143
  %145 = vmatmul.bf16.gmra.mxu0 %v93
  %v146 = vpop.f32.mrf.mxu0
  %v147 = vadd.f32 %v32, %v146
  %v148 = vpop.f32.mrf.mxu0
  %v149 = vadd.f32 %v32, %v148
  %150 = vmatmul.bf16.gmra.mxu0 %v96
  %v151 = vpop.f32.mrf.mxu0
  %v152 = vadd.f32 %v32, %v151
  %v153 = vpop.f32.mrf.mxu0
  %v154 = vadd.f32 %v32, %v153
  %155 = vdwg.mxu0
  %156 = vst [vmem:[%s3] sm:$0xff] %v108
  %157 = vst [vmem:[%s3 + $0x8] sm:$0xff] %v137
  %158 = vst [vmem:[%s3 + $0x10] sm:$0xff] %v110
  %159 = vst [vmem:[%s3 + $0x18] sm:$0xff] %v139
  %160 = vst [vmem:[%s3 + $0x20] sm:$0xff] %v113
  %161 = vst [vmem:[%s3 + $0x28] sm:$0xff] %v142
  %162 = vst [vmem:[%s3 + $0x30] sm:$0xff] %v115
  %163 = vst [vmem:[%s3 + $0x38] sm:$0xff] %v144
  %164 = vst [vmem:[%s3 + $0x40] sm:$0xff] %v118
  %165 = vst [vmem:[%s3 + $0x48] sm:$0xff] %v147
  %166 = vst [vmem:[%s3 + $0x50] sm:$0xff] %v120
  %167 = vst [vmem:[%s3 + $0x58] sm:$0xff] %v149
  %168 = vst [vmem:[%s3 + $0x60] sm:$0xff] %v123
  %169 = vst [vmem:[%s3 + $0x68] sm:$0xff] %v152
  %170 = vst [vmem:[%s3 + $0x70] sm:$0xff] %v125
  %171 = vst [vmem:[%s3 + $0x78] sm:$0xff] %v154
  // Predicated region
  $region14: #{vae_forward.16} parent=0 // pred_check
    _
  $region15: #{vae_forward.16} parent=0 // pred_check_branch
    %173 = sbr.rel (0) target = $region17
  $region16: #{vae_forward.16} parent=0 // pred_region
    _
  $region17: #{vae_forward.16} parent=0 // pred_fallthru
    _
  // Predicated region
  $region18: #{vae_forward.16} parent=0 // pred_check
    _
  $region19: #{vae_forward.16} parent=0 // pred_check_branch
    %175 = sbr.rel (0) target = $region21
  $region20: #{vae_forward.16} parent=0 // pred_region
    _
  $region21: #{vae_forward.16} parent=0 // pred_fallthru
    _

// kernel: vae_forward.17
$region0: #{vae_forward.17}
  #allocation0 [shape = 'u32[]', space=smem, size = 0x4, offset = 0x4, fixed_abs, tag = 'smem constant byte address 0x4 - core index']
  #allocation1 [shape = 'u32[72,128]{1,0:T(1,128)}', space=vmem, size = 0x9000, scoped, tag = 'internal scratch']
  %s0 = inlined_call_operand.vmem [shape: bf16[392,288], index: 0, kind: input, shape index: {}]
  %s1 = inlined_call_operand.vmem [shape: bf16[288,128], index: 1, kind: input, shape index: {}]
  %s2 = inlined_call_operand.vmem [shape: f32[1,128], index: 2, kind: input, shape index: {}]
  %s3 = inlined_call_operand.vmem [shape: f32[392,128], index: 3, kind: output, shape index: {}]
  %s4 = sld [smem:[#allocation0]]
  $region22: #{vae_forward.17} parent=0
    _
  %s6 = ssub.s32 1, %s4
  %s7 = scalar_select 0, %s6, %s4
  // Predicated region
  $region2: #{vae_forward.17} parent=0 // pred_check
    _
  $region3: #{vae_forward.17} parent=0 // pred_check_branch
    %9 = sbr.rel (0) target = $region5
  $region4: #{vae_forward.17} parent=0 // pred_region
    _
  $region5: #{vae_forward.17} parent=0 // pred_fallthru
    _
  // Predicated region
  $region6: #{vae_forward.17} parent=0 // pred_check
    _
  $region7: #{vae_forward.17} parent=0 // pred_check_branch
    %11 = sbr.rel (0) target = $region9
  $region8: #{vae_forward.17} parent=0 // pred_region
    _
  $region9: #{vae_forward.17} parent=0 // pred_fallthru
    _
  // Predicated region
  $region10: #{vae_forward.17} parent=0 // pred_check
    _
  $region11: #{vae_forward.17} parent=0 // pred_check_branch
    %13 = sbr.rel (0) target = $region13
  $region12: #{vae_forward.17} parent=0 // pred_region
    _
  $region13: #{vae_forward.17} parent=0 // pred_fallthru
    _
  %v15 = vld [vmem:[%s0] sm:$0xff]
  %v16 = vld [vmem:[%s0 + $0x8] sm:$0xf]
  %v17 = vld [vmem:[%s0 + $0xc] sm:$0xff]
  %v18 = vld [vmem:[%s0 + $0x14] sm:$0xf]
  %v19 = vld [vmem:[%s0 + $0x18] sm:$0xff]
  %v20 = vld [vmem:[%s0 + $0x20] sm:$0xf]
  %v21 = vld [vmem:[%s0 + $0x24] sm:$0xff]
  %v22 = vld [vmem:[%s0 + $0x2c] sm:$0xf]
  %v23 = vld [vmem:[%s0 + $0x30] sm:$0xff]
  %v24 = vld [vmem:[%s0 + $0x38] sm:$0xf]
  %v25 = vld [vmem:[%s0 + $0x3c] sm:$0xff]
  %v26 = vld [vmem:[%s0 + $0x44] sm:$0xf]
  %v27 = vld [vmem:[%s0 + $0x48] sm:$0xff]
  %v28 = vld [vmem:[%s0 + $0x50] sm:$0xf]
  %v29 = vld [vmem:[%s0 + $0x54] sm:$0xff]
  %v30 = vld [vmem:[%s0 + $0x5c] sm:$0xf]
  %v31 = vld [vmem:[%s0 + $0x60] sm:$0xff]
  %v32 = vld [vmem:[%s0 + $0x68] sm:$0xf]
  %v33 = vld [vmem:[%s0 + $0x6c] sm:$0xff]
  %v34 = vld [vmem:[%s0 + $0x74] sm:$0xf]
  %v35 = vld [vmem:[%s0 + $0x78] sm:$0xff]
  %v36 = vld [vmem:[%s0 + $0x80] sm:$0xf]
  %v37 = vld [vmem:[%s0 + $0x84] sm:$0xff]
  %v38 = vld [vmem:[%s0 + $0x8c] sm:$0xf]
  %v39 = vld [vmem:[%s0 + $0x90] sm:$0xff]
  %v40 = vld [vmem:[%s0 + $0x98] sm:$0xf]
  %v41 = vld [vmem:[%s0 + $0x9c] sm:$0xff]
  %v42 = vld [vmem:[%s0 + $0xa4] sm:$0xf]
  %v43 = vld [vmem:[%s0 + $0xa8] sm:$0xff]
  %v44 = vld [vmem:[%s0 + $0xb0] sm:$0xf]
  %v45 = vld [vmem:[%s0 + $0xb4] sm:$0xff]
  %v46 = vld [vmem:[%s0 + $0xbc] sm:$0xf]
  %v47 = vld [vmem:[%s0 + $0xc0] sm:$0xff]
  %v48 = vld [vmem:[%s0 + $0xc8] sm:$0xf]
  %v49 = vld [vmem:[%s0 + $0xcc] sm:$0xff]
  %v50 = vld [vmem:[%s0 + $0xd4] sm:$0xf]
  %v51 = vld [vmem:[%s0 + $0xd8] sm:$0xff]
  %v52 = vld [vmem:[%s0 + $0xe0] sm:$0xf]
  %v53 = vld [vmem:[%s0 + $0xe4] sm:$0xff]
  %v54 = vld [vmem:[%s0 + $0xec] sm:$0xf]
  %v55 = vld [vmem:[%s0 + $0xf0] sm:$0xff]
  %v56 = vld [vmem:[%s0 + $0xf8] sm:$0xf]
  %v57 = vld [vmem:[%s0 + $0xfc] sm:$0xff]
  %v58 = vld [vmem:[%s0 + $0x104] sm:$0xf]
  %v59 = vld [vmem:[%s0 + $0x108] sm:$0xff]
  %v60 = vld [vmem:[%s0 + $0x110] sm:$0xf]
  %v61 = vld [vmem:[%s0 + $0x114] sm:$0xff]
  %v62 = vld [vmem:[%s0 + $0x11c] sm:$0xf]
  %v63 = vld [vmem:[%s0 + $0x120] sm:$0xff]
  %v64 = vld [vmem:[%s0 + $0x128] sm:$0xf]
  %v65 = vld [vmem:[%s0 + $0x12c] sm:$0xff]
  %v66 = vld [vmem:[%s0 + $0x134] sm:$0xf]
  %v67 = vld [vmem:[%s0 + $0x138] sm:$0xff]
  %v68 = vld [vmem:[%s0 + $0x140] sm:$0xf]
  %v69 = vld [vmem:[%s0 + $0x144] sm:$0xff]
  %v70 = vld [vmem:[%s0 + $0x14c] sm:$0xf]
  %v71 = vld [vmem:[%s0 + $0x150] sm:$0xff]
  %v72 = vld [vmem:[%s0 + $0x158] sm:$0xf]
  %v73 = vld [vmem:[%s0 + $0x15c] sm:$0xff]
  %v74 = vld [vmem:[%s0 + $0x164] sm:$0xf]
  %v75 = vld [vmem:[%s0 + $0x168] sm:$0xff]
  %v76 = vld [vmem:[%s0 + $0x170] sm:$0xf]
  %v77 = vld [vmem:[%s0 + $0x174] sm:$0xff]
  %v78 = vld [vmem:[%s0 + $0x17c] sm:$0xf]
  %v79 = vld [vmem:[%s0 + $0x180] sm:$0xff]
  %v80 = vld [vmem:[%s0 + $0x188] sm:$0xf]
  %v81 = vld [vmem:[%s0 + $0x18c] sm:$0xff]
  %v82 = vld [vmem:[%s0 + $0x194] sm:$0xf]
  %v83 = vld [vmem:[%s0 + $0x198] sm:$0xff]
  %v84 = vld [vmem:[%s0 + $0x1a0] sm:$0xf]
  %v85 = vld [vmem:[%s0 + $0x1a4] sm:$0xff]
  %v86 = vld [vmem:[%s0 + $0x1ac] sm:$0xf]
  %v87 = vld [vmem:[%s0 + $0x1b0] sm:$0xff]
  %v88 = vld [vmem:[%s0 + $0x1b8] sm:$0xf]
  %v89 = vld [vmem:[%s0 + $0x1bc] sm:$0xff]
  %v90 = vld [vmem:[%s0 + $0x1c4] sm:$0xf]
  %v91 = vld [vmem:[%s0 + $0x1c8] sm:$0xff]
  %v92 = vld [vmem:[%s0 + $0x1d0] sm:$0xf]
  %v93 = vld [vmem:[%s0 + $0x1d4] sm:$0xff]
  %v94 = vld [vmem:[%s0 + $0x1dc] sm:$0xf]
  %v95 = vld [vmem:[%s0 + $0x1e0] sm:$0xff]
  %v96 = vld [vmem:[%s0 + $0x1e8] sm:$0xf]
  %v97 = vld [vmem:[%s0 + $0x1ec] sm:$0xff]
  %v98 = vld [vmem:[%s0 + $0x1f4] sm:$0xf]
  %v99 = vld [vmem:[%s0 + $0x1f8] sm:$0xff]
  %v100 = vld [vmem:[%s0 + $0x200] sm:$0xf]
  %v101 = vld [vmem:[%s0 + $0x204] sm:$0xff]
  %v102 = vld [vmem:[%s0 + $0x20c] sm:$0xf]
  %v103 = vld [vmem:[%s0 + $0x210] sm:$0xff]
  %v104 = vld [vmem:[%s0 + $0x218] sm:$0xf]
  %v105 = vld [vmem:[%s0 + $0x21c] sm:$0xff]
  %v106 = vld [vmem:[%s0 + $0x224] sm:$0xf]
  %v107 = vld [vmem:[%s0 + $0x228] sm:$0xff]
  %v108 = vld [vmem:[%s0 + $0x230] sm:$0xf]
  %v109 = vld [vmem:[%s0 + $0x234] sm:$0xff]
  %v110 = vld [vmem:[%s0 + $0x23c] sm:$0xf]
  %v111 = vld [vmem:[%s0 + $0x240] sm:$0xff]
  %v112 = vld [vmem:[%s0 + $0x248] sm:$0xf]
  %v113 = vld [vmem:[%s1] sm:$0xf]
  %v114 = vld [vmem:[%s1 + $0x4] sm:$0xf]
  %v115 = vld [vmem:[%s1 + $0x8] sm:$0xf]
  %v116 = vld [vmem:[%s1 + $0xc] sm:$0xf]
  %v117 = vld [vmem:[%s1 + $0x10] sm:$0xf]
  %v118 = vld [vmem:[%s1 + $0x14] sm:$0xf]
  %v119 = vld [vmem:[%s1 + $0x18] sm:$0xf]
  %v120 = vld [vmem:[%s1 + $0x1c] sm:$0xf]
  %v121 = vld [vmem:[%s1 + $0x20] sm:$0xf]
  %v122 = vld [vmem:[%s1 + $0x24] sm:$0xf]
  %v123 = vld [vmem:[%s1 + $0x28] sm:$0xf]
  %v124 = vld [vmem:[%s1 + $0x2c] sm:$0xf]
  %v125 = vld [vmem:[%s1 + $0x30] sm:$0xf]
  %v126 = vld [vmem:[%s1 + $0x34] sm:$0xf]
  %v127 = vld [vmem:[%s1 + $0x38] sm:$0xf]
  %v128 = vld [vmem:[%s1 + $0x3c] sm:$0xf]
  %v129 = vld [vmem:[%s1 + $0x40] sm:$0xf]
  %v130 = vld [vmem:[%s1 + $0x44] sm:$0xf]
  %v131 = vld [vmem:[%s1 + $0x48] sm:$0xf]
  %v132 = vld [vmem:[%s1 + $0x4c] sm:$0xf]
  %v133 = vld [vmem:[%s1 + $0x50] sm:$0xf]
  %v134 = vld [vmem:[%s1 + $0x54] sm:$0xf]
  %v135 = vld [vmem:[%s1 + $0x58] sm:$0xf]
  %v136 = vld [vmem:[%s1 + $0x5c] sm:$0xf]
  %v137 = vld [vmem:[%s1 + $0x60] sm:$0xf]
  %v138 = vld [vmem:[%s1 + $0x64] sm:$0xf]
  %v139 = vld [vmem:[%s1 + $0x68] sm:$0xf]
  %v140 = vld [vmem:[%s1 + $0x6c] sm:$0xf]
  %v141 = vld [vmem:[%s1 + $0x70] sm:$0xf]
  %v142 = vld [vmem:[%s1 + $0x74] sm:$0xf]
  %v143 = vld [vmem:[%s1 + $0x78] sm:$0xf]
  %v144 = vld [vmem:[%s1 + $0x7c] sm:$0xf]
  %v145 = vld [vmem:[%s1 + $0x80] sm:$0xf]
  %v146 = vld [vmem:[%s1 + $0x84] sm:$0xf]
  %v147 = vld [vmem:[%s1 + $0x88] sm:$0xf]
  %v148 = vld [vmem:[%s1 + $0x8c] sm:$0xf]
  %v149 = vld [vmem:[%s2] sm:$0x1]
  %v151 = vperm.slane %v149, 0
  %v251 = vunpack.c.l.b16 %v15
  %v252 = vunpack.c.h.b16 %v15
  %v253 = vunpack.c.l.b16 %v16
  %v254 = vunpack.c.l.b16 %v17
  %v255 = vunpack.c.h.b16 %v17
  %v256 = vunpack.c.l.b16 %v18
  %v257 = vunpack.c.l.b16 %v19
  %v258 = vunpack.c.h.b16 %v19
  %v259 = vunpack.c.l.b16 %v20
  %v260 = vunpack.c.l.b16 %v21
  %v261 = vunpack.c.h.b16 %v21
  %v262 = vunpack.c.l.b16 %v22
  %v263 = vunpack.c.l.b16 %v23
  %v264 = vunpack.c.h.b16 %v23
  %v265 = vunpack.c.l.b16 %v24
  %v266 = vunpack.c.l.b16 %v25
  %v267 = vunpack.c.h.b16 %v25
  %v268 = vunpack.c.l.b16 %v26
  %v269 = vunpack.c.l.b16 %v27
  %v270 = vunpack.c.h.b16 %v27
  %v271 = vunpack.c.l.b16 %v28
  %v272 = vunpack.c.l.b16 %v29
  %v273 = vunpack.c.h.b16 %v29
  %v274 = vunpack.c.l.b16 %v30
  %v275 = vunpack.c.l.b16 %v31
  %v276 = vunpack.c.h.b16 %v31
  %v277 = vunpack.c.l.b16 %v32
  %v278 = vunpack.c.l.b16 %v33
  %v279 = vunpack.c.h.b16 %v33
  %v280 = vunpack.c.l.b16 %v34
  %v281 = vunpack.c.l.b16 %v35
  %v282 = vunpack.c.h.b16 %v35
  %v283 = vunpack.c.l.b16 %v36
  %v284 = vunpack.c.l.b16 %v37
  %v285 = vunpack.c.h.b16 %v37
  %v286 = vunpack.c.l.b16 %v38
  %v287 = vunpack.c.l.b16 %v39
  %v288 = vunpack.c.h.b16 %v39
  %v289 = vunpack.c.l.b16 %v40
  %v290 = vunpack.c.l.b16 %v41
  %v291 = vunpack.c.h.b16 %v41
  %v292 = vunpack.c.l.b16 %v42
  %v293 = vunpack.c.l.b16 %v43
  %v294 = vunpack.c.h.b16 %v43
  %v295 = vunpack.c.l.b16 %v44
  %v296 = vunpack.c.l.b16 %v45
  %v297 = vunpack.c.h.b16 %v45
  %v298 = vunpack.c.l.b16 %v46
  %v299 = vunpack.c.l.b16 %v47
  %v300 = vunpack.c.h.b16 %v47
  %v301 = vunpack.c.l.b16 %v48
  %v302 = vunpack.c.l.b16 %v49
  %v303 = vunpack.c.h.b16 %v49
  %v304 = vunpack.c.l.b16 %v50
  %v305 = vunpack.c.l.b16 %v51
  %v306 = vunpack.c.h.b16 %v51
  %v307 = vunpack.c.l.b16 %v52
  %v308 = vunpack.c.l.b16 %v53
  %v309 = vunpack.c.h.b16 %v53
  %v310 = vunpack.c.l.b16 %v54
  %v311 = vunpack.c.l.b16 %v55
  %v312 = vunpack.c.h.b16 %v55
  %v313 = vunpack.c.l.b16 %v56
  %v314 = vunpack.c.l.b16 %v57
  %v315 = vunpack.c.h.b16 %v57
  %v316 = vunpack.c.l.b16 %v58
  %v317 = vunpack.c.l.b16 %v59
  %v318 = vunpack.c.h.b16 %v59
  %v319 = vunpack.c.l.b16 %v60
  %v320 = vunpack.c.l.b16 %v61
  %v321 = vunpack.c.h.b16 %v61
  %v322 = vunpack.c.l.b16 %v62
  %v323 = vunpack.c.l.b16 %v63
  %v324 = vunpack.c.h.b16 %v63
  %v325 = vunpack.c.l.b16 %v64
  %v326 = vunpack.c.l.b16 %v65
  %v327 = vunpack.c.h.b16 %v65
  %v328 = vunpack.c.l.b16 %v66
  %v329 = vunpack.c.l.b16 %v67
  %v330 = vunpack.c.h.b16 %v67
  %v331 = vunpack.c.l.b16 %v68
  %v332 = vunpack.c.l.b16 %v69
  %v333 = vunpack.c.h.b16 %v69
  %v334 = vunpack.c.l.b16 %v70
  %v335 = vunpack.c.l.b16 %v71
  %v336 = vunpack.c.h.b16 %v71
  %v337 = vunpack.c.l.b16 %v72
  %v338 = vunpack.c.l.b16 %v73
  %v339 = vunpack.c.h.b16 %v73
  %v340 = vunpack.c.l.b16 %v74
  %v341 = vunpack.c.l.b16 %v75
  %v342 = vunpack.c.h.b16 %v75
  %v343 = vunpack.c.l.b16 %v76
  %v344 = vunpack.c.l.b16 %v77
  %v345 = vunpack.c.h.b16 %v77
  %v346 = vunpack.c.l.b16 %v78
  %v347 = vunpack.c.l.b16 %v79
  %v348 = vunpack.c.h.b16 %v79
  %v349 = vunpack.c.l.b16 %v80
  %v350 = vunpack.c.l.b16 %v81
  %v351 = vunpack.c.h.b16 %v81
  %v352 = vunpack.c.l.b16 %v82
  %v353 = vunpack.c.l.b16 %v83
  %v354 = vunpack.c.h.b16 %v83
  %v355 = vunpack.c.l.b16 %v84
  %v356 = vunpack.c.l.b16 %v85
  %v357 = vunpack.c.h.b16 %v85
  %v358 = vunpack.c.l.b16 %v86
  %v359 = vunpack.c.l.b16 %v87
  %v360 = vunpack.c.h.b16 %v87
  %v361 = vunpack.c.l.b16 %v88
  %v362 = vunpack.c.l.b16 %v89
  %v363 = vunpack.c.h.b16 %v89
  %v364 = vunpack.c.l.b16 %v90
  %v365 = vunpack.c.l.b16 %v91
  %v366 = vunpack.c.h.b16 %v91
  %v367 = vunpack.c.l.b16 %v92
  %v368 = vunpack.c.l.b16 %v93
  %v369 = vunpack.c.h.b16 %v93
  %v370 = vunpack.c.l.b16 %v94
  %v371 = vunpack.c.l.b16 %v95
  %v372 = vunpack.c.h.b16 %v95
  %v373 = vunpack.c.l.b16 %v96
  %v374 = vunpack.c.l.b16 %v97
  %v375 = vunpack.c.h.b16 %v97
  %v376 = vunpack.c.l.b16 %v98
  %v377 = vunpack.c.l.b16 %v99
  %v378 = vunpack.c.h.b16 %v99
  %v379 = vunpack.c.l.b16 %v100
  %v380 = vunpack.c.l.b16 %v101
  %v381 = vunpack.c.h.b16 %v101
  %v382 = vunpack.c.l.b16 %v102
  %v383 = vunpack.c.l.b16 %v103
  %v384 = vunpack.c.h.b16 %v103
  %v385 = vunpack.c.l.b16 %v104
  %v386 = vunpack.c.l.b16 %v105
  %v387 = vunpack.c.h.b16 %v105
  %v388 = vunpack.c.l.b16 %v106
  %v389 = vunpack.c.l.b16 %v107
  %v390 = vunpack.c.h.b16 %v107
  %v391 = vunpack.c.l.b16 %v108
  %v392 = vunpack.c.l.b16 %v109
  %v393 = vunpack.c.h.b16 %v109
  %v394 = vunpack.c.l.b16 %v110
  %v395 = vunpack.c.l.b16 %v111
  %v396 = vunpack.c.h.b16 %v111
  %v397 = vunpack.c.l.b16 %v112
  %v398 = vpack.c.b16 %v254, %v251
  %v399 = vpack.c.b16 %v255, %v252
  %v400 = vpack.c.b16 %v256, %v253
  %v401 = vpack.c.b16 %v260, %v257
  %v402 = vpack.c.b16 %v261, %v258
  %v403 = vpack.c.b16 %v262, %v259
  %v404 = vpack.c.b16 %v266, %v263
  %v405 = vpack.c.b16 %v267, %v264
  %v406 = vpack.c.b16 %v268, %v265
  %v407 = vpack.c.b16 %v272, %v269
  %v408 = vpack.c.b16 %v273, %v270
  %v409 = vpack.c.b16 %v274, %v271
  %v410 = vpack.c.b16 %v278, %v275
  %v411 = vpack.c.b16 %v279, %v276
  %v412 = vpack.c.b16 %v280, %v277
  %v413 = vpack.c.b16 %v284, %v281
  %v414 = vpack.c.b16 %v285, %v282
  %v415 = vpack.c.b16 %v286, %v283
  %v416 = vpack.c.b16 %v290, %v287
  %v417 = vpack.c.b16 %v291, %v288
  %v418 = vpack.c.b16 %v292, %v289
  %v419 = vpack.c.b16 %v296, %v293
  %v420 = vpack.c.b16 %v297, %v294
  %v421 = vpack.c.b16 %v298, %v295
  %v422 = vpack.c.b16 %v302, %v299
  %v423 = vpack.c.b16 %v303, %v300
  %v424 = vpack.c.b16 %v304, %v301
  %v425 = vpack.c.b16 %v308, %v305
  %v426 = vpack.c.b16 %v309, %v306
  %v427 = vpack.c.b16 %v310, %v307
  %v428 = vpack.c.b16 %v314, %v311
  %v429 = vpack.c.b16 %v315, %v312
  %v430 = vpack.c.b16 %v316, %v313
  %v431 = vpack.c.b16 %v320, %v317
  %v432 = vpack.c.b16 %v321, %v318
  %v433 = vpack.c.b16 %v322, %v319
  %v434 = vpack.c.b16 %v326, %v323
  %v435 = vpack.c.b16 %v327, %v324
  %v436 = vpack.c.b16 %v328, %v325
  %v437 = vpack.c.b16 %v332, %v329
  %v438 = vpack.c.b16 %v333, %v330
  %v439 = vpack.c.b16 %v334, %v331
  %v440 = vpack.c.b16 %v338, %v335
  %v441 = vpack.c.b16 %v339, %v336
  %v442 = vpack.c.b16 %v340, %v337
  %v443 = vpack.c.b16 %v344, %v341
  %v444 = vpack.c.b16 %v345, %v342
  %v445 = vpack.c.b16 %v346, %v343
  %v446 = vpack.c.b16 %v350, %v347
  %v447 = vpack.c.b16 %v351, %v348
  %v448 = vpack.c.b16 %v352, %v349
  %v449 = vpack.c.b16 %v356, %v353
  %v450 = vpack.c.b16 %v357, %v354
  %v451 = vpack.c.b16 %v358, %v355
  %v452 = vpack.c.b16 %v362, %v359
  %v453 = vpack.c.b16 %v363, %v360
  %v454 = vpack.c.b16 %v364, %v361
  %v455 = vpack.c.b16 %v368, %v365
  %v456 = vpack.c.b16 %v369, %v366
  %v457 = vpack.c.b16 %v370, %v367
  %v458 = vpack.c.b16 %v374, %v371
  %v459 = vpack.c.b16 %v375, %v372
  %v460 = vpack.c.b16 %v376, %v373
  %v461 = vpack.c.b16 %v380, %v377
  %v462 = vpack.c.b16 %v381, %v378
  %v463 = vpack.c.b16 %v382, %v379
  %v464 = vpack.c.b16 %v386, %v383
  %v465 = vpack.c.b16 %v387, %v384
  %v466 = vpack.c.b16 %v388, %v385
  %v467 = vpack.c.b16 %v392, %v389
  %v468 = vpack.c.b16 %v393, %v390
  %v469 = vpack.c.b16 %v394, %v391
  %v470 = vpack.c.b16 %v395, %v395
  %v471 = vpack.c.b16 %v396, %v396
  %v472 = vpack.c.b16 %v397, %v397
  %v559 = vunpack.c.l.b16 %v113
  %v560 = vunpack.c.l.b16 %v114
  %v561 = vunpack.c.l.b16 %v115
  %v562 = vunpack.c.l.b16 %v116
  %v563 = vunpack.c.l.b16 %v117
  %v564 = vunpack.c.l.b16 %v118
  %v565 = vunpack.c.l.b16 %v119
  %v566 = vunpack.c.l.b16 %v120
  %v567 = vunpack.c.l.b16 %v121
  %v568 = vunpack.c.l.b16 %v122
  %v569 = vunpack.c.l.b16 %v123
  %v570 = vunpack.c.l.b16 %v124
  %v571 = vunpack.c.l.b16 %v125
  %v572 = vunpack.c.l.b16 %v126
  %v573 = vunpack.c.l.b16 %v127
  %v574 = vunpack.c.l.b16 %v128
  %v575 = vunpack.c.l.b16 %v129
  %v576 = vunpack.c.l.b16 %v130
  %v577 = vunpack.c.l.b16 %v131
  %v578 = vunpack.c.l.b16 %v132
  %v579 = vunpack.c.l.b16 %v133
  %v580 = vunpack.c.l.b16 %v134
  %v581 = vunpack.c.l.b16 %v135
  %v582 = vunpack.c.l.b16 %v136
  %v583 = vunpack.c.l.b16 %v137
  %v584 = vunpack.c.l.b16 %v138
  %v585 = vunpack.c.l.b16 %v139
  %v586 = vunpack.c.l.b16 %v140
  %v587 = vunpack.c.l.b16 %v141
  %v588 = vunpack.c.l.b16 %v142
  %v589 = vunpack.c.l.b16 %v143
  %v590 = vunpack.c.l.b16 %v144
  %v591 = vunpack.c.l.b16 %v145
  %v592 = vunpack.c.l.b16 %v146
  %v593 = vunpack.c.l.b16 %v147
  %v594 = vunpack.c.l.b16 %v148
  %v595 = vpack.c.b16 %v560, %v559
  %v596 = vpack.c.b16 %v562, %v561
  %v597 = vpack.c.b16 %v564, %v563
  %v598 = vpack.c.b16 %v566, %v565
  %v599 = vpack.c.b16 %v568, %v567
  %v600 = vpack.c.b16 %v570, %v569
  %v601 = vpack.c.b16 %v572, %v571
  %v602 = vpack.c.b16 %v574, %v573
  %v603 = vpack.c.b16 %v576, %v575
  %v604 = vpack.c.b16 %v578, %v577
  %v605 = vpack.c.b16 %v580, %v579
  %v606 = vpack.c.b16 %v582, %v581
  %v607 = vpack.c.b16 %v584, %v583
  %v608 = vpack.c.b16 %v586, %v585
  %v609 = vpack.c.b16 %v588, %v587
  %v610 = vpack.c.b16 %v590, %v589
  %v611 = vpack.c.b16 %v592, %v591
  %v612 = vpack.c.b16 %v594, %v593
  %vm631 = vcmask 261120
  %v633 = vsel %vm631, %v400, 0
  %v636 = vsel %vm631, %v403, 0
  %v639 = vsel %vm631, %v406, 0
  %v642 = vsel %vm631, %v409, 0
  %v645 = vsel %vm631, %v412, 0
  %v648 = vsel %vm631, %v415, 0
  %v651 = vsel %vm631, %v418, 0
  %v654 = vsel %vm631, %v421, 0
  %v657 = vsel %vm631, %v424, 0
  %v660 = vsel %vm631, %v427, 0
  %v663 = vsel %vm631, %v430, 0
  %v666 = vsel %vm631, %v433, 0
  %v669 = vsel %vm631, %v436, 0
  %v672 = vsel %vm631, %v439, 0
  %v675 = vsel %vm631, %v442, 0
  %v678 = vsel %vm631, %v445, 0
  %v681 = vsel %vm631, %v448, 0
  %v684 = vsel %vm631, %v451, 0
  %v687 = vsel %vm631, %v454, 0
  %v690 = vsel %vm631, %v457, 0
  %v693 = vsel %vm631, %v460, 0
  %v696 = vsel %vm631, %v463, 0
  %v699 = vsel %vm631, %v466, 0
  %v702 = vsel %vm631, %v469, 0
  %v705 = vsel %vm631, %v472, 0
  %707 = vmatpush.bf16.msra.mxu0 %v602
  %708 = vmatpush.bf16.msra.mxu0 %v601
  %709 = vmatpush.bf16.msra.mxu0 %v600
  %710 = vmatpush.bf16.msra.mxu0 %v599
  %711 = vmatpush.bf16.msra.mxu0 %v598
  %712 = vmatpush.bf16.msra.mxu0 %v597
  %713 = vmatpush.bf16.msra.mxu0 %v596
  %714 = vmatpush.bf16.msra.mxu0 %v595
  %715 = vmatmul.bf16.gmra.mxu0 %v398
  %v716 = vpop.f32.mrf.mxu0
  %v717 = vadd.f32 %v151, %v716
  %v718 = vpop.f32.mrf.mxu0
  %v719 = vadd.f32 %v151, %v718
  %720 = vmatmul.bf16.gmra.mxu0 %v401
  %v721 = vpop.f32.mrf.mxu0
  %v722 = vadd.f32 %v151, %v721
  %v723 = vpop.f32.mrf.mxu0
  %v724 = vadd.f32 %v151, %v723
  %725 = vmatmul.bf16.gmra.mxu0 %v404
  %v726 = vpop.f32.mrf.mxu0
  %v727 = vadd.f32 %v151, %v726
  %v728 = vpop.f32.mrf.mxu0
  %v729 = vadd.f32 %v151, %v728
  %730 = vmatmul.bf16.gmra.mxu0 %v407
  %v731 = vpop.f32.mrf.mxu0
  %v732 = vadd.f32 %v151, %v731
  %v733 = vpop.f32.mrf.mxu0
  %v734 = vadd.f32 %v151, %v733
  %735 = vmatmul.bf16.gmra.mxu0 %v410
  %v736 = vpop.f32.mrf.mxu0
  %v737 = vadd.f32 %v151, %v736
  %v738 = vpop.f32.mrf.mxu0
  %v739 = vadd.f32 %v151, %v738
  %740 = vmatmul.bf16.gmra.mxu0 %v413
  %v741 = vpop.f32.mrf.mxu0
  %v742 = vadd.f32 %v151, %v741
  %v743 = vpop.f32.mrf.mxu0
  %v744 = vadd.f32 %v151, %v743
  %745 = vmatmul.bf16.gmra.mxu0 %v416
  %v746 = vpop.f32.mrf.mxu0
  %v747 = vadd.f32 %v151, %v746
  %v748 = vpop.f32.mrf.mxu0
  %v749 = vadd.f32 %v151, %v748
  %750 = vmatmul.bf16.gmra.mxu0 %v419
  %v751 = vpop.f32.mrf.mxu0
  %v752 = vadd.f32 %v151, %v751
  %v753 = vpop.f32.mrf.mxu0
  %v754 = vadd.f32 %v151, %v753
  %755 = vmatmul.bf16.gmra.mxu0 %v422
  %v756 = vpop.f32.mrf.mxu0
  %v757 = vadd.f32 %v151, %v756
  %v758 = vpop.f32.mrf.mxu0
  %v759 = vadd.f32 %v151, %v758
  %760 = vmatmul.bf16.gmra.mxu0 %v425
  %v761 = vpop.f32.mrf.mxu0
  %v762 = vadd.f32 %v151, %v761
  %v763 = vpop.f32.mrf.mxu0
  %v764 = vadd.f32 %v151, %v763
  %765 = vmatmul.bf16.gmra.mxu0 %v428
  %v766 = vpop.f32.mrf.mxu0
  %v767 = vadd.f32 %v151, %v766
  %v768 = vpop.f32.mrf.mxu0
  %v769 = vadd.f32 %v151, %v768
  %770 = vmatmul.bf16.gmra.mxu0 %v431
  %v771 = vpop.f32.mrf.mxu0
  %v772 = vadd.f32 %v151, %v771
  %v773 = vpop.f32.mrf.mxu0
  %v774 = vadd.f32 %v151, %v773
  %775 = vmatmul.bf16.gmra.mxu0 %v434
  %v776 = vpop.f32.mrf.mxu0
  %v777 = vadd.f32 %v151, %v776
  %v778 = vpop.f32.mrf.mxu0
  %v779 = vadd.f32 %v151, %v778
  %780 = vmatmul.bf16.gmra.mxu0 %v437
  %v781 = vpop.f32.mrf.mxu0
  %v782 = vadd.f32 %v151, %v781
  %v783 = vpop.f32.mrf.mxu0
  %v784 = vadd.f32 %v151, %v783
  %785 = vmatmul.bf16.gmra.mxu0 %v440
  %v786 = vpop.f32.mrf.mxu0
  %v787 = vadd.f32 %v151, %v786
  %v788 = vpop.f32.mrf.mxu0
  %v789 = vadd.f32 %v151, %v788
  %790 = vmatmul.bf16.gmra.mxu0 %v443
  %v791 = vpop.f32.mrf.mxu0
  %v792 = vadd.f32 %v151, %v791
  %v793 = vpop.f32.mrf.mxu0
  %v794 = vadd.f32 %v151, %v793
  %795 = vmatmul.bf16.gmra.mxu0 %v446
  %v796 = vpop.f32.mrf.mxu0
  %v797 = vadd.f32 %v151, %v796
  %v798 = vpop.f32.mrf.mxu0
  %v799 = vadd.f32 %v151, %v798
  %800 = vmatmul.bf16.gmra.mxu0 %v449
  %v801 = vpop.f32.mrf.mxu0
  %v802 = vadd.f32 %v151, %v801
  %v803 = vpop.f32.mrf.mxu0
  %v804 = vadd.f32 %v151, %v803
  %805 = vmatmul.bf16.gmra.mxu0 %v452
  %v806 = vpop.f32.mrf.mxu0
  %v807 = vadd.f32 %v151, %v806
  %v808 = vpop.f32.mrf.mxu0
  %v809 = vadd.f32 %v151, %v808
  %810 = vmatmul.bf16.gmra.mxu0 %v455
  %v811 = vpop.f32.mrf.mxu0
  %v812 = vadd.f32 %v151, %v811
  %v813 = vpop.f32.mrf.mxu0
  %v814 = vadd.f32 %v151, %v813
  %815 = vmatmul.bf16.gmra.mxu0 %v458
  %v816 = vpop.f32.mrf.mxu0
  %v817 = vadd.f32 %v151, %v816
  %v818 = vpop.f32.mrf.mxu0
  %v819 = vadd.f32 %v151, %v818
  %820 = vmatmul.bf16.gmra.mxu0 %v461
  %v821 = vpop.f32.mrf.mxu0
  %v822 = vadd.f32 %v151, %v821
  %v823 = vpop.f32.mrf.mxu0
  %v824 = vadd.f32 %v151, %v823
  %825 = vmatmul.bf16.gmra.mxu0 %v464
  %v826 = vpop.f32.mrf.mxu0
  %v827 = vadd.f32 %v151, %v826
  %v828 = vpop.f32.mrf.mxu0
  %v829 = vadd.f32 %v151, %v828
  %830 = vmatmul.bf16.gmra.mxu0 %v467
  %v831 = vpop.f32.mrf.mxu0
  %v832 = vadd.f32 %v151, %v831
  %v833 = vpop.f32.mrf.mxu0
  %v834 = vadd.f32 %v151, %v833
  %835 = vmatmul.bf16.gmra.mxu0 %v470
  %v836 = vpop.f32.mrf.mxu0
  %v837 = vadd.f32 %v151, %v836
  %v838 = vpop.f32.mrf.mxu0
  %839 = vdwg.mxu0
  %840 = vmatpush.bf16.msra.mxu0 %v610
  %841 = vmatpush.bf16.msra.mxu0 %v609
  %842 = vmatpush.bf16.msra.mxu0 %v608
  %843 = vmatpush.bf16.msra.mxu0 %v607
  %844 = vmatpush.bf16.msra.mxu0 %v606
  %845 = vmatpush.bf16.msra.mxu0 %v605
  %846 = vmatpush.bf16.msra.mxu0 %v604
  %847 = vmatpush.bf16.msra.mxu0 %v603
  %848 = vmatmul.bf16.gmra.mxu0 %v399
  %v849 = vpop.f32.mrf.mxu0
  %v850 = vadd.f32 %v717, %v849
  %v851 = vpop.f32.mrf.mxu0
  %v852 = vadd.f32 %v719, %v851
  %853 = vmatmul.bf16.gmra.mxu0 %v402
  %v854 = vpop.f32.mrf.mxu0
  %v855 = vadd.f32 %v722, %v854
  %v856 = vpop.f32.mrf.mxu0
  %v857 = vadd.f32 %v724, %v856
  %858 = vmatmul.bf16.gmra.mxu0 %v405
  %v859 = vpop.f32.mrf.mxu0
  %v860 = vadd.f32 %v727, %v859
  %v861 = vpop.f32.mrf.mxu0
  %v862 = vadd.f32 %v729, %v861
  %863 = vmatmul.bf16.gmra.mxu0 %v408
  %v864 = vpop.f32.mrf.mxu0
  %v865 = vadd.f32 %v732, %v864
  %v866 = vpop.f32.mrf.mxu0
  %v867 = vadd.f32 %v734, %v866
  %868 = vmatmul.bf16.gmra.mxu0 %v411
  %v869 = vpop.f32.mrf.mxu0
  %v870 = vadd.f32 %v737, %v869
  %v871 = vpop.f32.mrf.mxu0
  %v872 = vadd.f32 %v739, %v871
  %873 = vmatmul.bf16.gmra.mxu0 %v414
  %v874 = vpop.f32.mrf.mxu0
  %v875 = vadd.f32 %v742, %v874
  %v876 = vpop.f32.mrf.mxu0
  %v877 = vadd.f32 %v744, %v876
  %878 = vmatmul.bf16.gmra.mxu0 %v417
  %v879 = vpop.f32.mrf.mxu0
  %v880 = vadd.f32 %v747, %v879
  %v881 = vpop.f32.mrf.mxu0
  %v882 = vadd.f32 %v749, %v881
  %883 = vmatmul.bf16.gmra.mxu0 %v420
  %v884 = vpop.f32.mrf.mxu0
  %v885 = vadd.f32 %v752, %v884
  %v886 = vpop.f32.mrf.mxu0
  %v887 = vadd.f32 %v754, %v886
  %888 = vmatmul.bf16.gmra.mxu0 %v423
  %v889 = vpop.f32.mrf.mxu0
  %v890 = vadd.f32 %v757, %v889
  %v891 = vpop.f32.mrf.mxu0
  %v892 = vadd.f32 %v759, %v891
  %893 = vmatmul.bf16.gmra.mxu0 %v426
  %v894 = vpop.f32.mrf.mxu0
  %v895 = vadd.f32 %v762, %v894
  %v896 = vpop.f32.mrf.mxu0
  %v897 = vadd.f32 %v764, %v896
  %898 = vmatmul.bf16.gmra.mxu0 %v429
  %v899 = vpop.f32.mrf.mxu0
  %v900 = vadd.f32 %v767, %v899
  %v901 = vpop.f32.mrf.mxu0
  %v902 = vadd.f32 %v769, %v901
  %903 = vmatmul.bf16.gmra.mxu0 %v432
  %v904 = vpop.f32.mrf.mxu0
  %v905 = vadd.f32 %v772, %v904
  %v906 = vpop.f32.mrf.mxu0
  %v907 = vadd.f32 %v774, %v906
  %908 = vmatmul.bf16.gmra.mxu0 %v435
  %v909 = vpop.f32.mrf.mxu0
  %v910 = vadd.f32 %v777, %v909
  %v911 = vpop.f32.mrf.mxu0
  %v912 = vadd.f32 %v779, %v911
  %913 = vmatmul.bf16.gmra.mxu0 %v438
  %v914 = vpop.f32.mrf.mxu0
  %v915 = vadd.f32 %v782, %v914
  %v916 = vpop.f32.mrf.mxu0
  %v917 = vadd.f32 %v784, %v916
  %918 = vmatmul.bf16.gmra.mxu0 %v441
  %v919 = vpop.f32.mrf.mxu0
  %v920 = vadd.f32 %v787, %v919
  %v921 = vpop.f32.mrf.mxu0
  %v922 = vadd.f32 %v789, %v921
  %923 = vmatmul.bf16.gmra.mxu0 %v444
  %v924 = vpop.f32.mrf.mxu0
  %v925 = vadd.f32 %v792, %v924
  %v926 = vpop.f32.mrf.mxu0
  %v927 = vadd.f32 %v794, %v926
  %928 = vmatmul.bf16.gmra.mxu0 %v447
  %v929 = vpop.f32.mrf.mxu0
  %v930 = vadd.f32 %v797, %v929
  %v931 = vpop.f32.mrf.mxu0
  %v932 = vadd.f32 %v799, %v931
  %933 = vmatmul.bf16.gmra.mxu0 %v450
  %v934 = vpop.f32.mrf.mxu0
  %v935 = vadd.f32 %v802, %v934
  %v936 = vpop.f32.mrf.mxu0
  %v937 = vadd.f32 %v804, %v936
  %938 = vmatmul.bf16.gmra.mxu0 %v453
  %v939 = vpop.f32.mrf.mxu0
  %v940 = vadd.f32 %v807, %v939
  %v941 = vpop.f32.mrf.mxu0
  %v942 = vadd.f32 %v809, %v941
  %943 = vmatmul.bf16.gmra.mxu0 %v456
  %v944 = vpop.f32.mrf.mxu0
  %v945 = vadd.f32 %v812, %v944
  %v946 = vpop.f32.mrf.mxu0
  %v947 = vadd.f32 %v814, %v946
  %948 = vmatmul.bf16.gmra.mxu0 %v459
  %v949 = vpop.f32.mrf.mxu0
  %v950 = vadd.f32 %v817, %v949
  %v951 = vpop.f32.mrf.mxu0
  %v952 = vadd.f32 %v819, %v951
  %953 = vmatmul.bf16.gmra.mxu0 %v462
  %v954 = vpop.f32.mrf.mxu0
  %v955 = vadd.f32 %v822, %v954
  %v956 = vpop.f32.mrf.mxu0
  %v957 = vadd.f32 %v824, %v956
  %958 = vmatmul.bf16.gmra.mxu0 %v465
  %v959 = vpop.f32.mrf.mxu0
  %v960 = vadd.f32 %v827, %v959
  %v961 = vpop.f32.mrf.mxu0
  %v962 = vadd.f32 %v829, %v961
  %963 = vmatmul.bf16.gmra.mxu0 %v468
  %v964 = vpop.f32.mrf.mxu0
  %v965 = vadd.f32 %v832, %v964
  %v966 = vpop.f32.mrf.mxu0
  %v967 = vadd.f32 %v834, %v966
  %968 = vmatmul.bf16.gmra.mxu0 %v471
  %v969 = vpop.f32.mrf.mxu0
  %v970 = vadd.f32 %v837, %v969
  %v971 = vpop.f32.mrf.mxu0
  %972 = vdwg.mxu0
  %973 = vmatpush.bf16.msra.mxu0 0
  %974 = vmatpush.bf16.msra.mxu0 0
  %975 = vmatpush.bf16.msra.mxu0 0
  %976 = vmatpush.bf16.msra.mxu0 0
  %977 = vmatpush.bf16.msra.mxu0 0
  %978 = vmatpush.bf16.msra.mxu0 0
  %979 = vmatpush.bf16.msra.mxu0 %v612
  %980 = vmatpush.bf16.msra.mxu0 %v611
  %981 = vmatmul.bf16.gmra.mxu0 %v633
  %v982 = vpop.f32.mrf.mxu0
  %v983 = vadd.f32 %v850, %v982
  %v984 = vpop.f32.mrf.mxu0
  %v985 = vadd.f32 %v852, %v984
  %986 = vmatmul.bf16.gmra.mxu0 %v636
  %v987 = vpop.f32.mrf.mxu0
  %v988 = vadd.f32 %v855, %v987
  %v989 = vpop.f32.mrf.mxu0
  %v990 = vadd.f32 %v857, %v989
  %991 = vmatmul.bf16.gmra.mxu0 %v639
  %v992 = vpop.f32.mrf.mxu0
  %v993 = vadd.f32 %v860, %v992
  %v994 = vpop.f32.mrf.mxu0
  %v995 = vadd.f32 %v862, %v994
  %996 = vmatmul.bf16.gmra.mxu0 %v642
  %v997 = vpop.f32.mrf.mxu0
  %v998 = vadd.f32 %v865, %v997
  %v999 = vpop.f32.mrf.mxu0
  %v1000 = vadd.f32 %v867, %v999
  %1001 = vmatmul.bf16.gmra.mxu0 %v645
  %v1002 = vpop.f32.mrf.mxu0
  %v1003 = vadd.f32 %v870, %v1002
  %v1004 = vpop.f32.mrf.mxu0
  %v1005 = vadd.f32 %v872, %v1004
  %1006 = vmatmul.bf16.gmra.mxu0 %v648
  %v1007 = vpop.f32.mrf.mxu0
  %v1008 = vadd.f32 %v875, %v1007
  %v1009 = vpop.f32.mrf.mxu0
  %v1010 = vadd.f32 %v877, %v1009
  %1011 = vmatmul.bf16.gmra.mxu0 %v651
  %v1012 = vpop.f32.mrf.mxu0
  %v1013 = vadd.f32 %v880, %v1012
  %v1014 = vpop.f32.mrf.mxu0
  %v1015 = vadd.f32 %v882, %v1014
  %1016 = vmatmul.bf16.gmra.mxu0 %v654
  %v1017 = vpop.f32.mrf.mxu0
  %v1018 = vadd.f32 %v885, %v1017
  %v1019 = vpop.f32.mrf.mxu0
  %v1020 = vadd.f32 %v887, %v1019
  %1021 = vmatmul.bf16.gmra.mxu0 %v657
  %v1022 = vpop.f32.mrf.mxu0
  %v1023 = vadd.f32 %v890, %v1022
  %v1024 = vpop.f32.mrf.mxu0
  %v1025 = vadd.f32 %v892, %v1024
  %1026 = vmatmul.bf16.gmra.mxu0 %v660
  %v1027 = vpop.f32.mrf.mxu0
  %v1028 = vadd.f32 %v895, %v1027
  %v1029 = vpop.f32.mrf.mxu0
  %v1030 = vadd.f32 %v897, %v1029
  %1031 = vmatmul.bf16.gmra.mxu0 %v663
  %v1032 = vpop.f32.mrf.mxu0
  %v1033 = vadd.f32 %v900, %v1032
  %v1034 = vpop.f32.mrf.mxu0
  %v1035 = vadd.f32 %v902, %v1034
  %1036 = vmatmul.bf16.gmra.mxu0 %v666
  %v1037 = vpop.f32.mrf.mxu0
  %v1038 = vadd.f32 %v905, %v1037
  %v1039 = vpop.f32.mrf.mxu0
  %v1040 = vadd.f32 %v907, %v1039
  %1041 = vmatmul.bf16.gmra.mxu0 %v669
  %v1042 = vpop.f32.mrf.mxu0
  %v1043 = vadd.f32 %v910, %v1042
  %v1044 = vpop.f32.mrf.mxu0
  %v1045 = vadd.f32 %v912, %v1044
  %1046 = vmatmul.bf16.gmra.mxu0 %v672
  %v1047 = vpop.f32.mrf.mxu0
  %v1048 = vadd.f32 %v915, %v1047
  %v1049 = vpop.f32.mrf.mxu0
  %v1050 = vadd.f32 %v917, %v1049
  %1051 = vmatmul.bf16.gmra.mxu0 %v675
  %v1052 = vpop.f32.mrf.mxu0
  %v1053 = vadd.f32 %v920, %v1052
  %v1054 = vpop.f32.mrf.mxu0
  %v1055 = vadd.f32 %v922, %v1054
  %1056 = vmatmul.bf16.gmra.mxu0 %v678
  %v1057 = vpop.f32.mrf.mxu0
  %v1058 = vadd.f32 %v925, %v1057
  %v1059 = vpop.f32.mrf.mxu0
  %v1060 = vadd.f32 %v927, %v1059
  %1061 = vmatmul.bf16.gmra.mxu0 %v681
  %v1062 = vpop.f32.mrf.mxu0
  %v1063 = vadd.f32 %v930, %v1062
  %v1064 = vpop.f32.mrf.mxu0
  %v1065 = vadd.f32 %v932, %v1064
  %1066 = vmatmul.bf16.gmra.mxu0 %v684
  %v1067 = vpop.f32.mrf.mxu0
  %v1068 = vadd.f32 %v935, %v1067
  %v1069 = vpop.f32.mrf.mxu0
  %v1070 = vadd.f32 %v937, %v1069
  %1071 = vmatmul.bf16.gmra.mxu0 %v687
  %v1072 = vpop.f32.mrf.mxu0
  %v1073 = vadd.f32 %v940, %v1072
  %v1074 = vpop.f32.mrf.mxu0
  %v1075 = vadd.f32 %v942, %v1074
  %1076 = vmatmul.bf16.gmra.mxu0 %v690
  %v1077 = vpop.f32.mrf.mxu0
  %v1078 = vadd.f32 %v945, %v1077
  %v1079 = vpop.f32.mrf.mxu0
  %v1080 = vadd.f32 %v947, %v1079
  %1081 = vmatmul.bf16.gmra.mxu0 %v693
  %v1082 = vpop.f32.mrf.mxu0
  %v1083 = vadd.f32 %v950, %v1082
  %v1084 = vpop.f32.mrf.mxu0
  %v1085 = vadd.f32 %v952, %v1084
  %1086 = vmatmul.bf16.gmra.mxu0 %v696
  %v1087 = vpop.f32.mrf.mxu0
  %v1088 = vadd.f32 %v955, %v1087
  %v1089 = vpop.f32.mrf.mxu0
  %v1090 = vadd.f32 %v957, %v1089
  %1091 = vmatmul.bf16.gmra.mxu0 %v699
  %v1092 = vpop.f32.mrf.mxu0
  %v1093 = vadd.f32 %v960, %v1092
  %v1094 = vpop.f32.mrf.mxu0
  %v1095 = vadd.f32 %v962, %v1094
  %1096 = vmatmul.bf16.gmra.mxu0 %v702
  %v1097 = vpop.f32.mrf.mxu0
  %v1098 = vadd.f32 %v965, %v1097
  %v1099 = vpop.f32.mrf.mxu0
  %v1100 = vadd.f32 %v967, %v1099
  %1101 = vmatmul.bf16.gmra.mxu0 %v705
  %v1102 = vpop.f32.mrf.mxu0
  %v1103 = vadd.f32 %v970, %v1102
  %v1104 = vpop.f32.mrf.mxu0
  %1105 = vdwg.mxu0
  %v1106 = vmax.f32 %v983, 0.0
  %v1107 = vmax.f32 %v985, 0.0
  %v1108 = vmax.f32 %v988, 0.0
  %v1109 = vmax.f32 %v990, 0.0
  %v1110 = vmax.f32 %v993, 0.0
  %v1111 = vmax.f32 %v995, 0.0
  %v1112 = vmax.f32 %v998, 0.0
  %v1113 = vmax.f32 %v1000, 0.0
  %v1114 = vmax.f32 %v1003, 0.0
  %v1115 = vmax.f32 %v1005, 0.0
  %v1116 = vmax.f32 %v1008, 0.0
  %v1117 = vmax.f32 %v1010, 0.0
  %v1118 = vmax.f32 %v1013, 0.0
  %v1119 = vmax.f32 %v1015, 0.0
  %v1120 = vmax.f32 %v1018, 0.0
  %v1121 = vmax.f32 %v1020, 0.0
  %v1122 = vmax.f32 %v1023, 0.0
  %v1123 = vmax.f32 %v1025, 0.0
  %v1124 = vmax.f32 %v1028, 0.0
  %v1125 = vmax.f32 %v1030, 0.0
  %v1126 = vmax.f32 %v1033, 0.0
  %v1127 = vmax.f32 %v1035, 0.0
  %v1128 = vmax.f32 %v1038, 0.0
  %v1129 = vmax.f32 %v1040, 0.0
  %v1130 = vmax.f32 %v1043, 0.0
  %v1131 = vmax.f32 %v1045, 0.0
  %v1132 = vmax.f32 %v1048, 0.0
  %v1133 = vmax.f32 %v1050, 0.0
  %v1134 = vmax.f32 %v1053, 0.0
  %v1135 = vmax.f32 %v1055, 0.0
  %v1136 = vmax.f32 %v1058, 0.0
  %v1137 = vmax.f32 %v1060, 0.0
  %v1138 = vmax.f32 %v1063, 0.0
  %v1139 = vmax.f32 %v1065, 0.0
  %v1140 = vmax.f32 %v1068, 0.0
  %v1141 = vmax.f32 %v1070, 0.0
  %v1142 = vmax.f32 %v1073, 0.0
  %v1143 = vmax.f32 %v1075, 0.0
  %v1144 = vmax.f32 %v1078, 0.0
  %v1145 = vmax.f32 %v1080, 0.0
  %v1146 = vmax.f32 %v1083, 0.0
  %v1147 = vmax.f32 %v1085, 0.0
  %v1148 = vmax.f32 %v1088, 0.0
  %v1149 = vmax.f32 %v1090, 0.0
  %v1150 = vmax.f32 %v1093, 0.0
  %v1151 = vmax.f32 %v1095, 0.0
  %v1152 = vmax.f32 %v1098, 0.0
  %v1153 = vmax.f32 %v1100, 0.0
  %v1154 = vmax.f32 %v1103, 0.0
  %1155 = vst [vmem:[%s3] sm:$0xff] %v1106
  %1156 = vst [vmem:[%s3 + $0x8] sm:$0xff] %v1107
  %1157 = vst [vmem:[%s3 + $0x10] sm:$0xff] %v1108
  %1158 = vst [vmem:[%s3 + $0x18] sm:$0xff] %v1109
  %1159 = vst [vmem:[%s3 + $0x20] sm:$0xff] %v1110
  %1160 = vst [vmem:[%s3 + $0x28] sm:$0xff] %v1111
  %1161 = vst [vmem:[%s3 + $0x30] sm:$0xff] %v1112
  %1162 = vst [vmem:[%s3 + $0x38] sm:$0xff] %v1113
  %1163 = vst [vmem:[%s3 + $0x40] sm:$0xff] %v1114
  %1164 = vst [vmem:[%s3 + $0x48] sm:$0xff] %v1115
  %1165 = vst [vmem:[%s3 + $0x50] sm:$0xff] %v1116
  %1166 = vst [vmem:[%s3 + $0x58] sm:$0xff] %v1117
  %1167 = vst [vmem:[%s3 + $0x60] sm:$0xff] %v1118
  %1168 = vst [vmem:[%s3 + $0x68] sm:$0xff] %v1119
  %1169 = vst [vmem:[%s3 + $0x70] sm:$0xff] %v1120
  %1170 = vst [vmem:[%s3 + $0x78] sm:$0xff] %v1121
  %1171 = vst [vmem:[%s3 + $0x80] sm:$0xff] %v1122
  %1172 = vst [vmem:[%s3 + $0x88] sm:$0xff] %v1123
  %1173 = vst [vmem:[%s3 + $0x90] sm:$0xff] %v1124
  %1174 = vst [vmem:[%s3 + $0x98] sm:$0xff] %v1125
  %1175 = vst [vmem:[%s3 + $0xa0] sm:$0xff] %v1126
  %1176 = vst [vmem:[%s3 + $0xa8] sm:$0xff] %v1127
  %1177 = vst [vmem:[%s3 + $0xb0] sm:$0xff] %v1128
  %1178 = vst [vmem:[%s3 + $0xb8] sm:$0xff] %v1129
  %1179 = vst [vmem:[%s3 + $0xc0] sm:$0xff] %v1130
  %1180 = vst [vmem:[%s3 + $0xc8] sm:$0xff] %v1131
  %1181 = vst [vmem:[%s3 + $0xd0] sm:$0xff] %v1132
  %1182 = vst [vmem:[%s3 + $0xd8] sm:$0xff] %v1133
  %1183 = vst [vmem:[%s3 + $0xe0] sm:$0xff] %v1134
  %1184 = vst [vmem:[%s3 + $0xe8] sm:$0xff] %v1135
  %1185 = vst [vmem:[%s3 + $0xf0] sm:$0xff] %v1136
  %1186 = vst [vmem:[%s3 + $0xf8] sm:$0xff] %v1137
  %1187 = vst [vmem:[%s3 + $0x100] sm:$0xff] %v1138
  %1188 = vst [vmem:[%s3 + $0x108] sm:$0xff] %v1139
  %1189 = vst [vmem:[%s3 + $0x110] sm:$0xff] %v1140
  %1190 = vst [vmem:[%s3 + $0x118] sm:$0xff] %v1141
  %1191 = vst [vmem:[%s3 + $0x120] sm:$0xff] %v1142
  %1192 = vst [vmem:[%s3 + $0x128] sm:$0xff] %v1143
  %1193 = vst [vmem:[%s3 + $0x130] sm:$0xff] %v1144
  %1194 = vst [vmem:[%s3 + $0x138] sm:$0xff] %v1145
  %1195 = vst [vmem:[%s3 + $0x140] sm:$0xff] %v1146
  %1196 = vst [vmem:[%s3 + $0x148] sm:$0xff] %v1147
  %1197 = vst [vmem:[%s3 + $0x150] sm:$0xff] %v1148
  %1198 = vst [vmem:[%s3 + $0x158] sm:$0xff] %v1149
  %1199 = vst [vmem:[%s3 + $0x160] sm:$0xff] %v1150
  %1200 = vst [vmem:[%s3 + $0x168] sm:$0xff] %v1151
  %1201 = vst [vmem:[%s3 + $0x170] sm:$0xff] %v1152
  %1202 = vst [vmem:[%s3 + $0x178] sm:$0xff] %v1153
  %1203 = vst [vmem:[%s3 + $0x180] sm:$0xff] %v1154
  // Predicated region
  $region14: #{vae_forward.17} parent=0 // pred_check
    _
  $region15: #{vae_forward.17} parent=0 // pred_check_branch
    %1205 = sbr.rel (0) target = $region17
  $region16: #{vae_forward.17} parent=0 // pred_region
    _
  $region17: #{vae_forward.17} parent=0 // pred_fallthru
    _
  // Predicated region
  $region18: #{vae_forward.17} parent=0 // pred_check
    _
  $region19: #{vae_forward.17} parent=0 // pred_check_branch
    %1207 = sbr.rel (0) target = $region21
  $region20: #{vae_forward.17} parent=0 // pred_region
    _
  $region21: #{vae_forward.17} parent=0 // pred_fallthru
    _

// kernel: vae_forward.18
$region0: #{vae_forward.18}
  #allocation0 [shape = 'u32[]', space=smem, size = 0x4, offset = 0x4, fixed_abs, tag = 'smem constant byte address 0x4 - core index']
  #allocation1 [shape = 'u32[72,128]{1,0:T(1,128)}', space=vmem, size = 0x9000, scoped, tag = 'internal scratch']
  %s0 = inlined_call_operand.vmem [shape: bf16[32,208], index: 0, kind: input, shape index: {}]
  %s1 = inlined_call_operand.vmem [shape: bf16[208,1024], index: 1, kind: input, shape index: {}]
  %s2 = inlined_call_operand.vmem [shape: f32[1,1024], index: 2, kind: input, shape index: {}]
  %s3 = inlined_call_operand.vmem [shape: f32[32,1024], index: 3, kind: output, shape index: {}]
  %s4 = sld [smem:[#allocation0]]
  $region22: #{vae_forward.18} parent=0
    _
  %s6 = ssub.s32 1, %s4
  %s7 = scalar_select 0, %s6, %s4
  // Predicated region
  $region2: #{vae_forward.18} parent=0 // pred_check
    _
  $region3: #{vae_forward.18} parent=0 // pred_check_branch
    %9 = sbr.rel (0) target = $region5
  $region4: #{vae_forward.18} parent=0 // pred_region
    _
  $region5: #{vae_forward.18} parent=0 // pred_fallthru
    _
  // Predicated region
  $region6: #{vae_forward.18} parent=0 // pred_check
    _
  $region7: #{vae_forward.18} parent=0 // pred_check_branch
    %11 = sbr.rel (0) target = $region9
  $region8: #{vae_forward.18} parent=0 // pred_region
    _
  $region9: #{vae_forward.18} parent=0 // pred_fallthru
    _
  // Predicated region
  $region10: #{vae_forward.18} parent=0 // pred_check
    _
  $region11: #{vae_forward.18} parent=0 // pred_check_branch
    %13 = sbr.rel (0) target = $region13
  $region12: #{vae_forward.18} parent=0 // pred_region
    _
  $region13: #{vae_forward.18} parent=0 // pred_fallthru
    _
  %v15 = vld [vmem:[%s0] sm:$0xff]
  %v16 = vld [vmem:[%s0 + $0x8] sm:$0xff]
  %v17 = vld [vmem:[%s0 + $0x10] sm:$0xff]
  %v18 = vld [vmem:[%s0 + $0x18] sm:$0xff]
  %v19 = vld [vmem:[%s1] sm:$0xff]
  %v20 = vld [vmem:[%s1 + $0x8] sm:$0xff]
  %v21 = vld [vmem:[%s1 + $0x10] sm:$0xff]
  %v22 = vld [vmem:[%s1 + $0x18] sm:$0xff]
  %v23 = vld [vmem:[%s1 + $0x20] sm:$0xff]
  %v24 = vld [vmem:[%s1 + $0x28] sm:$0xff]
  %v25 = vld [vmem:[%s1 + $0x30] sm:$0xff]
  %v26 = vld [vmem:[%s1 + $0x38] sm:$0xff]
  %v27 = vld [vmem:[%s1 + $0x40] sm:$0xff]
  %v28 = vld [vmem:[%s1 + $0x48] sm:$0xff]
  %v29 = vld [vmem:[%s1 + $0x50] sm:$0xff]
  %v30 = vld [vmem:[%s1 + $0x58] sm:$0xff]
  %v31 = vld [vmem:[%s1 + $0x60] sm:$0xff]
  %v32 = vld [vmem:[%s1 + $0x68] sm:$0xff]
  %v33 = vld [vmem:[%s1 + $0x70] sm:$0xff]
  %v34 = vld [vmem:[%s1 + $0x78] sm:$0xff]
  %v35 = vld [vmem:[%s1 + $0x80] sm:$0xff]
  %v36 = vld [vmem:[%s1 + $0x88] sm:$0xff]
  %v37 = vld [vmem:[%s1 + $0x90] sm:$0xff]
  %v38 = vld [vmem:[%s1 + $0x98] sm:$0xff]
  %v39 = vld [vmem:[%s1 + $0xa0] sm:$0xff]
  %v40 = vld [vmem:[%s1 + $0xa8] sm:$0xff]
  %v41 = vld [vmem:[%s1 + $0xb0] sm:$0xff]
  %v42 = vld [vmem:[%s1 + $0xb8] sm:$0xff]
  %v43 = vld [vmem:[%s1 + $0xc0] sm:$0xff]
  %v44 = vld [vmem:[%s1 + $0xc8] sm:$0xff]
  %v45 = vld [vmem:[%s1 + $0xd0] sm:$0xff]
  %v46 = vld [vmem:[%s1 + $0xd8] sm:$0xff]
  %v47 = vld [vmem:[%s1 + $0xe0] sm:$0xff]
  %v48 = vld [vmem:[%s1 + $0xe8] sm:$0xff]
  %v49 = vld [vmem:[%s1 + $0xf0] sm:$0xff]
  %v50 = vld [vmem:[%s1 + $0xf8] sm:$0xff]
  %v51 = vld [vmem:[%s1 + $0x100] sm:$0xff]
  %v52 = vld [vmem:[%s1 + $0x108] sm:$0xff]
  %v53 = vld [vmem:[%s1 + $0x110] sm:$0xff]
  %v54 = vld [vmem:[%s1 + $0x118] sm:$0xff]
  %v55 = vld [vmem:[%s1 + $0x120] sm:$0xff]
  %v56 = vld [vmem:[%s1 + $0x128] sm:$0xff]
  %v57 = vld [vmem:[%s1 + $0x130] sm:$0xff]
  %v58 = vld [vmem:[%s1 + $0x138] sm:$0xff]
  %v59 = vld [vmem:[%s1 + $0x140] sm:$0xff]
  %v60 = vld [vmem:[%s1 + $0x148] sm:$0xff]
  %v61 = vld [vmem:[%s1 + $0x150] sm:$0xff]
  %v62 = vld [vmem:[%s1 + $0x158] sm:$0xff]
  %v63 = vld [vmem:[%s1 + $0x160] sm:$0xff]
  %v64 = vld [vmem:[%s1 + $0x168] sm:$0xff]
  %v65 = vld [vmem:[%s1 + $0x170] sm:$0xff]
  %v66 = vld [vmem:[%s1 + $0x178] sm:$0xff]
  %v67 = vld [vmem:[%s1 + $0x180] sm:$0xff]
  %v68 = vld [vmem:[%s1 + $0x188] sm:$0xff]
  %v69 = vld [vmem:[%s1 + $0x190] sm:$0xff]
  %v70 = vld [vmem:[%s1 + $0x198] sm:$0xff]
  %v71 = vld [vmem:[%s1 + $0x1a0] sm:$0xff]
  %v72 = vld [vmem:[%s1 + $0x1a8] sm:$0xff]
  %v73 = vld [vmem:[%s1 + $0x1b0] sm:$0xff]
  %v74 = vld [vmem:[%s1 + $0x1b8] sm:$0xff]
  %v75 = vld [vmem:[%s1 + $0x1c0] sm:$0xff]
  %v76 = vld [vmem:[%s1 + $0x1c8] sm:$0xff]
  %v77 = vld [vmem:[%s1 + $0x1d0] sm:$0xff]
  %v78 = vld [vmem:[%s1 + $0x1d8] sm:$0xff]
  %v79 = vld [vmem:[%s1 + $0x1e0] sm:$0xff]
  %v80 = vld [vmem:[%s1 + $0x1e8] sm:$0xff]
  %v81 = vld [vmem:[%s1 + $0x1f0] sm:$0xff]
  %v82 = vld [vmem:[%s1 + $0x1f8] sm:$0xff]
  %v83 = vld [vmem:[%s1 + $0x200] sm:$0xff]
  %v84 = vld [vmem:[%s1 + $0x208] sm:$0xff]
  %v85 = vld [vmem:[%s1 + $0x210] sm:$0xff]
  %v86 = vld [vmem:[%s1 + $0x218] sm:$0xff]
  %v87 = vld [vmem:[%s1 + $0x220] sm:$0xff]
  %v88 = vld [vmem:[%s1 + $0x228] sm:$0xff]
  %v89 = vld [vmem:[%s1 + $0x230] sm:$0xff]
  %v90 = vld [vmem:[%s1 + $0x238] sm:$0xff]
  %v91 = vld [vmem:[%s1 + $0x240] sm:$0xff]
  %v92 = vld [vmem:[%s1 + $0x248] sm:$0xff]
  %v93 = vld [vmem:[%s1 + $0x250] sm:$0xff]
  %v94 = vld [vmem:[%s1 + $0x258] sm:$0xff]
  %v95 = vld [vmem:[%s1 + $0x260] sm:$0xff]
  %v96 = vld [vmem:[%s1 + $0x268] sm:$0xff]
  %v97 = vld [vmem:[%s1 + $0x270] sm:$0xff]
  %v98 = vld [vmem:[%s1 + $0x278] sm:$0xff]
  %v99 = vld [vmem:[%s1 + $0x280] sm:$0xff]
  %v100 = vld [vmem:[%s1 + $0x288] sm:$0xff]
  %v101 = vld [vmem:[%s1 + $0x290] sm:$0xff]
  %v102 = vld [vmem:[%s1 + $0x298] sm:$0xff]
  %v103 = vld [vmem:[%s1 + $0x2a0] sm:$0xff]
  %v104 = vld [vmem:[%s1 + $0x2a8] sm:$0xff]
  %v105 = vld [vmem:[%s1 + $0x2b0] sm:$0xff]
  %v106 = vld [vmem:[%s1 + $0x2b8] sm:$0xff]
  %v107 = vld [vmem:[%s1 + $0x2c0] sm:$0xff]
  %v108 = vld [vmem:[%s1 + $0x2c8] sm:$0xff]
  %v109 = vld [vmem:[%s1 + $0x2d0] sm:$0xff]
  %v110 = vld [vmem:[%s1 + $0x2d8] sm:$0xff]
  %v111 = vld [vmem:[%s1 + $0x2e0] sm:$0xff]
  %v112 = vld [vmem:[%s1 + $0x2e8] sm:$0xff]
  %v113 = vld [vmem:[%s1 + $0x2f0] sm:$0xff]
  %v114 = vld [vmem:[%s1 + $0x2f8] sm:$0xff]
  %v115 = vld [vmem:[%s1 + $0x300] sm:$0xff]
  %v116 = vld [vmem:[%s1 + $0x308] sm:$0xff]
  %v117 = vld [vmem:[%s1 + $0x310] sm:$0xff]
  %v118 = vld [vmem:[%s1 + $0x318] sm:$0xff]
  %v119 = vld [vmem:[%s1 + $0x320] sm:$0xff]
  %v120 = vld [vmem:[%s1 + $0x328] sm:$0xff]
  %v121 = vld [vmem:[%s1 + $0x330] sm:$0xff]
  %v122 = vld [vmem:[%s1 + $0x338] sm:$0xff]
  %v123 = vld [vmem:[%s2] sm:$0xff]
  %v125 = vperm.slane %v123, 0
  %v126 = vperm.slane %v123, 1
  %v127 = vperm.slane %v123, 2
  %v128 = vperm.slane %v123, 3
  %v129 = vperm.slane %v123, 4
  %v130 = vperm.slane %v123, 5
  %v131 = vperm.slane %v123, 6
  %v132 = vperm.slane %v123, 7
  %v145 = vunpack.c.l.b16 %v15
  %v146 = vunpack.c.h.b16 %v15
  %v147 = vunpack.c.l.b16 %v16
  %v148 = vunpack.c.h.b16 %v16
  %v149 = vunpack.c.l.b16 %v17
  %v150 = vunpack.c.h.b16 %v17
  %v151 = vunpack.c.l.b16 %v18
  %v152 = vunpack.c.h.b16 %v18
  %v153 = vpack.c.b16 %v147, %v145
  %v154 = vpack.c.b16 %v148, %v146
  %v155 = vpack.c.b16 %v151, %v149
  %v156 = vpack.c.b16 %v152, %v150
  %v263 = vunpack.c.l.b16 %v19
  %v264 = vunpack.c.h.b16 %v19
  %v265 = vunpack.c.l.b16 %v20
  %v266 = vunpack.c.h.b16 %v20
  %v267 = vunpack.c.l.b16 %v21
  %v268 = vunpack.c.h.b16 %v21
  %v269 = vunpack.c.l.b16 %v22
  %v270 = vunpack.c.h.b16 %v22
  %v271 = vunpack.c.l.b16 %v23
  %v272 = vunpack.c.h.b16 %v23
  %v273 = vunpack.c.l.b16 %v24
  %v274 = vunpack.c.h.b16 %v24
  %v275 = vunpack.c.l.b16 %v25
  %v276 = vunpack.c.h.b16 %v25
  %v277 = vunpack.c.l.b16 %v26
  %v278 = vunpack.c.h.b16 %v26
  %v279 = vunpack.c.l.b16 %v27
  %v280 = vunpack.c.h.b16 %v27
  %v281 = vunpack.c.l.b16 %v28
  %v282 = vunpack.c.h.b16 %v28
  %v283 = vunpack.c.l.b16 %v29
  %v284 = vunpack.c.h.b16 %v29
  %v285 = vunpack.c.l.b16 %v30
  %v286 = vunpack.c.h.b16 %v30
  %v287 = vunpack.c.l.b16 %v31
  %v288 = vunpack.c.h.b16 %v31
  %v289 = vunpack.c.l.b16 %v32
  %v290 = vunpack.c.h.b16 %v32
  %v291 = vunpack.c.l.b16 %v33
  %v292 = vunpack.c.h.b16 %v33
  %v293 = vunpack.c.l.b16 %v34
  %v294 = vunpack.c.h.b16 %v34
  %v295 = vunpack.c.l.b16 %v35
  %v296 = vunpack.c.h.b16 %v35
  %v297 = vunpack.c.l.b16 %v36
  %v298 = vunpack.c.h.b16 %v36
  %v299 = vunpack.c.l.b16 %v37
  %v300 = vunpack.c.h.b16 %v37
  %v301 = vunpack.c.l.b16 %v38
  %v302 = vunpack.c.h.b16 %v38
  %v303 = vunpack.c.l.b16 %v39
  %v304 = vunpack.c.h.b16 %v39
  %v305 = vunpack.c.l.b16 %v40
  %v306 = vunpack.c.h.b16 %v40
  %v307 = vunpack.c.l.b16 %v41
  %v308 = vunpack.c.h.b16 %v41
  %v309 = vunpack.c.l.b16 %v42
  %v310 = vunpack.c.h.b16 %v42
  %v311 = vunpack.c.l.b16 %v43
  %v312 = vunpack.c.h.b16 %v43
  %v313 = vunpack.c.l.b16 %v44
  %v314 = vunpack.c.h.b16 %v44
  %v315 = vunpack.c.l.b16 %v45
  %v316 = vunpack.c.h.b16 %v45
  %v317 = vunpack.c.l.b16 %v46
  %v318 = vunpack.c.h.b16 %v46
  %v319 = vunpack.c.l.b16 %v47
  %v320 = vunpack.c.h.b16 %v47
  %v321 = vunpack.c.l.b16 %v48
  %v322 = vunpack.c.h.b16 %v48
  %v323 = vunpack.c.l.b16 %v49
  %v324 = vunpack.c.h.b16 %v49
  %v325 = vunpack.c.l.b16 %v50
  %v326 = vunpack.c.h.b16 %v50
  %v327 = vunpack.c.l.b16 %v51
  %v328 = vunpack.c.h.b16 %v51
  %v329 = vunpack.c.l.b16 %v52
  %v330 = vunpack.c.h.b16 %v52
  %v331 = vunpack.c.l.b16 %v53
  %v332 = vunpack.c.h.b16 %v53
  %v333 = vunpack.c.l.b16 %v54
  %v334 = vunpack.c.h.b16 %v54
  %v335 = vunpack.c.l.b16 %v55
  %v336 = vunpack.c.h.b16 %v55
  %v337 = vunpack.c.l.b16 %v56
  %v338 = vunpack.c.h.b16 %v56
  %v339 = vunpack.c.l.b16 %v57
  %v340 = vunpack.c.h.b16 %v57
  %v341 = vunpack.c.l.b16 %v58
  %v342 = vunpack.c.h.b16 %v58
  %v343 = vunpack.c.l.b16 %v59
  %v344 = vunpack.c.h.b16 %v59
  %v345 = vunpack.c.l.b16 %v60
  %v346 = vunpack.c.h.b16 %v60
  %v347 = vunpack.c.l.b16 %v61
  %v348 = vunpack.c.h.b16 %v61
  %v349 = vunpack.c.l.b16 %v62
  %v350 = vunpack.c.h.b16 %v62
  %v351 = vunpack.c.l.b16 %v63
  %v352 = vunpack.c.h.b16 %v63
  %v353 = vunpack.c.l.b16 %v64
  %v354 = vunpack.c.h.b16 %v64
  %v355 = vunpack.c.l.b16 %v65
  %v356 = vunpack.c.h.b16 %v65
  %v357 = vunpack.c.l.b16 %v66
  %v358 = vunpack.c.h.b16 %v66
  %v359 = vunpack.c.l.b16 %v67
  %v360 = vunpack.c.h.b16 %v67
  %v361 = vunpack.c.l.b16 %v68
  %v362 = vunpack.c.h.b16 %v68
  %v363 = vunpack.c.l.b16 %v69
  %v364 = vunpack.c.h.b16 %v69
  %v365 = vunpack.c.l.b16 %v70
  %v366 = vunpack.c.h.b16 %v70
  %v367 = vunpack.c.l.b16 %v71
  %v368 = vunpack.c.h.b16 %v71
  %v369 = vunpack.c.l.b16 %v72
  %v370 = vunpack.c.h.b16 %v72
  %v371 = vunpack.c.l.b16 %v73
  %v372 = vunpack.c.h.b16 %v73
  %v373 = vunpack.c.l.b16 %v74
  %v374 = vunpack.c.h.b16 %v74
  %v375 = vunpack.c.l.b16 %v75
  %v376 = vunpack.c.h.b16 %v75
  %v377 = vunpack.c.l.b16 %v76
  %v378 = vunpack.c.h.b16 %v76
  %v379 = vunpack.c.l.b16 %v77
  %v380 = vunpack.c.h.b16 %v77
  %v381 = vunpack.c.l.b16 %v78
  %v382 = vunpack.c.h.b16 %v78
  %v383 = vunpack.c.l.b16 %v79
  %v384 = vunpack.c.h.b16 %v79
  %v385 = vunpack.c.l.b16 %v80
  %v386 = vunpack.c.h.b16 %v80
  %v387 = vunpack.c.l.b16 %v81
  %v388 = vunpack.c.h.b16 %v81
  %v389 = vunpack.c.l.b16 %v82
  %v390 = vunpack.c.h.b16 %v82
  %v391 = vunpack.c.l.b16 %v83
  %v392 = vunpack.c.h.b16 %v83
  %v393 = vunpack.c.l.b16 %v84
  %v394 = vunpack.c.h.b16 %v84
  %v395 = vunpack.c.l.b16 %v85
  %v396 = vunpack.c.h.b16 %v85
  %v397 = vunpack.c.l.b16 %v86
  %v398 = vunpack.c.h.b16 %v86
  %v399 = vunpack.c.l.b16 %v87
  %v400 = vunpack.c.h.b16 %v87
  %v401 = vunpack.c.l.b16 %v88
  %v402 = vunpack.c.h.b16 %v88
  %v403 = vunpack.c.l.b16 %v89
  %v404 = vunpack.c.h.b16 %v89
  %v405 = vunpack.c.l.b16 %v90
  %v406 = vunpack.c.h.b16 %v90
  %v407 = vunpack.c.l.b16 %v91
  %v408 = vunpack.c.h.b16 %v91
  %v409 = vunpack.c.l.b16 %v92
  %v410 = vunpack.c.h.b16 %v92
  %v411 = vunpack.c.l.b16 %v93
  %v412 = vunpack.c.h.b16 %v93
  %v413 = vunpack.c.l.b16 %v94
  %v414 = vunpack.c.h.b16 %v94
  %v415 = vunpack.c.l.b16 %v95
  %v416 = vunpack.c.h.b16 %v95
  %v417 = vunpack.c.l.b16 %v96
  %v418 = vunpack.c.h.b16 %v96
  %v419 = vunpack.c.l.b16 %v97
  %v420 = vunpack.c.h.b16 %v97
  %v421 = vunpack.c.l.b16 %v98
  %v422 = vunpack.c.h.b16 %v98
  %v423 = vunpack.c.l.b16 %v99
  %v424 = vunpack.c.h.b16 %v99
  %v425 = vunpack.c.l.b16 %v100
  %v426 = vunpack.c.h.b16 %v100
  %v427 = vunpack.c.l.b16 %v101
  %v428 = vunpack.c.h.b16 %v101
  %v429 = vunpack.c.l.b16 %v102
  %v430 = vunpack.c.h.b16 %v102
  %v431 = vunpack.c.l.b16 %v103
  %v432 = vunpack.c.h.b16 %v103
  %v433 = vunpack.c.l.b16 %v104
  %v434 = vunpack.c.h.b16 %v104
  %v435 = vunpack.c.l.b16 %v105
  %v436 = vunpack.c.h.b16 %v105
  %v437 = vunpack.c.l.b16 %v106
  %v438 = vunpack.c.h.b16 %v106
  %v439 = vunpack.c.l.b16 %v107
  %v440 = vunpack.c.h.b16 %v107
  %v441 = vunpack.c.l.b16 %v108
  %v442 = vunpack.c.h.b16 %v108
  %v443 = vunpack.c.l.b16 %v109
  %v444 = vunpack.c.h.b16 %v109
  %v445 = vunpack.c.l.b16 %v110
  %v446 = vunpack.c.h.b16 %v110
  %v447 = vunpack.c.l.b16 %v111
  %v448 = vunpack.c.h.b16 %v111
  %v449 = vunpack.c.l.b16 %v112
  %v450 = vunpack.c.h.b16 %v112
  %v451 = vunpack.c.l.b16 %v113
  %v452 = vunpack.c.h.b16 %v113
  %v453 = vunpack.c.l.b16 %v114
  %v454 = vunpack.c.h.b16 %v114
  %v455 = vunpack.c.l.b16 %v115
  %v456 = vunpack.c.h.b16 %v115
  %v457 = vunpack.c.l.b16 %v116
  %v458 = vunpack.c.h.b16 %v116
  %v459 = vunpack.c.l.b16 %v117
  %v460 = vunpack.c.h.b16 %v117
  %v461 = vunpack.c.l.b16 %v118
  %v462 = vunpack.c.h.b16 %v118
  %v463 = vunpack.c.l.b16 %v119
  %v464 = vunpack.c.h.b16 %v119
  %v465 = vunpack.c.l.b16 %v120
  %v466 = vunpack.c.h.b16 %v120
  %v467 = vunpack.c.l.b16 %v121
  %v468 = vunpack.c.h.b16 %v121
  %v469 = vunpack.c.l.b16 %v122
  %v470 = vunpack.c.h.b16 %v122
  %v471 = vpack.c.b16 %v271, %v263
  %v472 = vpack.c.b16 %v272, %v264
  %v473 = vpack.c.b16 %v273, %v265
  %v474 = vpack.c.b16 %v274, %v266
  %v475 = vpack.c.b16 %v275, %v267
  %v476 = vpack.c.b16 %v276, %v268
  %v477 = vpack.c.b16 %v277, %v269
  %v478 = vpack.c.b16 %v278, %v270
  %v479 = vpack.c.b16 %v287, %v279
  %v480 = vpack.c.b16 %v288, %v280
  %v481 = vpack.c.b16 %v289, %v281
  %v482 = vpack.c.b16 %v290, %v282
  %v483 = vpack.c.b16 %v291, %v283
  %v484 = vpack.c.b16 %v292, %v284
  %v485 = vpack.c.b16 %v293, %v285
  %v486 = vpack.c.b16 %v294, %v286
  %v487 = vpack.c.b16 %v303, %v295
  %v488 = vpack.c.b16 %v304, %v296
  %v489 = vpack.c.b16 %v305, %v297
  %v490 = vpack.c.b16 %v306, %v298
  %v491 = vpack.c.b16 %v307, %v299
  %v492 = vpack.c.b16 %v308, %v300
  %v493 = vpack.c.b16 %v309, %v301
  %v494 = vpack.c.b16 %v310, %v302
  %v495 = vpack.c.b16 %v319, %v311
  %v496 = vpack.c.b16 %v320, %v312
  %v497 = vpack.c.b16 %v321, %v313
  %v498 = vpack.c.b16 %v322, %v314
  %v499 = vpack.c.b16 %v323, %v315
  %v500 = vpack.c.b16 %v324, %v316
  %v501 = vpack.c.b16 %v325, %v317
  %v502 = vpack.c.b16 %v326, %v318
  %v503 = vpack.c.b16 %v335, %v327
  %v504 = vpack.c.b16 %v336, %v328
  %v505 = vpack.c.b16 %v337, %v329
  %v506 = vpack.c.b16 %v338, %v330
  %v507 = vpack.c.b16 %v339, %v331
  %v508 = vpack.c.b16 %v340, %v332
  %v509 = vpack.c.b16 %v341, %v333
  %v510 = vpack.c.b16 %v342, %v334
  %v511 = vpack.c.b16 %v351, %v343
  %v512 = vpack.c.b16 %v352, %v344
  %v513 = vpack.c.b16 %v353, %v345
  %v514 = vpack.c.b16 %v354, %v346
  %v515 = vpack.c.b16 %v355, %v347
  %v516 = vpack.c.b16 %v356, %v348
  %v517 = vpack.c.b16 %v357, %v349
  %v518 = vpack.c.b16 %v358, %v350
  %v519 = vpack.c.b16 %v367, %v359
  %v520 = vpack.c.b16 %v368, %v360
  %v521 = vpack.c.b16 %v369, %v361
  %v522 = vpack.c.b16 %v370, %v362
  %v523 = vpack.c.b16 %v371, %v363
  %v524 = vpack.c.b16 %v372, %v364
  %v525 = vpack.c.b16 %v373, %v365
  %v526 = vpack.c.b16 %v374, %v366
  %v527 = vpack.c.b16 %v383, %v375
  %v528 = vpack.c.b16 %v384, %v376
  %v529 = vpack.c.b16 %v385, %v377
  %v530 = vpack.c.b16 %v386, %v378
  %v531 = vpack.c.b16 %v387, %v379
  %v532 = vpack.c.b16 %v388, %v380
  %v533 = vpack.c.b16 %v389, %v381
  %v534 = vpack.c.b16 %v390, %v382
  %v535 = vpack.c.b16 %v399, %v391
  %v536 = vpack.c.b16 %v400, %v392
  %v537 = vpack.c.b16 %v401, %v393
  %v538 = vpack.c.b16 %v402, %v394
  %v539 = vpack.c.b16 %v403, %v395
  %v540 = vpack.c.b16 %v404, %v396
  %v541 = vpack.c.b16 %v405, %v397
  %v542 = vpack.c.b16 %v406, %v398
  %v543 = vpack.c.b16 %v415, %v407
  %v544 = vpack.c.b16 %v416, %v408
  %v545 = vpack.c.b16 %v417, %v409
  %v546 = vpack.c.b16 %v418, %v410
  %v547 = vpack.c.b16 %v419, %v411
  %v548 = vpack.c.b16 %v420, %v412
  %v549 = vpack.c.b16 %v421, %v413
  %v550 = vpack.c.b16 %v422, %v414
  %v551 = vpack.c.b16 %v431, %v423
  %v552 = vpack.c.b16 %v432, %v424
  %v553 = vpack.c.b16 %v433, %v425
  %v554 = vpack.c.b16 %v434, %v426
  %v555 = vpack.c.b16 %v435, %v427
  %v556 = vpack.c.b16 %v436, %v428
  %v557 = vpack.c.b16 %v437, %v429
  %v558 = vpack.c.b16 %v438, %v430
  %v559 = vpack.c.b16 %v447, %v439
  %v560 = vpack.c.b16 %v448, %v440
  %v561 = vpack.c.b16 %v449, %v441
  %v562 = vpack.c.b16 %v450, %v442
  %v563 = vpack.c.b16 %v451, %v443
  %v564 = vpack.c.b16 %v452, %v444
  %v565 = vpack.c.b16 %v453, %v445
  %v566 = vpack.c.b16 %v454, %v446
  %v567 = vpack.c.b16 %v463, %v455
  %v568 = vpack.c.b16 %v464, %v456
  %v569 = vpack.c.b16 %v465, %v457
  %v570 = vpack.c.b16 %v466, %v458
  %v571 = vpack.c.b16 %v467, %v459
  %v572 = vpack.c.b16 %v468, %v460
  %v573 = vpack.c.b16 %v469, %v461
  %v574 = vpack.c.b16 %v470, %v462
  %vm679 = vcmask 654336
  %v681 = vsel %vm679, %v154, 0
  %v684 = vsel %vm679, %v156, 0
  %686 = vmatpush.bf16.msra.mxu0 %v527
  %687 = vmatpush.bf16.msra.mxu0 %v519
  %688 = vmatpush.bf16.msra.mxu0 %v511
  %689 = vmatpush.bf16.msra.mxu0 %v503
  %690 = vmatpush.bf16.msra.mxu0 %v495
  %691 = vmatpush.bf16.msra.mxu0 %v487
  %692 = vmatpush.bf16.msra.mxu0 %v479
  %693 = vmatpush.bf16.msra.mxu0 %v471
  %694 = vmatmul.bf16.gmra.mxu0 %v153
  %v695 = vpop.f32.mrf.mxu0
  %v696 = vadd.f32 %v125, %v695
  %v697 = vpop.f32.mrf.mxu0
  %v698 = vadd.f32 %v125, %v697
  %699 = vmatmul.bf16.gmra.mxu0 %v155
  %v700 = vpop.f32.mrf.mxu0
  %v701 = vadd.f32 %v125, %v700
  %v702 = vpop.f32.mrf.mxu0
  %v703 = vadd.f32 %v125, %v702
  %704 = vdwg.mxu0
  %705 = vmatpush.bf16.msra.mxu0 0
  %706 = vmatpush.bf16.msra.mxu0 0
  %707 = vmatpush.bf16.msra.mxu0 0
  %708 = vmatpush.bf16.msra.mxu0 %v567
  %709 = vmatpush.bf16.msra.mxu0 %v559
  %710 = vmatpush.bf16.msra.mxu0 %v551
  %711 = vmatpush.bf16.msra.mxu0 %v543
  %712 = vmatpush.bf16.msra.mxu0 %v535
  %713 = vmatmul.bf16.gmra.mxu0 %v681
  %v714 = vpop.f32.mrf.mxu0
  %v715 = vadd.f32 %v696, %v714
  %v716 = vpop.f32.mrf.mxu0
  %v717 = vadd.f32 %v698, %v716
  %718 = vmatmul.bf16.gmra.mxu0 %v684
  %v719 = vpop.f32.mrf.mxu0
  %v720 = vadd.f32 %v701, %v719
  %v721 = vpop.f32.mrf.mxu0
  %v722 = vadd.f32 %v703, %v721
  %723 = vdwg.mxu0
  %724 = vmatpush.bf16.msra.mxu0 %v528
  %725 = vmatpush.bf16.msra.mxu0 %v520
  %726 = vmatpush.bf16.msra.mxu0 %v512
  %727 = vmatpush.bf16.msra.mxu0 %v504
  %728 = vmatpush.bf16.msra.mxu0 %v496
  %729 = vmatpush.bf16.msra.mxu0 %v488
  %730 = vmatpush.bf16.msra.mxu0 %v480
  %731 = vmatpush.bf16.msra.mxu0 %v472
  %732 = vmatmul.bf16.gmra.mxu0 %v153
  %v733 = vpop.f32.mrf.mxu0
  %v734 = vadd.f32 %v126, %v733
  %v735 = vpop.f32.mrf.mxu0
  %v736 = vadd.f32 %v126, %v735
  %737 = vmatmul.bf16.gmra.mxu0 %v155
  %v738 = vpop.f32.mrf.mxu0
  %v739 = vadd.f32 %v126, %v738
  %v740 = vpop.f32.mrf.mxu0
  %v741 = vadd.f32 %v126, %v740
  %742 = vdwg.mxu0
  %743 = vmatpush.bf16.msra.mxu0 0
  %744 = vmatpush.bf16.msra.mxu0 0
  %745 = vmatpush.bf16.msra.mxu0 0
  %746 = vmatpush.bf16.msra.mxu0 %v568
  %747 = vmatpush.bf16.msra.mxu0 %v560
  %748 = vmatpush.bf16.msra.mxu0 %v552
  %749 = vmatpush.bf16.msra.mxu0 %v544
  %750 = vmatpush.bf16.msra.mxu0 %v536
  %751 = vmatmul.bf16.gmra.mxu0 %v681
  %v752 = vpop.f32.mrf.mxu0
  %v753 = vadd.f32 %v734, %v752
  %v754 = vpop.f32.mrf.mxu0
  %v755 = vadd.f32 %v736, %v754
  %756 = vmatmul.bf16.gmra.mxu0 %v684
  %v757 = vpop.f32.mrf.mxu0
  %v758 = vadd.f32 %v739, %v757
  %v759 = vpop.f32.mrf.mxu0
  %v760 = vadd.f32 %v741, %v759
  %761 = vdwg.mxu0
  %762 = vmatpush.bf16.msra.mxu0 %v529
  %763 = vmatpush.bf16.msra.mxu0 %v521
  %764 = vmatpush.bf16.msra.mxu0 %v513
  %765 = vmatpush.bf16.msra.mxu0 %v505
  %766 = vmatpush.bf16.msra.mxu0 %v497
  %767 = vmatpush.bf16.msra.mxu0 %v489
  %768 = vmatpush.bf16.msra.mxu0 %v481
  %769 = vmatpush.bf16.msra.mxu0 %v473
  %770 = vmatmul.bf16.gmra.mxu0 %v153
  %v771 = vpop.f32.mrf.mxu0
  %v772 = vadd.f32 %v127, %v771
  %v773 = vpop.f32.mrf.mxu0
  %v774 = vadd.f32 %v127, %v773
  %775 = vmatmul.bf16.gmra.mxu0 %v155
  %v776 = vpop.f32.mrf.mxu0
  %v777 = vadd.f32 %v127, %v776
  %v778 = vpop.f32.mrf.mxu0
  %v779 = vadd.f32 %v127, %v778
  %780 = vdwg.mxu0
  %781 = vmatpush.bf16.msra.mxu0 0
  %782 = vmatpush.bf16.msra.mxu0 0
  %783 = vmatpush.bf16.msra.mxu0 0
  %784 = vmatpush.bf16.msra.mxu0 %v569
  %785 = vmatpush.bf16.msra.mxu0 %v561
  %786 = vmatpush.bf16.msra.mxu0 %v553
  %787 = vmatpush.bf16.msra.mxu0 %v545
  %788 = vmatpush.bf16.msra.mxu0 %v537
  %789 = vmatmul.bf16.gmra.mxu0 %v681
  %v790 = vpop.f32.mrf.mxu0
  %v791 = vadd.f32 %v772, %v790
  %v792 = vpop.f32.mrf.mxu0
  %v793 = vadd.f32 %v774, %v792
  %794 = vmatmul.bf16.gmra.mxu0 %v684
  %v795 = vpop.f32.mrf.mxu0
  %v796 = vadd.f32 %v777, %v795
  %v797 = vpop.f32.mrf.mxu0
  %v798 = vadd.f32 %v779, %v797
  %799 = vdwg.mxu0
  %800 = vmatpush.bf16.msra.mxu0 %v530
  %801 = vmatpush.bf16.msra.mxu0 %v522
  %802 = vmatpush.bf16.msra.mxu0 %v514
  %803 = vmatpush.bf16.msra.mxu0 %v506
  %804 = vmatpush.bf16.msra.mxu0 %v498
  %805 = vmatpush.bf16.msra.mxu0 %v490
  %806 = vmatpush.bf16.msra.mxu0 %v482
  %807 = vmatpush.bf16.msra.mxu0 %v474
  %808 = vmatmul.bf16.gmra.mxu0 %v153
  %v809 = vpop.f32.mrf.mxu0
  %v810 = vadd.f32 %v128, %v809
  %v811 = vpop.f32.mrf.mxu0
  %v812 = vadd.f32 %v128, %v811
  %813 = vmatmul.bf16.gmra.mxu0 %v155
  %v814 = vpop.f32.mrf.mxu0
  %v815 = vadd.f32 %v128, %v814
  %v816 = vpop.f32.mrf.mxu0
  %v817 = vadd.f32 %v128, %v816
  %818 = vdwg.mxu0
  %819 = vmatpush.bf16.msra.mxu0 0
  %820 = vmatpush.bf16.msra.mxu0 0
  %821 = vmatpush.bf16.msra.mxu0 0
  %822 = vmatpush.bf16.msra.mxu0 %v570
  %823 = vmatpush.bf16.msra.mxu0 %v562
  %824 = vmatpush.bf16.msra.mxu0 %v554
  %825 = vmatpush.bf16.msra.mxu0 %v546
  %826 = vmatpush.bf16.msra.mxu0 %v538
  %827 = vmatmul.bf16.gmra.mxu0 %v681
  %v828 = vpop.f32.mrf.mxu0
  %v829 = vadd.f32 %v810, %v828
  %v830 = vpop.f32.mrf.mxu0
  %v831 = vadd.f32 %v812, %v830
  %832 = vmatmul.bf16.gmra.mxu0 %v684
  %v833 = vpop.f32.mrf.mxu0
  %v834 = vadd.f32 %v815, %v833
  %v835 = vpop.f32.mrf.mxu0
  %v836 = vadd.f32 %v817, %v835
  %837 = vdwg.mxu0
  %838 = vmatpush.bf16.msra.mxu0 %v531
  %839 = vmatpush.bf16.msra.mxu0 %v523
  %840 = vmatpush.bf16.msra.mxu0 %v515
  %841 = vmatpush.bf16.msra.mxu0 %v507
  %842 = vmatpush.bf16.msra.mxu0 %v499
  %843 = vmatpush.bf16.msra.mxu0 %v491
  %844 = vmatpush.bf16.msra.mxu0 %v483
  %845 = vmatpush.bf16.msra.mxu0 %v475
  %846 = vmatmul.bf16.gmra.mxu0 %v153
  %v847 = vpop.f32.mrf.mxu0
  %v848 = vadd.f32 %v129, %v847
  %v849 = vpop.f32.mrf.mxu0
  %v850 = vadd.f32 %v129, %v849
  %851 = vmatmul.bf16.gmra.mxu0 %v155
  %v852 = vpop.f32.mrf.mxu0
  %v853 = vadd.f32 %v129, %v852
  %v854 = vpop.f32.mrf.mxu0
  %v855 = vadd.f32 %v129, %v854
  %856 = vdwg.mxu0
  %857 = vmatpush.bf16.msra.mxu0 0
  %858 = vmatpush.bf16.msra.mxu0 0
  %859 = vmatpush.bf16.msra.mxu0 0
  %860 = vmatpush.bf16.msra.mxu0 %v571
  %861 = vmatpush.bf16.msra.mxu0 %v563
  %862 = vmatpush.bf16.msra.mxu0 %v555
  %863 = vmatpush.bf16.msra.mxu0 %v547
  %864 = vmatpush.bf16.msra.mxu0 %v539
  %865 = vmatmul.bf16.gmra.mxu0 %v681
  %v866 = vpop.f32.mrf.mxu0
  %v867 = vadd.f32 %v848, %v866
  %v868 = vpop.f32.mrf.mxu0
  %v869 = vadd.f32 %v850, %v868
  %870 = vmatmul.bf16.gmra.mxu0 %v684
  %v871 = vpop.f32.mrf.mxu0
  %v872 = vadd.f32 %v853, %v871
  %v873 = vpop.f32.mrf.mxu0
  %v874 = vadd.f32 %v855, %v873
  %875 = vdwg.mxu0
  %876 = vmatpush.bf16.msra.mxu0 %v532
  %877 = vmatpush.bf16.msra.mxu0 %v524
  %878 = vmatpush.bf16.msra.mxu0 %v516
  %879 = vmatpush.bf16.msra.mxu0 %v508
  %880 = vmatpush.bf16.msra.mxu0 %v500
  %881 = vmatpush.bf16.msra.mxu0 %v492
  %882 = vmatpush.bf16.msra.mxu0 %v484
  %883 = vmatpush.bf16.msra.mxu0 %v476
  %884 = vmatmul.bf16.gmra.mxu0 %v153
  %v885 = vpop.f32.mrf.mxu0
  %v886 = vadd.f32 %v130, %v885
  %v887 = vpop.f32.mrf.mxu0
  %v888 = vadd.f32 %v130, %v887
  %889 = vmatmul.bf16.gmra.mxu0 %v155
  %v890 = vpop.f32.mrf.mxu0
  %v891 = vadd.f32 %v130, %v890
  %v892 = vpop.f32.mrf.mxu0
  %v893 = vadd.f32 %v130, %v892
  %894 = vdwg.mxu0
  %895 = vmatpush.bf16.msra.mxu0 0
  %896 = vmatpush.bf16.msra.mxu0 0
  %897 = vmatpush.bf16.msra.mxu0 0
  %898 = vmatpush.bf16.msra.mxu0 %v572
  %899 = vmatpush.bf16.msra.mxu0 %v564
  %900 = vmatpush.bf16.msra.mxu0 %v556
  %901 = vmatpush.bf16.msra.mxu0 %v548
  %902 = vmatpush.bf16.msra.mxu0 %v540
  %903 = vmatmul.bf16.gmra.mxu0 %v681
  %v904 = vpop.f32.mrf.mxu0
  %v905 = vadd.f32 %v886, %v904
  %v906 = vpop.f32.mrf.mxu0
  %v907 = vadd.f32 %v888, %v906
  %908 = vmatmul.bf16.gmra.mxu0 %v684
  %v909 = vpop.f32.mrf.mxu0
  %v910 = vadd.f32 %v891, %v909
  %v911 = vpop.f32.mrf.mxu0
  %v912 = vadd.f32 %v893, %v911
  %913 = vdwg.mxu0
  %914 = vmatpush.bf16.msra.mxu0 %v533
  %915 = vmatpush.bf16.msra.mxu0 %v525
  %916 = vmatpush.bf16.msra.mxu0 %v517
  %917 = vmatpush.bf16.msra.mxu0 %v509
  %918 = vmatpush.bf16.msra.mxu0 %v501
  %919 = vmatpush.bf16.msra.mxu0 %v493
  %920 = vmatpush.bf16.msra.mxu0 %v485
  %921 = vmatpush.bf16.msra.mxu0 %v477
  %922 = vmatmul.bf16.gmra.mxu0 %v153
  %v923 = vpop.f32.mrf.mxu0
  %v924 = vadd.f32 %v131, %v923
  %v925 = vpop.f32.mrf.mxu0
  %v926 = vadd.f32 %v131, %v925
  %927 = vmatmul.bf16.gmra.mxu0 %v155
  %v928 = vpop.f32.mrf.mxu0
  %v929 = vadd.f32 %v131, %v928
  %v930 = vpop.f32.mrf.mxu0
  %v931 = vadd.f32 %v131, %v930
  %932 = vdwg.mxu0
  %933 = vmatpush.bf16.msra.mxu0 0
  %934 = vmatpush.bf16.msra.mxu0 0
  %935 = vmatpush.bf16.msra.mxu0 0
  %936 = vmatpush.bf16.msra.mxu0 %v573
  %937 = vmatpush.bf16.msra.mxu0 %v565
  %938 = vmatpush.bf16.msra.mxu0 %v557
  %939 = vmatpush.bf16.msra.mxu0 %v549
  %940 = vmatpush.bf16.msra.mxu0 %v541
  %941 = vmatmul.bf16.gmra.mxu0 %v681
  %v942 = vpop.f32.mrf.mxu0
  %v943 = vadd.f32 %v924, %v942
  %v944 = vpop.f32.mrf.mxu0
  %v945 = vadd.f32 %v926, %v944
  %946 = vmatmul.bf16.gmra.mxu0 %v684
  %v947 = vpop.f32.mrf.mxu0
  %v948 = vadd.f32 %v929, %v947
  %v949 = vpop.f32.mrf.mxu0
  %v950 = vadd.f32 %v931, %v949
  %951 = vdwg.mxu0
  %952 = vmatpush.bf16.msra.mxu0 %v534
  %953 = vmatpush.bf16.msra.mxu0 %v526
  %954 = vmatpush.bf16.msra.mxu0 %v518
  %955 = vmatpush.bf16.msra.mxu0 %v510
  %956 = vmatpush.bf16.msra.mxu0 %v502
  %957 = vmatpush.bf16.msra.mxu0 %v494
  %958 = vmatpush.bf16.msra.mxu0 %v486
  %959 = vmatpush.bf16.msra.mxu0 %v478
  %960 = vmatmul.bf16.gmra.mxu0 %v153
  %v961 = vpop.f32.mrf.mxu0
  %v962 = vadd.f32 %v132, %v961
  %v963 = vpop.f32.mrf.mxu0
  %v964 = vadd.f32 %v132, %v963
  %965 = vmatmul.bf16.gmra.mxu0 %v155
  %v966 = vpop.f32.mrf.mxu0
  %v967 = vadd.f32 %v132, %v966
  %v968 = vpop.f32.mrf.mxu0
  %v969 = vadd.f32 %v132, %v968
  %970 = vdwg.mxu0
  %971 = vmatpush.bf16.msra.mxu0 0
  %972 = vmatpush.bf16.msra.mxu0 0
  %973 = vmatpush.bf16.msra.mxu0 0
  %974 = vmatpush.bf16.msra.mxu0 %v574
  %975 = vmatpush.bf16.msra.mxu0 %v566
  %976 = vmatpush.bf16.msra.mxu0 %v558
  %977 = vmatpush.bf16.msra.mxu0 %v550
  %978 = vmatpush.bf16.msra.mxu0 %v542
  %979 = vmatmul.bf16.gmra.mxu0 %v681
  %v980 = vpop.f32.mrf.mxu0
  %v981 = vadd.f32 %v962, %v980
  %v982 = vpop.f32.mrf.mxu0
  %v983 = vadd.f32 %v964, %v982
  %984 = vmatmul.bf16.gmra.mxu0 %v684
  %v985 = vpop.f32.mrf.mxu0
  %v986 = vadd.f32 %v967, %v985
  %v987 = vpop.f32.mrf.mxu0
  %v988 = vadd.f32 %v969, %v987
  %989 = vdwg.mxu0
  %990 = vst [vmem:[%s3] sm:$0xff] %v715
  %991 = vst [vmem:[%s3 + $0x8] sm:$0xff] %v753
  %992 = vst [vmem:[%s3 + $0x10] sm:$0xff] %v791
  %993 = vst [vmem:[%s3 + $0x18] sm:$0xff] %v829
  %994 = vst [vmem:[%s3 + $0x20] sm:$0xff] %v867
  %995 = vst [vmem:[%s3 + $0x28] sm:$0xff] %v905
  %996 = vst [vmem:[%s3 + $0x30] sm:$0xff] %v943
  %997 = vst [vmem:[%s3 + $0x38] sm:$0xff] %v981
  %998 = vst [vmem:[%s3 + $0x40] sm:$0xff] %v717
  %999 = vst [vmem:[%s3 + $0x48] sm:$0xff] %v755
  %1000 = vst [vmem:[%s3 + $0x50] sm:$0xff] %v793
  %1001 = vst [vmem:[%s3 + $0x58] sm:$0xff] %v831
  %1002 = vst [vmem:[%s3 + $0x60] sm:$0xff] %v869
  %1003 = vst [vmem:[%s3 + $0x68] sm:$0xff] %v907
  %1004 = vst [vmem:[%s3 + $0x70] sm:$0xff] %v945
  %1005 = vst [vmem:[%s3 + $0x78] sm:$0xff] %v983
  %1006 = vst [vmem:[%s3 + $0x80] sm:$0xff] %v720
  %1007 = vst [vmem:[%s3 + $0x88] sm:$0xff] %v758
  %1008 = vst [vmem:[%s3 + $0x90] sm:$0xff] %v796
  %1009 = vst [vmem:[%s3 + $0x98] sm:$0xff] %v834
  %1010 = vst [vmem:[%s3 + $0xa0] sm:$0xff] %v872
  %1011 = vst [vmem:[%s3 + $0xa8] sm:$0xff] %v910
  %1012 = vst [vmem:[%s3 + $0xb0] sm:$0xff] %v948
  %1013 = vst [vmem:[%s3 + $0xb8] sm:$0xff] %v986
  %1014 = vst [vmem:[%s3 + $0xc0] sm:$0xff] %v722
  %1015 = vst [vmem:[%s3 + $0xc8] sm:$0xff] %v760
  %1016 = vst [vmem:[%s3 + $0xd0] sm:$0xff] %v798
  %1017 = vst [vmem:[%s3 + $0xd8] sm:$0xff] %v836
  %1018 = vst [vmem:[%s3 + $0xe0] sm:$0xff] %v874
  %1019 = vst [vmem:[%s3 + $0xe8] sm:$0xff] %v912
  %1020 = vst [vmem:[%s3 + $0xf0] sm:$0xff] %v950
  %1021 = vst [vmem:[%s3 + $0xf8] sm:$0xff] %v988
  // Predicated region
  $region14: #{vae_forward.18} parent=0 // pred_check
    _
  $region15: #{vae_forward.18} parent=0 // pred_check_branch
    %1023 = sbr.rel (0) target = $region17
  $region16: #{vae_forward.18} parent=0 // pred_region
    _
  $region17: #{vae_forward.18} parent=0 // pred_fallthru
    _
  // Predicated region
  $region18: #{vae_forward.18} parent=0 // pred_check
    _
  $region19: #{vae_forward.18} parent=0 // pred_check_branch
    %1025 = sbr.rel (0) target = $region21
  $region20: #{vae_forward.18} parent=0 // pred_region
    _
  $region21: #{vae_forward.18} parent=0 // pred_fallthru
    _

// kernel: vae_forward.19
$region0: #{vae_forward.19}
  #allocation0 [shape = 'u32[]', space=smem, size = 0x4, offset = 0x4, fixed_abs, tag = 'smem constant byte address 0x4 - core index']
  #allocation1 [shape = 'u32[72,128]{1,0:T(1,128)}', space=vmem, size = 0x9000, scoped, tag = 'internal scratch']
  %s0 = inlined_call_operand.vmem [shape: bf16[2048,144], index: 0, kind: input, shape index: {}]
  %s1 = inlined_call_operand.vmem [shape: bf16[144,128], index: 1, kind: input, shape index: {}]
  %s2 = inlined_call_operand.vmem [shape: f32[1,128], index: 2, kind: input, shape index: {}]
  %s3 = inlined_call_operand.vmem [shape: f32[2048,128], index: 3, kind: output, shape index: {}]
  %s4 = sld [smem:[#allocation0]]
  $region45: #{vae_forward.19} parent=0
    _
  %s6 = ssub.s32 1, %s4
  %s7 = scalar_select 0, %s6, %s4
  loop: start=0, step=1, limit=6
  $region2: #{vae_forward.19} parent=0 // loop_pre_header
    _
  $region3: #{vae_forward.19} parent=0 // loop_header
    %s9 = sphi 0, %s13
    %p10 = scmp.ge.s32.totalorder %s9, 6
    %s19 = sphi 0, %s21
    %s22 = sphi 0, %s19
    %s23 = sphi 0, %s22
    %s39 = sphi 0, %s23
    %s43 = sphi 0, %s43
    %s45 = sphi 0, %s43
    %s46 = sphi 0, %s45
    %s60 = sphi 0, %s46
    %s64 = sphi 0, %s64
    %s66 = sphi 0, %s64
    %s67 = sphi 0, %s66
    %s81 = sphi 0, %s67
    %s87 = sphi 0, %s89
    %s90 = sphi 0, %s87
    %s91 = sphi 0, %s90
    %s107 = sphi 0, %s91
  $region4: #{vae_forward.19} parent=0 // loop_header_branch
    %12 = sbr.rel (%p10) target = $region8
  $region5: #{vae_forward.19} parent=0 // loop_body
    %s14 = ssub.s32 %s9, 1
    %s15 = ssub.s32 %s9, 2
    %s16 = sadd.s32 %s9, 1
    %s17 = ssub.s32 %s9, %s16
    %p18 = scmp.eq.s32.totalorder %s17, 0
    %s20 = sadd.s32 %s19, 1
    %s21 = scalar_select %p18, %s19, %s20
    %p24 = pneg %p18
    %p25 = scmp.eq.s32.totalorder %s9, 3
    %p26 = por %p24, %p25
    %p27 = scmp.ne.s32.totalorder %s19, %s22
    %p28 = scmp.eq.s32.totalorder %s9, 0
    %p29 = por %p27, %p28
    %p30 = scmp.ne.s32.totalorder %s19, %s22
    %p31 = scmp.eq.s32.totalorder %s14, 3
    %p32 = por %p30, %p31
    %p33 = scmp.ne.s32.totalorder %s22, %s23
    %p34 = scmp.eq.s32.totalorder %s14, 0
    %p35 = por %p33, %p34
    %p36 = scmp.ne.s32.totalorder %s22, %s23
    %p37 = scmp.eq.s32.totalorder %s15, 3
    %p38 = por %p36, %p37
    %p40 = scmp.ne.s32.totalorder %s23, %s39
    %p41 = scmp.eq.s32.totalorder %s15, 0
    %p42 = por %p40, %p41
    %s44 = sadd.s32 %s43, 1
    %p47 = scmp.eq.s32.totalorder %s9, 3
    %p48 = scmp.ne.s32.totalorder %s43, %s45
    %p49 = scmp.eq.s32.totalorder %s9, 0
    %p50 = por %p48, %p49
    %p51 = scmp.ne.s32.totalorder %s43, %s45
    %p52 = scmp.eq.s32.totalorder %s14, 3
    %p53 = por %p51, %p52
    %p54 = scmp.ne.s32.totalorder %s45, %s46
    %p55 = scmp.eq.s32.totalorder %s14, 0
    %p56 = por %p54, %p55
    %p57 = scmp.ne.s32.totalorder %s45, %s46
    %p58 = scmp.eq.s32.totalorder %s15, 3
    %p59 = por %p57, %p58
    %p61 = scmp.ne.s32.totalorder %s46, %s60
    %p62 = scmp.eq.s32.totalorder %s15, 0
    %p63 = por %p61, %p62
    %s65 = sadd.s32 %s64, 1
    %p68 = scmp.eq.s32.totalorder %s9, 3
    %p69 = scmp.ne.s32.totalorder %s64, %s66
    %p70 = scmp.eq.s32.totalorder %s9, 0
    %p71 = por %p69, %p70
    %p72 = scmp.ne.s32.totalorder %s64, %s66
    %p73 = scmp.eq.s32.totalorder %s14, 3
    %p74 = por %p72, %p73
    %p75 = scmp.ne.s32.totalorder %s66, %s67
    %p76 = scmp.eq.s32.totalorder %s14, 0
    %p77 = por %p75, %p76
    %p78 = scmp.ne.s32.totalorder %s66, %s67
    %p79 = scmp.eq.s32.totalorder %s15, 3
    %p80 = por %p78, %p79
    %p82 = scmp.ne.s32.totalorder %s67, %s81
    %p83 = scmp.eq.s32.totalorder %s15, 0
    %p84 = por %p82, %p83
    %s85 = ssub.s32 %s9, %s16
    %p86 = scmp.eq.s32.totalorder %s85, 0
    %s88 = sadd.s32 %s87, 1
    %s89 = scalar_select %p86, %s87, %s88
    %p92 = pneg %p86
    %p93 = scmp.eq.s32.totalorder %s9, 3
    %p94 = por %p92, %p93
    %p95 = scmp.ne.s32.totalorder %s87, %s90
    %p96 = scmp.eq.s32.totalorder %s9, 0
    %p97 = por %p95, %p96
    %p98 = scmp.ne.s32.totalorder %s87, %s90
    %p99 = scmp.eq.s32.totalorder %s14, 3
    %p100 = por %p98, %p99
    %p101 = scmp.ne.s32.totalorder %s90, %s91
    %p102 = scmp.eq.s32.totalorder %s14, 0
    %p103 = por %p101, %p102
    %p104 = scmp.ne.s32.totalorder %s90, %s91
    %p105 = scmp.eq.s32.totalorder %s15, 3
    %p106 = por %p104, %p105
    %p108 = scmp.ne.s32.totalorder %s91, %s107
    %p109 = scmp.eq.s32.totalorder %s15, 0
    %p110 = por %p108, %p109
    %p111 = scmp.le.s32.totalorder 1, %s9
    %p112 = scmp.lt.s32.totalorder %s9, 5
    %p113 = pnand %p111, %p112
    %p114 = pneg %p113
    // Predicated region
    $region9: #{vae_forward.19} parent=5 // pred_check
      _
    $region10: #{vae_forward.19} parent=5 // pred_check_branch
      %116 = sbr.rel (%p113) target = $region12
    $region11: #{vae_forward.19} parent=5 // pred_region
      %s117 = ssub.s32 %s9, 1
      // Predicated region
      $region13: #{vae_forward.19} parent=11 // pred_check
        %p118 = pneg %p56
      $region14: #{vae_forward.19} parent=11 // pred_check_branch
        %120 = sbr.rel (%p118) target = $region16
      $region15: #{vae_forward.19} parent=11 // pred_region
        _
      $region16: #{vae_forward.19} parent=11 // pred_fallthru
        _
      // Predicated region
      $region17: #{vae_forward.19} parent=11 // pred_check
        %p121 = pneg %p77
      $region18: #{vae_forward.19} parent=11 // pred_check_branch
        %123 = sbr.rel (%p121) target = $region20
      $region19: #{vae_forward.19} parent=11 // pred_region
        _
      $region20: #{vae_forward.19} parent=11 // pred_fallthru
        _
    $region12: #{vae_forward.19} parent=5 // pred_fallthru
      _
    %p124 = scmp.lt.s32.totalorder %s9, 4
    // Predicated region
    $region21: #{vae_forward.19} parent=5 // pred_check
      %p125 = pneg %p124
    $region22: #{vae_forward.19} parent=5 // pred_check_branch
      %127 = sbr.rel (%p125) target = $region24
    $region23: #{vae_forward.19} parent=5 // pred_region
      // Predicated region
      $region25: #{vae_forward.19} parent=23 // pred_check
        %p128 = pneg %p29
      $region26: #{vae_forward.19} parent=23 // pred_check_branch
        %130 = sbr.rel (%p128) target = $region28
      $region27: #{vae_forward.19} parent=23 // pred_region
        %s131 = smul.u32 64, %s9
        %p132 = scmp.lt.s32.totalorder %s131, 255
        %s133 = scalar_select %p132, %s131, 255
        %s134 = smul.addr %s133, 2
        %s135 = smul.addr %s134, 4
        %s136 = scalar_lea.vmem %s0, %s135
        %s137 = smul.u32 64, %s9
      $region28: #{vae_forward.19} parent=23 // pred_fallthru
        _
    $region24: #{vae_forward.19} parent=5 // pred_fallthru
      _
    %p138 = scmp.le.s32.totalorder 1, %s9
    %p139 = scmp.lt.s32.totalorder %s9, 5
    %p140 = pnand %p138, %p139
    %p141 = pneg %p140
    // Predicated region
    $region29: #{vae_forward.19} parent=5 // pred_check
      _
    $region30: #{vae_forward.19} parent=5 // pred_check_branch
      %143 = sbr.rel (%p140) target = $region32
    $region31: #{vae_forward.19} parent=5 // pred_region
      %s144 = ssub.s32 %s9, 1
      %s145 = smul.u32 64, %s14
      %p146 = scmp.lt.s32.totalorder %s145, 255
      %s147 = scalar_select %p146, %s145, 255
      %s148 = smul.addr %s147, 2
      %s149 = smul.addr %s148, 4
      %s150 = scalar_lea.vmem %s0, %s149
      %p151 = pneg %p35
      %p152 = pneg %p32
      %p153 = pneg %p56
      %p154 = pneg %p53
      %p155 = pneg %p77
      %p156 = pneg %p74
      %p157 = pneg %p103
      %p158 = pneg %p100
      %s159 = smul.u32 64, %s14
      %p160 = scmp.lt.s32.totalorder %s159, 255
      %s161 = scalar_select %p160, %s159, 255
      %s162 = smul.addr %s161, 8
      %s163 = scalar_lea.vmem %s3, %s162
      %s164 = smul.u32 64, %s14
      %p165 = scmp.lt.s32.totalorder %s164, 255
      %s166 = scalar_select %p165, %s164, 255
      %s167 = smul.addr %s166, 2
      %s168 = smul.addr %s167, 4
      %s169 = scalar_lea.vmem %s0, %s168
      %s170 = smul.u32 64, %s14
      %s171 = smul.u32 64, %s14
      %p172 = scmp.lt.s32.totalorder %s171, 255
      %s173 = scalar_select %p172, %s171, 255
      %s174 = smul.addr %s173, 8
      %s175 = scalar_lea.vmem %s3, %s174
      %s176 = smul.u32 64, %s14
      %v178 = vld [vmem:[%s169] sm:$0xff]
      %v179 = vld [vmem:[%s169 + $0x8] sm:$0xff]
      %v180 = vld [vmem:[%s169 + $0x10] sm:$0xff]
      %v181 = vld [vmem:[%s169 + $0x18] sm:$0xff]
      %v182 = vld [vmem:[%s169 + $0x20] sm:$0xff]
      %v183 = vld [vmem:[%s169 + $0x28] sm:$0xff]
      %v184 = vld [vmem:[%s169 + $0x30] sm:$0xff]
      %v185 = vld [vmem:[%s169 + $0x38] sm:$0xff]
      %v186 = vld [vmem:[%s169 + $0x40] sm:$0xff]
      %v187 = vld [vmem:[%s169 + $0x48] sm:$0xff]
      %v188 = vld [vmem:[%s169 + $0x50] sm:$0xff]
      %v189 = vld [vmem:[%s169 + $0x58] sm:$0xff]
      %v190 = vld [vmem:[%s169 + $0x60] sm:$0xff]
      %v191 = vld [vmem:[%s169 + $0x68] sm:$0xff]
      %v192 = vld [vmem:[%s169 + $0x70] sm:$0xff]
      %v193 = vld [vmem:[%s169 + $0x78] sm:$0xff]
      %v194 = vld [vmem:[%s169 + $0x80] sm:$0xff]
      %v195 = vld [vmem:[%s169 + $0x88] sm:$0xff]
      %v196 = vld [vmem:[%s169 + $0x90] sm:$0xff]
      %v197 = vld [vmem:[%s169 + $0x98] sm:$0xff]
      %v198 = vld [vmem:[%s169 + $0xa0] sm:$0xff]
      %v199 = vld [vmem:[%s169 + $0xa8] sm:$0xff]
      %v200 = vld [vmem:[%s169 + $0xb0] sm:$0xff]
      %v201 = vld [vmem:[%s169 + $0xb8] sm:$0xff]
      %v202 = vld [vmem:[%s169 + $0xc0] sm:$0xff]
      %v203 = vld [vmem:[%s169 + $0xc8] sm:$0xff]
      %v204 = vld [vmem:[%s169 + $0xd0] sm:$0xff]
      %v205 = vld [vmem:[%s169 + $0xd8] sm:$0xff]
      %v206 = vld [vmem:[%s169 + $0xe0] sm:$0xff]
      %v207 = vld [vmem:[%s169 + $0xe8] sm:$0xff]
      %v208 = vld [vmem:[%s169 + $0xf0] sm:$0xff]
      %v209 = vld [vmem:[%s169 + $0xf8] sm:$0xff]
      %v210 = vld [vmem:[%s169 + $0x100] sm:$0xff]
      %v211 = vld [vmem:[%s169 + $0x108] sm:$0xff]
      %v212 = vld [vmem:[%s169 + $0x110] sm:$0xff]
      %v213 = vld [vmem:[%s169 + $0x118] sm:$0xff]
      %v214 = vld [vmem:[%s169 + $0x120] sm:$0xff]
      %v215 = vld [vmem:[%s169 + $0x128] sm:$0xff]
      %v216 = vld [vmem:[%s169 + $0x130] sm:$0xff]
      %v217 = vld [vmem:[%s169 + $0x138] sm:$0xff]
      %v218 = vld [vmem:[%s169 + $0x140] sm:$0xff]
      %v219 = vld [vmem:[%s169 + $0x148] sm:$0xff]
      %v220 = vld [vmem:[%s169 + $0x150] sm:$0xff]
      %v221 = vld [vmem:[%s169 + $0x158] sm:$0xff]
      %v222 = vld [vmem:[%s169 + $0x160] sm:$0xff]
      %v223 = vld [vmem:[%s169 + $0x168] sm:$0xff]
      %v224 = vld [vmem:[%s169 + $0x170] sm:$0xff]
      %v225 = vld [vmem:[%s169 + $0x178] sm:$0xff]
      %v226 = vld [vmem:[%s169 + $0x180] sm:$0xff]
      %v227 = vld [vmem:[%s169 + $0x188] sm:$0xff]
      %v228 = vld [vmem:[%s169 + $0x190] sm:$0xff]
      %v229 = vld [vmem:[%s169 + $0x198] sm:$0xff]
      %v230 = vld [vmem:[%s169 + $0x1a0] sm:$0xff]
      %v231 = vld [vmem:[%s169 + $0x1a8] sm:$0xff]
      %v232 = vld [vmem:[%s169 + $0x1b0] sm:$0xff]
      %v233 = vld [vmem:[%s169 + $0x1b8] sm:$0xff]
      %v234 = vld [vmem:[%s169 + $0x1c0] sm:$0xff]
      %v235 = vld [vmem:[%s169 + $0x1c8] sm:$0xff]
      %v236 = vld [vmem:[%s169 + $0x1d0] sm:$0xff]
      %v237 = vld [vmem:[%s169 + $0x1d8] sm:$0xff]
      %v238 = vld [vmem:[%s169 + $0x1e0] sm:$0xff]
      %v239 = vld [vmem:[%s169 + $0x1e8] sm:$0xff]
      %v240 = vld [vmem:[%s169 + $0x1f0] sm:$0xff]
      %v241 = vld [vmem:[%s169 + $0x1f8] sm:$0xff]
      %v242 = vld [vmem:[%s1] sm:$0xf]
      %v243 = vld [vmem:[%s1 + $0x4] sm:$0xf]
      %v244 = vld [vmem:[%s1 + $0x8] sm:$0xf]
      %v245 = vld [vmem:[%s1 + $0xc] sm:$0xf]
      %v246 = vld [vmem:[%s1 + $0x10] sm:$0xf]
      %v247 = vld [vmem:[%s1 + $0x14] sm:$0xf]
      %v248 = vld [vmem:[%s1 + $0x18] sm:$0xf]
      %v249 = vld [vmem:[%s1 + $0x1c] sm:$0xf]
      %v250 = vld [vmem:[%s1 + $0x20] sm:$0xf]
      %v251 = vld [vmem:[%s1 + $0x24] sm:$0xf]
      %v252 = vld [vmem:[%s1 + $0x28] sm:$0xf]
      %v253 = vld [vmem:[%s1 + $0x2c] sm:$0xf]
      %v254 = vld [vmem:[%s1 + $0x30] sm:$0xf]
      %v255 = vld [vmem:[%s1 + $0x34] sm:$0xf]
      %v256 = vld [vmem:[%s1 + $0x38] sm:$0xf]
      %v257 = vld [vmem:[%s1 + $0x3c] sm:$0xf]
      %v258 = vld [vmem:[%s1 + $0x40] sm:$0xf]
      %v259 = vld [vmem:[%s1 + $0x44] sm:$0xf]
      %v260 = vld [vmem:[%s2] sm:$0x1]
      %v262 = vperm.slane %v260, 0
      %v328 = vunpack.c.l.b16 %v178
      %v329 = vunpack.c.h.b16 %v178
      %v330 = vunpack.c.l.b16 %v179
      %v331 = vunpack.c.h.b16 %v179
      %v332 = vunpack.c.l.b16 %v180
      %v333 = vunpack.c.h.b16 %v180
      %v334 = vunpack.c.l.b16 %v181
      %v335 = vunpack.c.h.b16 %v181
      %v336 = vunpack.c.l.b16 %v182
      %v337 = vunpack.c.h.b16 %v182
      %v338 = vunpack.c.l.b16 %v183
      %v339 = vunpack.c.h.b16 %v183
      %v340 = vunpack.c.l.b16 %v184
      %v341 = vunpack.c.h.b16 %v184
      %v342 = vunpack.c.l.b16 %v185
      %v343 = vunpack.c.h.b16 %v185
      %v344 = vunpack.c.l.b16 %v186
      %v345 = vunpack.c.h.b16 %v186
      %v346 = vunpack.c.l.b16 %v187
      %v347 = vunpack.c.h.b16 %v187
      %v348 = vunpack.c.l.b16 %v188
      %v349 = vunpack.c.h.b16 %v188
      %v350 = vunpack.c.l.b16 %v189
      %v351 = vunpack.c.h.b16 %v189
      %v352 = vunpack.c.l.b16 %v190
      %v353 = vunpack.c.h.b16 %v190
      %v354 = vunpack.c.l.b16 %v191
      %v355 = vunpack.c.h.b16 %v191
      %v356 = vunpack.c.l.b16 %v192
      %v357 = vunpack.c.h.b16 %v192
      %v358 = vunpack.c.l.b16 %v193
      %v359 = vunpack.c.h.b16 %v193
      %v360 = vunpack.c.l.b16 %v194
      %v361 = vunpack.c.h.b16 %v194
      %v362 = vunpack.c.l.b16 %v195
      %v363 = vunpack.c.h.b16 %v195
      %v364 = vunpack.c.l.b16 %v196
      %v365 = vunpack.c.h.b16 %v196
      %v366 = vunpack.c.l.b16 %v197
      %v367 = vunpack.c.h.b16 %v197
      %v368 = vunpack.c.l.b16 %v198
      %v369 = vunpack.c.h.b16 %v198
      %v370 = vunpack.c.l.b16 %v199
      %v371 = vunpack.c.h.b16 %v199
      %v372 = vunpack.c.l.b16 %v200
      %v373 = vunpack.c.h.b16 %v200
      %v374 = vunpack.c.l.b16 %v201
      %v375 = vunpack.c.h.b16 %v201
      %v376 = vunpack.c.l.b16 %v202
      %v377 = vunpack.c.h.b16 %v202
      %v378 = vunpack.c.l.b16 %v203
      %v379 = vunpack.c.h.b16 %v203
      %v380 = vunpack.c.l.b16 %v204
      %v381 = vunpack.c.h.b16 %v204
      %v382 = vunpack.c.l.b16 %v205
      %v383 = vunpack.c.h.b16 %v205
      %v384 = vunpack.c.l.b16 %v206
      %v385 = vunpack.c.h.b16 %v206
      %v386 = vunpack.c.l.b16 %v207
      %v387 = vunpack.c.h.b16 %v207
      %v388 = vunpack.c.l.b16 %v208
      %v389 = vunpack.c.h.b16 %v208
      %v390 = vunpack.c.l.b16 %v209
      %v391 = vunpack.c.h.b16 %v209
      %v392 = vunpack.c.l.b16 %v210
      %v393 = vunpack.c.h.b16 %v210
      %v394 = vunpack.c.l.b16 %v211
      %v395 = vunpack.c.h.b16 %v211
      %v396 = vunpack.c.l.b16 %v212
      %v397 = vunpack.c.h.b16 %v212
      %v398 = vunpack.c.l.b16 %v213
      %v399 = vunpack.c.h.b16 %v213
      %v400 = vunpack.c.l.b16 %v214
      %v401 = vunpack.c.h.b16 %v214
      %v402 = vunpack.c.l.b16 %v215
      %v403 = vunpack.c.h.b16 %v215
      %v404 = vunpack.c.l.b16 %v216
      %v405 = vunpack.c.h.b16 %v216
      %v406 = vunpack.c.l.b16 %v217
      %v407 = vunpack.c.h.b16 %v217
      %v408 = vunpack.c.l.b16 %v218
      %v409 = vunpack.c.h.b16 %v218
      %v410 = vunpack.c.l.b16 %v219
      %v411 = vunpack.c.h.b16 %v219
      %v412 = vunpack.c.l.b16 %v220
      %v413 = vunpack.c.h.b16 %v220
      %v414 = vunpack.c.l.b16 %v221
      %v415 = vunpack.c.h.b16 %v221
      %v416 = vunpack.c.l.b16 %v222
      %v417 = vunpack.c.h.b16 %v222
      %v418 = vunpack.c.l.b16 %v223
      %v419 = vunpack.c.h.b16 %v223
      %v420 = vunpack.c.l.b16 %v224
      %v421 = vunpack.c.h.b16 %v224
      %v422 = vunpack.c.l.b16 %v225
      %v423 = vunpack.c.h.b16 %v225
      %v424 = vunpack.c.l.b16 %v226
      %v425 = vunpack.c.h.b16 %v226
      %v426 = vunpack.c.l.b16 %v227
      %v427 = vunpack.c.h.b16 %v227
      %v428 = vunpack.c.l.b16 %v228
      %v429 = vunpack.c.h.b16 %v228
      %v430 = vunpack.c.l.b16 %v229
      %v431 = vunpack.c.h.b16 %v229
      %v432 = vunpack.c.l.b16 %v230
      %v433 = vunpack.c.h.b16 %v230
      %v434 = vunpack.c.l.b16 %v231
      %v435 = vunpack.c.h.b16 %v231
      %v436 = vunpack.c.l.b16 %v232
      %v437 = vunpack.c.h.b16 %v232
      %v438 = vunpack.c.l.b16 %v233
      %v439 = vunpack.c.h.b16 %v233
      %v440 = vunpack.c.l.b16 %v234
      %v441 = vunpack.c.h.b16 %v234
      %v442 = vunpack.c.l.b16 %v235
      %v443 = vunpack.c.h.b16 %v235
      %v444 = vunpack.c.l.b16 %v236
      %v445 = vunpack.c.h.b16 %v236
      %v446 = vunpack.c.l.b16 %v237
      %v447 = vunpack.c.h.b16 %v237
      %v448 = vunpack.c.l.b16 %v238
      %v449 = vunpack.c.h.b16 %v238
      %v450 = vunpack.c.l.b16 %v239
      %v451 = vunpack.c.h.b16 %v239
      %v452 = vunpack.c.l.b16 %v240
      %v453 = vunpack.c.h.b16 %v240
      %v454 = vunpack.c.l.b16 %v241
      %v455 = vunpack.c.h.b16 %v241
      %v456 = vpack.c.b16 %v330, %v328
      %v457 = vpack.c.b16 %v331, %v329
      %v458 = vpack.c.b16 %v334, %v332
      %v459 = vpack.c.b16 %v335, %v333
      %v460 = vpack.c.b16 %v338, %v336
      %v461 = vpack.c.b16 %v339, %v337
      %v462 = vpack.c.b16 %v342, %v340
      %v463 = vpack.c.b16 %v343, %v341
      %v464 = vpack.c.b16 %v346, %v344
      %v465 = vpack.c.b16 %v347, %v345
      %v466 = vpack.c.b16 %v350, %v348
      %v467 = vpack.c.b16 %v351, %v349
      %v468 = vpack.c.b16 %v354, %v352
      %v469 = vpack.c.b16 %v355, %v353
      %v470 = vpack.c.b16 %v358, %v356
      %v471 = vpack.c.b16 %v359, %v357
      %v472 = vpack.c.b16 %v362, %v360
      %v473 = vpack.c.b16 %v363, %v361
      %v474 = vpack.c.b16 %v366, %v364
      %v475 = vpack.c.b16 %v367, %v365
      %v476 = vpack.c.b16 %v370, %v368
      %v477 = vpack.c.b16 %v371, %v369
      %v478 = vpack.c.b16 %v374, %v372
      %v479 = vpack.c.b16 %v375, %v373
      %v480 = vpack.c.b16 %v378, %v376
      %v481 = vpack.c.b16 %v379, %v377
      %v482 = vpack.c.b16 %v382, %v380
      %v483 = vpack.c.b16 %v383, %v381
      %v484 = vpack.c.b16 %v386, %v384
      %v485 = vpack.c.b16 %v387, %v385
      %v486 = vpack.c.b16 %v390, %v388
      %v487 = vpack.c.b16 %v391, %v389
      %v488 = vpack.c.b16 %v394, %v392
      %v489 = vpack.c.b16 %v395, %v393
      %v490 = vpack.c.b16 %v398, %v396
      %v491 = vpack.c.b16 %v399, %v397
      %v492 = vpack.c.b16 %v402, %v400
      %v493 = vpack.c.b16 %v403, %v401
      %v494 = vpack.c.b16 %v406, %v404
      %v495 = vpack.c.b16 %v407, %v405
      %v496 = vpack.c.b16 %v410, %v408
      %v497 = vpack.c.b16 %v411, %v409
      %v498 = vpack.c.b16 %v414, %v412
      %v499 = vpack.c.b16 %v415, %v413
      %v500 = vpack.c.b16 %v418, %v416
      %v501 = vpack.c.b16 %v419, %v417
      %v502 = vpack.c.b16 %v422, %v420
      %v503 = vpack.c.b16 %v423, %v421
      %v504 = vpack.c.b16 %v426, %v424
      %v505 = vpack.c.b16 %v427, %v425
      %v506 = vpack.c.b16 %v430, %v428
      %v507 = vpack.c.b16 %v431, %v429
      %v508 = vpack.c.b16 %v434, %v432
      %v509 = vpack.c.b16 %v435, %v433
      %v510 = vpack.c.b16 %v438, %v436
      %v511 = vpack.c.b16 %v439, %v437
      %v512 = vpack.c.b16 %v442, %v440
      %v513 = vpack.c.b16 %v443, %v441
      %v514 = vpack.c.b16 %v446, %v444
      %v515 = vpack.c.b16 %v447, %v445
      %v516 = vpack.c.b16 %v450, %v448
      %v517 = vpack.c.b16 %v451, %v449
      %v518 = vpack.c.b16 %v454, %v452
      %v519 = vpack.c.b16 %v455, %v453
      %v570 = vunpack.c.l.b16 %v242
      %v571 = vunpack.c.l.b16 %v243
      %v572 = vunpack.c.l.b16 %v244
      %v573 = vunpack.c.l.b16 %v245
      %v574 = vunpack.c.l.b16 %v246
      %v575 = vunpack.c.l.b16 %v247
      %v576 = vunpack.c.l.b16 %v248
      %v577 = vunpack.c.l.b16 %v249
      %v578 = vunpack.c.l.b16 %v250
      %v579 = vunpack.c.l.b16 %v251
      %v580 = vunpack.c.l.b16 %v252
      %v581 = vunpack.c.l.b16 %v253
      %v582 = vunpack.c.l.b16 %v254
      %v583 = vunpack.c.l.b16 %v255
      %v584 = vunpack.c.l.b16 %v256
      %v585 = vunpack.c.l.b16 %v257
      %v586 = vunpack.c.l.b16 %v258
      %v587 = vunpack.c.l.b16 %v259
      %v588 = vpack.c.b16 %v571, %v570
      %v589 = vpack.c.b16 %v573, %v572
      %v590 = vpack.c.b16 %v575, %v574
      %v591 = vpack.c.b16 %v577, %v576
      %v592 = vpack.c.b16 %v579, %v578
      %v593 = vpack.c.b16 %v581, %v580
      %v594 = vpack.c.b16 %v583, %v582
      %v595 = vpack.c.b16 %v585, %v584
      %v596 = vpack.c.b16 %v587, %v586
      %vm606 = vcmask 130048
      %v608 = vsel %vm606, %v457, 0
      %v611 = vsel %vm606, %v459, 0
      %v614 = vsel %vm606, %v461, 0
      %v617 = vsel %vm606, %v463, 0
      %v620 = vsel %vm606, %v465, 0
      %v623 = vsel %vm606, %v467, 0
      %v626 = vsel %vm606, %v469, 0
      %v629 = vsel %vm606, %v471, 0
      %v632 = vsel %vm606, %v473, 0
      %v635 = vsel %vm606, %v475, 0
      %v638 = vsel %vm606, %v477, 0
      %v641 = vsel %vm606, %v479, 0
      %v644 = vsel %vm606, %v481, 0
      %v647 = vsel %vm606, %v483, 0
      %v650 = vsel %vm606, %v485, 0
      %v653 = vsel %vm606, %v487, 0
      %v656 = vsel %vm606, %v489, 0
      %v659 = vsel %vm606, %v491, 0
      %v662 = vsel %vm606, %v493, 0
      %v665 = vsel %vm606, %v495, 0
      %v668 = vsel %vm606, %v497, 0
      %v671 = vsel %vm606, %v499, 0
      %v674 = vsel %vm606, %v501, 0
      %v677 = vsel %vm606, %v503, 0
      %v680 = vsel %vm606, %v505, 0
      %v683 = vsel %vm606, %v507, 0
      %v686 = vsel %vm606, %v509, 0
      %v689 = vsel %vm606, %v511, 0
      %v692 = vsel %vm606, %v513, 0
      %v695 = vsel %vm606, %v515, 0
      %v698 = vsel %vm606, %v517, 0
      %v701 = vsel %vm606, %v519, 0
      %703 = vmatpush.bf16.msra.mxu0 %v595
      %704 = vmatpush.bf16.msra.mxu0 %v594
      %705 = vmatpush.bf16.msra.mxu0 %v593
      %706 = vmatpush.bf16.msra.mxu0 %v592
      %707 = vmatpush.bf16.msra.mxu0 %v591
      %708 = vmatpush.bf16.msra.mxu0 %v590
      %709 = vmatpush.bf16.msra.mxu0 %v589
      %710 = vmatpush.bf16.msra.mxu0 %v588
      %711 = vmatmul.bf16.gmra.mxu0 %v456
      %v712 = vpop.f32.mrf.mxu0
      %v713 = vadd.f32 %v262, %v712
      %v714 = vpop.f32.mrf.mxu0
      %v715 = vadd.f32 %v262, %v714
      %716 = vmatmul.bf16.gmra.mxu0 %v458
      %v717 = vpop.f32.mrf.mxu0
      %v718 = vadd.f32 %v262, %v717
      %v719 = vpop.f32.mrf.mxu0
      %v720 = vadd.f32 %v262, %v719
      %721 = vmatmul.bf16.gmra.mxu0 %v460
      %v722 = vpop.f32.mrf.mxu0
      %v723 = vadd.f32 %v262, %v722
      %v724 = vpop.f32.mrf.mxu0
      %v725 = vadd.f32 %v262, %v724
      %726 = vmatmul.bf16.gmra.mxu0 %v462
      %v727 = vpop.f32.mrf.mxu0
      %v728 = vadd.f32 %v262, %v727
      %v729 = vpop.f32.mrf.mxu0
      %v730 = vadd.f32 %v262, %v729
      %731 = vmatmul.bf16.gmra.mxu0 %v464
      %v732 = vpop.f32.mrf.mxu0
      %v733 = vadd.f32 %v262, %v732
      %v734 = vpop.f32.mrf.mxu0
      %v735 = vadd.f32 %v262, %v734
      %736 = vmatmul.bf16.gmra.mxu0 %v466
      %v737 = vpop.f32.mrf.mxu0
      %v738 = vadd.f32 %v262, %v737
      %v739 = vpop.f32.mrf.mxu0
      %v740 = vadd.f32 %v262, %v739
      %741 = vmatmul.bf16.gmra.mxu0 %v468
      %v742 = vpop.f32.mrf.mxu0
      %v743 = vadd.f32 %v262, %v742
      %v744 = vpop.f32.mrf.mxu0
      %v745 = vadd.f32 %v262, %v744
      %746 = vmatmul.bf16.gmra.mxu0 %v470
      %v747 = vpop.f32.mrf.mxu0
      %v748 = vadd.f32 %v262, %v747
      %v749 = vpop.f32.mrf.mxu0
      %v750 = vadd.f32 %v262, %v749
      %751 = vmatmul.bf16.gmra.mxu0 %v472
      %v752 = vpop.f32.mrf.mxu0
      %v753 = vadd.f32 %v262, %v752
      %v754 = vpop.f32.mrf.mxu0
      %v755 = vadd.f32 %v262, %v754
      %756 = vmatmul.bf16.gmra.mxu0 %v474
      %v757 = vpop.f32.mrf.mxu0
      %v758 = vadd.f32 %v262, %v757
      %v759 = vpop.f32.mrf.mxu0
      %v760 = vadd.f32 %v262, %v759
      %761 = vmatmul.bf16.gmra.mxu0 %v476
      %v762 = vpop.f32.mrf.mxu0
      %v763 = vadd.f32 %v262, %v762
      %v764 = vpop.f32.mrf.mxu0
      %v765 = vadd.f32 %v262, %v764
      %766 = vmatmul.bf16.gmra.mxu0 %v478
      %v767 = vpop.f32.mrf.mxu0
      %v768 = vadd.f32 %v262, %v767
      %v769 = vpop.f32.mrf.mxu0
      %v770 = vadd.f32 %v262, %v769
      %771 = vmatmul.bf16.gmra.mxu0 %v480
      %v772 = vpop.f32.mrf.mxu0
      %v773 = vadd.f32 %v262, %v772
      %v774 = vpop.f32.mrf.mxu0
      %v775 = vadd.f32 %v262, %v774
      %776 = vmatmul.bf16.gmra.mxu0 %v482
      %v777 = vpop.f32.mrf.mxu0
      %v778 = vadd.f32 %v262, %v777
      %v779 = vpop.f32.mrf.mxu0
      %v780 = vadd.f32 %v262, %v779
      %781 = vmatmul.bf16.gmra.mxu0 %v484
      %v782 = vpop.f32.mrf.mxu0
      %v783 = vadd.f32 %v262, %v782
      %v784 = vpop.f32.mrf.mxu0
      %v785 = vadd.f32 %v262, %v784
      %786 = vmatmul.bf16.gmra.mxu0 %v486
      %v787 = vpop.f32.mrf.mxu0
      %v788 = vadd.f32 %v262, %v787
      %v789 = vpop.f32.mrf.mxu0
      %v790 = vadd.f32 %v262, %v789
      %791 = vmatmul.bf16.gmra.mxu0 %v488
      %v792 = vpop.f32.mrf.mxu0
      %v793 = vadd.f32 %v262, %v792
      %v794 = vpop.f32.mrf.mxu0
      %v795 = vadd.f32 %v262, %v794
      %796 = vmatmul.bf16.gmra.mxu0 %v490
      %v797 = vpop.f32.mrf.mxu0
      %v798 = vadd.f32 %v262, %v797
      %v799 = vpop.f32.mrf.mxu0
      %v800 = vadd.f32 %v262, %v799
      %801 = vmatmul.bf16.gmra.mxu0 %v492
      %v802 = vpop.f32.mrf.mxu0
      %v803 = vadd.f32 %v262, %v802
      %v804 = vpop.f32.mrf.mxu0
      %v805 = vadd.f32 %v262, %v804
      %806 = vmatmul.bf16.gmra.mxu0 %v494
      %v807 = vpop.f32.mrf.mxu0
      %v808 = vadd.f32 %v262, %v807
      %v809 = vpop.f32.mrf.mxu0
      %v810 = vadd.f32 %v262, %v809
      %811 = vmatmul.bf16.gmra.mxu0 %v496
      %v812 = vpop.f32.mrf.mxu0
      %v813 = vadd.f32 %v262, %v812
      %v814 = vpop.f32.mrf.mxu0
      %v815 = vadd.f32 %v262, %v814
      %816 = vmatmul.bf16.gmra.mxu0 %v498
      %v817 = vpop.f32.mrf.mxu0
      %v818 = vadd.f32 %v262, %v817
      %v819 = vpop.f32.mrf.mxu0
      %v820 = vadd.f32 %v262, %v819
      %821 = vmatmul.bf16.gmra.mxu0 %v500
      %v822 = vpop.f32.mrf.mxu0
      %v823 = vadd.f32 %v262, %v822
      %v824 = vpop.f32.mrf.mxu0
      %v825 = vadd.f32 %v262, %v824
      %826 = vmatmul.bf16.gmra.mxu0 %v502
      %v827 = vpop.f32.mrf.mxu0
      %v828 = vadd.f32 %v262, %v827
      %v829 = vpop.f32.mrf.mxu0
      %v830 = vadd.f32 %v262, %v829
      %831 = vmatmul.bf16.gmra.mxu0 %v504
      %v832 = vpop.f32.mrf.mxu0
      %v833 = vadd.f32 %v262, %v832
      %v834 = vpop.f32.mrf.mxu0
      %v835 = vadd.f32 %v262, %v834
      %836 = vmatmul.bf16.gmra.mxu0 %v506
      %v837 = vpop.f32.mrf.mxu0
      %v838 = vadd.f32 %v262, %v837
      %v839 = vpop.f32.mrf.mxu0
      %v840 = vadd.f32 %v262, %v839
      %841 = vmatmul.bf16.gmra.mxu0 %v508
      %v842 = vpop.f32.mrf.mxu0
      %v843 = vadd.f32 %v262, %v842
      %v844 = vpop.f32.mrf.mxu0
      %v845 = vadd.f32 %v262, %v844
      %846 = vmatmul.bf16.gmra.mxu0 %v510
      %v847 = vpop.f32.mrf.mxu0
      %v848 = vadd.f32 %v262, %v847
      %v849 = vpop.f32.mrf.mxu0
      %v850 = vadd.f32 %v262, %v849
      %851 = vmatmul.bf16.gmra.mxu0 %v512
      %v852 = vpop.f32.mrf.mxu0
      %v853 = vadd.f32 %v262, %v852
      %v854 = vpop.f32.mrf.mxu0
      %v855 = vadd.f32 %v262, %v854
      %856 = vmatmul.bf16.gmra.mxu0 %v514
      %v857 = vpop.f32.mrf.mxu0
      %v858 = vadd.f32 %v262, %v857
      %v859 = vpop.f32.mrf.mxu0
      %v860 = vadd.f32 %v262, %v859
      %861 = vmatmul.bf16.gmra.mxu0 %v516
      %v862 = vpop.f32.mrf.mxu0
      %v863 = vadd.f32 %v262, %v862
      %v864 = vpop.f32.mrf.mxu0
      %v865 = vadd.f32 %v262, %v864
      %866 = vmatmul.bf16.gmra.mxu0 %v518
      %v867 = vpop.f32.mrf.mxu0
      %v868 = vadd.f32 %v262, %v867
      %v869 = vpop.f32.mrf.mxu0
      %v870 = vadd.f32 %v262, %v869
      %871 = vdwg.mxu0
      %872 = vmatpush.bf16.msra.mxu0 0
      %873 = vmatpush.bf16.msra.mxu0 0
      %874 = vmatpush.bf16.msra.mxu0 0
      %875 = vmatpush.bf16.msra.mxu0 0
      %876 = vmatpush.bf16.msra.mxu0 0
      %877 = vmatpush.bf16.msra.mxu0 0
      %878 = vmatpush.bf16.msra.mxu0 0
      %879 = vmatpush.bf16.msra.mxu0 %v596
      %880 = vmatmul.bf16.gmra.mxu0 %v608
      %v881 = vpop.f32.mrf.mxu0
      %v882 = vadd.f32 %v713, %v881
      %v883 = vpop.f32.mrf.mxu0
      %v884 = vadd.f32 %v715, %v883
      %885 = vmatmul.bf16.gmra.mxu0 %v611
      %v886 = vpop.f32.mrf.mxu0
      %v887 = vadd.f32 %v718, %v886
      %v888 = vpop.f32.mrf.mxu0
      %v889 = vadd.f32 %v720, %v888
      %890 = vmatmul.bf16.gmra.mxu0 %v614
      %v891 = vpop.f32.mrf.mxu0
      %v892 = vadd.f32 %v723, %v891
      %v893 = vpop.f32.mrf.mxu0
      %v894 = vadd.f32 %v725, %v893
      %895 = vmatmul.bf16.gmra.mxu0 %v617
      %v896 = vpop.f32.mrf.mxu0
      %v897 = vadd.f32 %v728, %v896
      %v898 = vpop.f32.mrf.mxu0
      %v899 = vadd.f32 %v730, %v898
      %900 = vmatmul.bf16.gmra.mxu0 %v620
      %v901 = vpop.f32.mrf.mxu0
      %v902 = vadd.f32 %v733, %v901
      %v903 = vpop.f32.mrf.mxu0
      %v904 = vadd.f32 %v735, %v903
      %905 = vmatmul.bf16.gmra.mxu0 %v623
      %v906 = vpop.f32.mrf.mxu0
      %v907 = vadd.f32 %v738, %v906
      %v908 = vpop.f32.mrf.mxu0
      %v909 = vadd.f32 %v740, %v908
      %910 = vmatmul.bf16.gmra.mxu0 %v626
      %v911 = vpop.f32.mrf.mxu0
      %v912 = vadd.f32 %v743, %v911
      %v913 = vpop.f32.mrf.mxu0
      %v914 = vadd.f32 %v745, %v913
      %915 = vmatmul.bf16.gmra.mxu0 %v629
      %v916 = vpop.f32.mrf.mxu0
      %v917 = vadd.f32 %v748, %v916
      %v918 = vpop.f32.mrf.mxu0
      %v919 = vadd.f32 %v750, %v918
      %920 = vmatmul.bf16.gmra.mxu0 %v632
      %v921 = vpop.f32.mrf.mxu0
      %v922 = vadd.f32 %v753, %v921
      %v923 = vpop.f32.mrf.mxu0
      %v924 = vadd.f32 %v755, %v923
      %925 = vmatmul.bf16.gmra.mxu0 %v635
      %v926 = vpop.f32.mrf.mxu0
      %v927 = vadd.f32 %v758, %v926
      %v928 = vpop.f32.mrf.mxu0
      %v929 = vadd.f32 %v760, %v928
      %930 = vmatmul.bf16.gmra.mxu0 %v638
      %v931 = vpop.f32.mrf.mxu0
      %v932 = vadd.f32 %v763, %v931
      %v933 = vpop.f32.mrf.mxu0
      %v934 = vadd.f32 %v765, %v933
      %935 = vmatmul.bf16.gmra.mxu0 %v641
      %v936 = vpop.f32.mrf.mxu0
      %v937 = vadd.f32 %v768, %v936
      %v938 = vpop.f32.mrf.mxu0
      %v939 = vadd.f32 %v770, %v938
      %940 = vmatmul.bf16.gmra.mxu0 %v644
      %v941 = vpop.f32.mrf.mxu0
      %v942 = vadd.f32 %v773, %v941
      %v943 = vpop.f32.mrf.mxu0
      %v944 = vadd.f32 %v775, %v943
      %945 = vmatmul.bf16.gmra.mxu0 %v647
      %v946 = vpop.f32.mrf.mxu0
      %v947 = vadd.f32 %v778, %v946
      %v948 = vpop.f32.mrf.mxu0
      %v949 = vadd.f32 %v780, %v948
      %950 = vmatmul.bf16.gmra.mxu0 %v650
      %v951 = vpop.f32.mrf.mxu0
      %v952 = vadd.f32 %v783, %v951
      %v953 = vpop.f32.mrf.mxu0
      %v954 = vadd.f32 %v785, %v953
      %955 = vmatmul.bf16.gmra.mxu0 %v653
      %v956 = vpop.f32.mrf.mxu0
      %v957 = vadd.f32 %v788, %v956
      %v958 = vpop.f32.mrf.mxu0
      %v959 = vadd.f32 %v790, %v958
      %960 = vmatmul.bf16.gmra.mxu0 %v656
      %v961 = vpop.f32.mrf.mxu0
      %v962 = vadd.f32 %v793, %v961
      %v963 = vpop.f32.mrf.mxu0
      %v964 = vadd.f32 %v795, %v963
      %965 = vmatmul.bf16.gmra.mxu0 %v659
      %v966 = vpop.f32.mrf.mxu0
      %v967 = vadd.f32 %v798, %v966
      %v968 = vpop.f32.mrf.mxu0
      %v969 = vadd.f32 %v800, %v968
      %970 = vmatmul.bf16.gmra.mxu0 %v662
      %v971 = vpop.f32.mrf.mxu0
      %v972 = vadd.f32 %v803, %v971
      %v973 = vpop.f32.mrf.mxu0
      %v974 = vadd.f32 %v805, %v973
      %975 = vmatmul.bf16.gmra.mxu0 %v665
      %v976 = vpop.f32.mrf.mxu0
      %v977 = vadd.f32 %v808, %v976
      %v978 = vpop.f32.mrf.mxu0
      %v979 = vadd.f32 %v810, %v978
      %980 = vmatmul.bf16.gmra.mxu0 %v668
      %v981 = vpop.f32.mrf.mxu0
      %v982 = vadd.f32 %v813, %v981
      %v983 = vpop.f32.mrf.mxu0
      %v984 = vadd.f32 %v815, %v983
      %985 = vmatmul.bf16.gmra.mxu0 %v671
      %v986 = vpop.f32.mrf.mxu0
      %v987 = vadd.f32 %v818, %v986
      %v988 = vpop.f32.mrf.mxu0
      %v989 = vadd.f32 %v820, %v988
      %990 = vmatmul.bf16.gmra.mxu0 %v674
      %v991 = vpop.f32.mrf.mxu0
      %v992 = vadd.f32 %v823, %v991
      %v993 = vpop.f32.mrf.mxu0
      %v994 = vadd.f32 %v825, %v993
      %995 = vmatmul.bf16.gmra.mxu0 %v677
      %v996 = vpop.f32.mrf.mxu0
      %v997 = vadd.f32 %v828, %v996
      %v998 = vpop.f32.mrf.mxu0
      %v999 = vadd.f32 %v830, %v998
      %1000 = vmatmul.bf16.gmra.mxu0 %v680
      %v1001 = vpop.f32.mrf.mxu0
      %v1002 = vadd.f32 %v833, %v1001
      %v1003 = vpop.f32.mrf.mxu0
      %v1004 = vadd.f32 %v835, %v1003
      %1005 = vmatmul.bf16.gmra.mxu0 %v683
      %v1006 = vpop.f32.mrf.mxu0
      %v1007 = vadd.f32 %v838, %v1006
      %v1008 = vpop.f32.mrf.mxu0
      %v1009 = vadd.f32 %v840, %v1008
      %1010 = vmatmul.bf16.gmra.mxu0 %v686
      %v1011 = vpop.f32.mrf.mxu0
      %v1012 = vadd.f32 %v843, %v1011
      %v1013 = vpop.f32.mrf.mxu0
      %v1014 = vadd.f32 %v845, %v1013
      %1015 = vmatmul.bf16.gmra.mxu0 %v689
      %v1016 = vpop.f32.mrf.mxu0
      %v1017 = vadd.f32 %v848, %v1016
      %v1018 = vpop.f32.mrf.mxu0
      %v1019 = vadd.f32 %v850, %v1018
      %1020 = vmatmul.bf16.gmra.mxu0 %v692
      %v1021 = vpop.f32.mrf.mxu0
      %v1022 = vadd.f32 %v853, %v1021
      %v1023 = vpop.f32.mrf.mxu0
      %v1024 = vadd.f32 %v855, %v1023
      %1025 = vmatmul.bf16.gmra.mxu0 %v695
      %v1026 = vpop.f32.mrf.mxu0
      %v1027 = vadd.f32 %v858, %v1026
      %v1028 = vpop.f32.mrf.mxu0
      %v1029 = vadd.f32 %v860, %v1028
      %1030 = vmatmul.bf16.gmra.mxu0 %v698
      %v1031 = vpop.f32.mrf.mxu0
      %v1032 = vadd.f32 %v863, %v1031
      %v1033 = vpop.f32.mrf.mxu0
      %v1034 = vadd.f32 %v865, %v1033
      %1035 = vmatmul.bf16.gmra.mxu0 %v701
      %v1036 = vpop.f32.mrf.mxu0
      %v1037 = vadd.f32 %v868, %v1036
      %v1038 = vpop.f32.mrf.mxu0
      %v1039 = vadd.f32 %v870, %v1038
      %1040 = vdwg.mxu0
      %v1041 = vtanh.pop %v882
      %v1042 = vtanh.pop %v884
      %v1043 = vtanh.pop %v887
      %v1044 = vtanh.pop %v889
      %v1045 = vtanh.pop %v892
      %v1046 = vtanh.pop %v894
      %v1047 = vtanh.pop %v897
      %v1048 = vtanh.pop %v899
      %v1049 = vtanh.pop %v902
      %v1050 = vtanh.pop %v904
      %v1051 = vtanh.pop %v907
      %v1052 = vtanh.pop %v909
      %v1053 = vtanh.pop %v912
      %v1054 = vtanh.pop %v914
      %v1055 = vtanh.pop %v917
      %v1056 = vtanh.pop %v919
      %v1057 = vtanh.pop %v922
      %v1058 = vtanh.pop %v924
      %v1059 = vtanh.pop %v927
      %v1060 = vtanh.pop %v929
      %v1061 = vtanh.pop %v932
      %v1062 = vtanh.pop %v934
      %v1063 = vtanh.pop %v937
      %v1064 = vtanh.pop %v939
      %v1065 = vtanh.pop %v942
      %v1066 = vtanh.pop %v944
      %v1067 = vtanh.pop %v947
      %v1068 = vtanh.pop %v949
      %v1069 = vtanh.pop %v952
      %v1070 = vtanh.pop %v954
      %v1071 = vtanh.pop %v957
      %v1072 = vtanh.pop %v959
      %v1073 = vtanh.pop %v962
      %v1074 = vtanh.pop %v964
      %v1075 = vtanh.pop %v967
      %v1076 = vtanh.pop %v969
      %v1077 = vtanh.pop %v972
      %v1078 = vtanh.pop %v974
      %v1079 = vtanh.pop %v977
      %v1080 = vtanh.pop %v979
      %v1081 = vtanh.pop %v982
      %v1082 = vtanh.pop %v984
      %v1083 = vtanh.pop %v987
      %v1084 = vtanh.pop %v989
      %v1085 = vtanh.pop %v992
      %v1086 = vtanh.pop %v994
      %v1087 = vtanh.pop %v997
      %v1088 = vtanh.pop %v999
      %v1089 = vtanh.pop %v1002
      %v1090 = vtanh.pop %v1004
      %v1091 = vtanh.pop %v1007
      %v1092 = vtanh.pop %v1009
      %v1093 = vtanh.pop %v1012
      %v1094 = vtanh.pop %v1014
      %v1095 = vtanh.pop %v1017
      %v1096 = vtanh.pop %v1019
      %v1097 = vtanh.pop %v1022
      %v1098 = vtanh.pop %v1024
      %v1099 = vtanh.pop %v1027
      %v1100 = vtanh.pop %v1029
      %v1101 = vtanh.pop %v1032
      %v1102 = vtanh.pop %v1034
      %v1103 = vtanh.pop %v1037
      %v1104 = vtanh.pop %v1039
      %1105 = vst [vmem:[%s175] sm:$0xff] %v1041
      %1106 = vst [vmem:[%s175 + $0x8] sm:$0xff] %v1042
      %1107 = vst [vmem:[%s175 + $0x10] sm:$0xff] %v1043
      %1108 = vst [vmem:[%s175 + $0x18] sm:$0xff] %v1044
      %1109 = vst [vmem:[%s175 + $0x20] sm:$0xff] %v1045
      %1110 = vst [vmem:[%s175 + $0x28] sm:$0xff] %v1046
      %1111 = vst [vmem:[%s175 + $0x30] sm:$0xff] %v1047
      %1112 = vst [vmem:[%s175 + $0x38] sm:$0xff] %v1048
      %1113 = vst [vmem:[%s175 + $0x40] sm:$0xff] %v1049
      %1114 = vst [vmem:[%s175 + $0x48] sm:$0xff] %v1050
      %1115 = vst [vmem:[%s175 + $0x50] sm:$0xff] %v1051
      %1116 = vst [vmem:[%s175 + $0x58] sm:$0xff] %v1052
      %1117 = vst [vmem:[%s175 + $0x60] sm:$0xff] %v1053
      %1118 = vst [vmem:[%s175 + $0x68] sm:$0xff] %v1054
      %1119 = vst [vmem:[%s175 + $0x70] sm:$0xff] %v1055
      %1120 = vst [vmem:[%s175 + $0x78] sm:$0xff] %v1056
      %1121 = vst [vmem:[%s175 + $0x80] sm:$0xff] %v1057
      %1122 = vst [vmem:[%s175 + $0x88] sm:$0xff] %v1058
      %1123 = vst [vmem:[%s175 + $0x90] sm:$0xff] %v1059
      %1124 = vst [vmem:[%s175 + $0x98] sm:$0xff] %v1060
      %1125 = vst [vmem:[%s175 + $0xa0] sm:$0xff] %v1061
      %1126 = vst [vmem:[%s175 + $0xa8] sm:$0xff] %v1062
      %1127 = vst [vmem:[%s175 + $0xb0] sm:$0xff] %v1063
      %1128 = vst [vmem:[%s175 + $0xb8] sm:$0xff] %v1064
      %1129 = vst [vmem:[%s175 + $0xc0] sm:$0xff] %v1065
      %1130 = vst [vmem:[%s175 + $0xc8] sm:$0xff] %v1066
      %1131 = vst [vmem:[%s175 + $0xd0] sm:$0xff] %v1067
      %1132 = vst [vmem:[%s175 + $0xd8] sm:$0xff] %v1068
      %1133 = vst [vmem:[%s175 + $0xe0] sm:$0xff] %v1069
      %1134 = vst [vmem:[%s175 + $0xe8] sm:$0xff] %v1070
      %1135 = vst [vmem:[%s175 + $0xf0] sm:$0xff] %v1071
      %1136 = vst [vmem:[%s175 + $0xf8] sm:$0xff] %v1072
      %1137 = vst [vmem:[%s175 + $0x100] sm:$0xff] %v1073
      %1138 = vst [vmem:[%s175 + $0x108] sm:$0xff] %v1074
      %1139 = vst [vmem:[%s175 + $0x110] sm:$0xff] %v1075
      %1140 = vst [vmem:[%s175 + $0x118] sm:$0xff] %v1076
      %1141 = vst [vmem:[%s175 + $0x120] sm:$0xff] %v1077
      %1142 = vst [vmem:[%s175 + $0x128] sm:$0xff] %v1078
      %1143 = vst [vmem:[%s175 + $0x130] sm:$0xff] %v1079
      %1144 = vst [vmem:[%s175 + $0x138] sm:$0xff] %v1080
      %1145 = vst [vmem:[%s175 + $0x140] sm:$0xff] %v1081
      %1146 = vst [vmem:[%s175 + $0x148] sm:$0xff] %v1082
      %1147 = vst [vmem:[%s175 + $0x150] sm:$0xff] %v1083
      %1148 = vst [vmem:[%s175 + $0x158] sm:$0xff] %v1084
      %1149 = vst [vmem:[%s175 + $0x160] sm:$0xff] %v1085
      %1150 = vst [vmem:[%s175 + $0x168] sm:$0xff] %v1086
      %1151 = vst [vmem:[%s175 + $0x170] sm:$0xff] %v1087
      %1152 = vst [vmem:[%s175 + $0x178] sm:$0xff] %v1088
      %1153 = vst [vmem:[%s175 + $0x180] sm:$0xff] %v1089
      %1154 = vst [vmem:[%s175 + $0x188] sm:$0xff] %v1090
      %1155 = vst [vmem:[%s175 + $0x190] sm:$0xff] %v1091
      %1156 = vst [vmem:[%s175 + $0x198] sm:$0xff] %v1092
      %1157 = vst [vmem:[%s175 + $0x1a0] sm:$0xff] %v1093
      %1158 = vst [vmem:[%s175 + $0x1a8] sm:$0xff] %v1094
      %1159 = vst [vmem:[%s175 + $0x1b0] sm:$0xff] %v1095
      %1160 = vst [vmem:[%s175 + $0x1b8] sm:$0xff] %v1096
      %1161 = vst [vmem:[%s175 + $0x1c0] sm:$0xff] %v1097
      %1162 = vst [vmem:[%s175 + $0x1c8] sm:$0xff] %v1098
      %1163 = vst [vmem:[%s175 + $0x1d0] sm:$0xff] %v1099
      %1164 = vst [vmem:[%s175 + $0x1d8] sm:$0xff] %v1100
      %1165 = vst [vmem:[%s175 + $0x1e0] sm:$0xff] %v1101
      %1166 = vst [vmem:[%s175 + $0x1e8] sm:$0xff] %v1102
      %1167 = vst [vmem:[%s175 + $0x1f0] sm:$0xff] %v1103
      %1168 = vst [vmem:[%s175 + $0x1f8] sm:$0xff] %v1104
      %s1169 = smul.u32 64, %s14
      %p1170 = scmp.lt.s32.totalorder %s1169, 255
      %s1171 = scalar_select %p1170, %s1169, 255
      %s1172 = smul.addr %s1171, 8
      %s1173 = scalar_lea.vmem %s3, %s1172
      // Predicated region
      $region33: #{vae_forward.19} parent=31 // pred_check
        %p1174 = pneg %p100
      $region34: #{vae_forward.19} parent=31 // pred_check_branch
        %1176 = sbr.rel (%p1174) target = $region36
      $region35: #{vae_forward.19} parent=31 // pred_region
        %s1177 = smul.u32 64, %s14
      $region36: #{vae_forward.19} parent=31 // pred_fallthru
        _
    $region32: #{vae_forward.19} parent=5 // pred_fallthru
      _
    %p1178 = scmp.le.s32.totalorder 2, %s9
    // Predicated region
    $region37: #{vae_forward.19} parent=5 // pred_check
      %p1179 = pneg %p1178
    $region38: #{vae_forward.19} parent=5 // pred_check_branch
      %1181 = sbr.rel (%p1179) target = $region40
    $region39: #{vae_forward.19} parent=5 // pred_region
      %s1182 = ssub.s32 %s9, 2
      // Predicated region
      $region41: #{vae_forward.19} parent=39 // pred_check
        %p1183 = pneg %p106
      $region42: #{vae_forward.19} parent=39 // pred_check_branch
        %1185 = sbr.rel (%p1183) target = $region44
      $region43: #{vae_forward.19} parent=39 // pred_region
        %s1186 = smul.u32 64, %s15
        %p1187 = scmp.lt.s32.totalorder %s1186, 255
        %s1188 = scalar_select %p1187, %s1186, 255
        %s1189 = smul.addr %s1188, 8
        %s1190 = scalar_lea.vmem %s3, %s1189
      $region44: #{vae_forward.19} parent=39 // pred_fallthru
        _
    $region40: #{vae_forward.19} parent=5 // pred_fallthru
      _
  $region6: #{vae_forward.19} parent=0 // loop_footer
    %s13 = sadd.s32 1, %s9
  $region7: #{vae_forward.19} parent=0 // loop_footer_branch
    %8 = sbr.rel target = $region3
  $region8: #{vae_forward.19} parent=0 // loop_exit
    _

</llo_original>
